<compile_context>
chip_gen: v6e
topology: v6e:2x2x1
jax: 0.10.0
libtpu: 0.0.40
codegen_flags: <defaults>
</compile_context>

<pallas_src>
import jax
import jax.numpy as jnp
from jax.experimental import pallas as pl
from jax.experimental.pallas import tpu as pltpu

BN_EPS = 1e-5
C1, C2, C3 = 64, 128, 1024   # conv channel sizes (fixed by the module)
F1, F2 = 512, 256            # fc hidden sizes (fixed by the module)


# ----------------------------------------------------------------------------
# Fused kernel: per-point MLP + running lane-dense max-pool + FC head
# ----------------------------------------------------------------------------
def stnkd_kernel(x_ref, w1_ref, t1_ref, w2_ref, t2_ref, w3_ref, t3_ref,
                 w4_ref, t4_ref, w5_ref, t5_ref, w6_ref, b6_ref,
                 o_ref, acc_ref):
    nt = pl.program_id(1)

    # x_ref: [1, K, TN] (channels on sublanes, points on lanes)
    x = x_ref[0].astype(jnp.bfloat16)                               # [K, TN]

    h = jnp.dot(w1_ref[...], x, preferred_element_type=jnp.float32)
    h = jnp.maximum(h + t1_ref[...], 0.0)                           # [64, TN] f32

    h = jnp.dot(w2_ref[...], h.astype(jnp.bfloat16),
                preferred_element_type=jnp.float32)
    h = jnp.maximum(h + t2_ref[...], 0.0)                           # [128, TN]

    h = jnp.dot(w3_ref[...], h.astype(jnp.bfloat16),
                preferred_element_type=jnp.float32)
    h = jnp.maximum(h + t3_ref[...], 0.0)                           # [1024, TN]

    # Lane-dense tree-max over static 128-lane slices (pure VPU), then a single
    # read-modify-write of the [C3, 128] scratch accumulator per tile.
    n_slices = h.shape[1] // 128
    m = h[:, 0:128]
    for j in range(1, n_slices):
        m = jnp.maximum(m, h[:, j * 128:(j + 1) * 128])

    @pl.when(nt == 0)
    def _init():
        acc_ref[...] = m

    @pl.when(nt > 0)
    def _update():
        acc_ref[...] = jnp.maximum(acc_ref[...], m)

    # FC head: only on the last point-tile of each batch element.
    @pl.when(nt == pl.num_programs(1) - 1)
    def _head():
        # One 128->1 cross-lane reduce per batch element, via a standard
        # (8,128)-aligned 2-D transpose + sublane reduce -> lane-dense [1, C3].
        pooled = jnp.max(jnp.transpose(acc_ref[...]), axis=0, keepdims=True)

        h4 = jnp.dot(pooled.astype(jnp.bfloat16), w4_ref[...],
                     preferred_element_type=jnp.float32)
        h4 = jnp.maximum(h4 + t4_ref[...], 0.0)                     # [1, 512]

        h5 = jnp.dot(h4.astype(jnp.bfloat16), w5_ref[...],
                     preferred_element_type=jnp.float32)
        h5 = jnp.maximum(h5 + t5_ref[...], 0.0)                     # [1, 256]

        h6 = jnp.dot(h5.astype(jnp.bfloat16), w6_ref[...],
                     preferred_element_type=jnp.float32)
        o_ref[0] = (h6 + b6_ref[...]).astype(o_ref.dtype)           # [1, k*k]


# ----------------------------------------------------------------------------
# Wrapper
# ----------------------------------------------------------------------------
def _choose_tn(n, tn=None):
    if tn is not None:
        assert tn % 128 == 0, "tn must be a multiple of 128"
        return tn
    # Prefer large tiles (amortize per-step overhead, keep MXU N-dim streaming);
    # cap at 2048 so the f32 [1024, TN] conv3 activation fits v7x's VMEM.
    for cand in (2048, 1024, 512, 256, 128):
        if n >= cand:
            return cand
    return 128


def stnkd_forward(x, params, k, *, tn=None):
    """x: [B, k, N] float32 (PyTorch NCW layout) -> [B, k, k] float32."""
    B, K, N = x.shape
    assert K == k
    TN = _choose_tn(N, tn)
    n_pad = ((N + TN - 1) // TN) * TN
    if n_pad != N:
        # Max-neutral padding: replicate the last real point (its activations
        # are already included in the max).  Zero-padding would be WRONG.
        x = jnp.concatenate(
            [x, jnp.broadcast_to(x[:, :, N - 1:N], (B, K, n_pad - N))], axis=2)
    NT = n_pad // TN
    kk = k * k

    out = pl.pallas_call(
        stnkd_kernel,
        out_shape=jax.ShapeDtypeStruct((B, 1, kk), jnp.float32),
        grid_spec=pltpu.PrefetchScalarGridSpec(
            num_scalar_prefetch=0,
            grid=(B, NT),
            in_specs=[
                pl.BlockSpec((1, K, TN), lambda b, nt: (b, 0, nt)),
                # conv weights / BN shifts (resident: constant index map)
                pl.BlockSpec((C1, K), lambda b, nt: (0, 0)),
                pl.BlockSpec((C1, 1), lambda b, nt: (0, 0)),
                pl.BlockSpec((C2, C1), lambda b, nt: (0, 0)),
                pl.BlockSpec((C2, 1), lambda b, nt: (0, 0)),
                pl.BlockSpec((C3, C2), lambda b, nt: (0, 0)),
                pl.BlockSpec((C3, 1), lambda b, nt: (0, 0)),
                # fc weights / shifts (resident; used only at nt == NT-1)
                pl.BlockSpec((C3, F1), lambda b, nt: (0, 0)),
                pl.BlockSpec((1, F1), lambda b, nt: (0, 0)),
                pl.BlockSpec((F1, F2), lambda b, nt: (0, 0)),
                pl.BlockSpec((1, F2), lambda b, nt: (0, 0)),
                pl.BlockSpec((F2, kk), lambda b, nt: (0, 0)),
                pl.BlockSpec((1, kk), lambda b, nt: (0, 0)),
            ],
            out_specs=pl.BlockSpec((1, 1, kk), lambda b, nt: (b, 0, 0)),
            scratch_shapes=[pltpu.VMEM((C3, 128), jnp.float32)],
        ),
        compiler_params=pltpu.CompilerParams(
            dimension_semantics=("parallel", "arbitrary"),
            # Above v5e's 16 MiB scoped default, below v7x's 64 MiB physical.
            vmem_limit_bytes=48 * 1024 * 1024),
    )(x, params["w1"], params["t1"], params["w2"], params["t2"],
      params["w3"], params["t3"], params["w4"], params["t4"],
      params["w5"], params["t5"], params["w6"], params["b6"])

    return out.reshape(B, k, k)


# ----------------------------------------------------------------------------
# Parameters: raw (PyTorch-layout) params + BN/identity folding (bf16 weights)
# ----------------------------------------------------------------------------
def init_raw_params(key, k):
    """Deterministic synthetic weights in PyTorch layout + eval-mode BN stats."""
    lin_dims = {
        "conv1": (C1, k), "conv2": (C2, C1), "conv3": (C3, C2),
        "fc1": (F1, C3), "fc2": (F2, F1), "fc3": (k * k, F2),
    }
    bn_dims = {"bn1": C1, "bn2": C2, "bn3": C3, "bn4": F1, "bn5": F2}
    keys = iter(jax.random.split(key, 4 * len(bn_dims) + 2 * len(lin_dims)))
    raw = {}
    for name, (co, ci) in lin_dims.items():
        scale = 1.0 / (ci ** 0.5)          # fan-in scaling keeps activations O(1)
        raw[f"{name}_w"] = scale * jax.random.normal(next(keys), (co, ci), jnp.float32)
        raw[f"{name}_b"] = 0.1 * jax.random.normal(next(keys), (co,), jnp.float32)
    for name, c in bn_dims.items():
        gamma = 1.0 + 0.1 * jax.random.normal(next(keys), (c,), jnp.float32)
        beta = 0.1 * jax.random.normal(next(keys), (c,), jnp.float32)
        mean = 0.1 * jax.random.normal(next(keys), (c,), jnp.float32)
        var = jnp.abs(jax.random.normal(next(keys), (c,), jnp.float32)) + 0.5
        raw[name] = (gamma, beta, mean, var)
    return raw


def fold_params(raw, k):
    """Fold eval-mode BN into weights/shifts; fold eye(k) into fc3 bias.

    Matmul weights are pre-cast to bf16 (MXU operands); additive shifts stay f32.
    """
    def conv_fold(w, b, bn):            # w: [C_out, C_in], kernel uses [C_out, C_in]
        g, be, m, v = bn
        s = g / jnp.sqrt(v + BN_EPS)
        return (w * s[:, None]).astype(jnp.bfloat16), (be + (b - m) * s)[:, None]

    def fc_fold(w, b, bn):              # w: [out, in] -> kernel uses [in, out]
        g, be, m, v = bn
        s = g / jnp.sqrt(v + BN_EPS)
        return (w.T * s[None, :]).astype(jnp.bfloat16), (be + (b - m) * s)[None, :]

    p = {}
    p["w1"], p["t1"] = conv_fold(raw["conv1_w"], raw["conv1_b"], raw["bn1"])
    p["w2"], p["t2"] = conv_fold(raw["conv2_w"], raw["conv2_b"], raw["bn2"])
    p["w3"], p["t3"] = conv_fold(raw["conv3_w"], raw["conv3_b"], raw["bn3"])
    p["w4"], p["t4"] = fc_fold(raw["fc1_w"], raw["fc1_b"], raw["bn4"])
    p["w5"], p["t5"] = fc_fold(raw["fc2_w"], raw["fc2_b"], raw["bn5"])
    p["w6"] = raw["fc3_w"].T.astype(jnp.bfloat16)
    p["b6"] = (raw["fc3_b"] + jnp.eye(k, dtype=jnp.float32).reshape(-1))[None, :]
    return p


# ----------------------------------------------------------------------------
# Pure-JAX reference (same eval-mode semantics, from RAW f32 params)
# ----------------------------------------------------------------------------
def reference(x, raw, k):
    hp = jax.lax.Precision.HIGHEST

    def bn3d(z, bnp):
        g, b, m, v = bnp
        s = g / jnp.sqrt(v + BN_EPS)
        return (z - m[None, :, None]) * s[None, :, None] + b[None, :, None]

    def bn2d(z, bnp):
        g, b, m, v = bnp
        return (z - m) * (g / jnp.sqrt(v + BN_EPS)) + b

    h = jax.nn.relu(bn3d(jnp.einsum("oc,bcn->bon", raw["conv1_w"], x, precision=hp)
                         + raw["conv1_b"][None, :, None], raw["bn1"]))
    h = jax.nn.relu(bn3d(jnp.einsum("oc,bcn->bon", raw["conv2_w"], h, precision=hp)
                         + raw["conv2_b"][None, :, None], raw["bn2"]))
    h = jax.nn.relu(bn3d(jnp.einsum("oc,bcn->bon", raw["conv3_w"], h, precision=hp)
                         + raw["conv3_b"][None, :, None], raw["bn3"]))
    g = jnp.max(h, axis=2)                                        # [B, 1024]
    g = jax.nn.relu(bn2d(jnp.dot(g, raw["fc1_w"].T, precision=hp) + raw["fc1_b"],
                         raw["bn4"]))
    g = jax.nn.relu(bn2d(jnp.dot(g, raw["fc2_w"].T, precision=hp) + raw["fc2_b"],
                         raw["bn5"]))
    g = jnp.dot(g, raw["fc3_w"].T, precision=hp) + raw["fc3_b"]
    g = g + jnp.eye(k, dtype=jnp.float32).reshape(1, -1)
    return g.reshape(-1, k, k)


if __name__ == "__main__":
    # Small shapes; internal channel dims fixed by the module.  N=333 is not a
    # tile multiple -> exercises the max-neutral edge padding, and tn=128 gives
    # 3 point-tiles per batch -> exercises the running-max accumulator.
    B, k, N = 2, 16, 333

    key = jax.random.PRNGKey(0)
    k_x, k_p = jax.random.split(key)
    x = jax.random.normal(k_x, (B, k, N), jnp.float32)   # PyTorch [B, C, N]
    raw = init_raw_params(k_p, k)
    params = fold_params(raw, k)

    out = stnkd_forward(x, params, k, tn=128)
    out = jax.block_until_ready(out)

    ref = reference(x, raw, k)
    assert out.shape == (B, k, k)
    max_err = float(jnp.max(jnp.abs(out - ref)))
    # Tolerance reflects bf16 MXU operands in the kernel vs an f32
    # Precision.HIGHEST reference through 6 stacked matmul layers.
    assert jnp.allclose(out, ref, atol=1e-1, rtol=5e-2), max_err

    print("KERNEL_OK")
</pallas_src>

<mosaic_0001>
module attributes {stable_mosaic.version = 11 : i64} {
  func.func @stnkd_kernel(%arg0: i32, %arg1: i32, %arg2: memref<1x16x128xf32, #tpu.memory_space<vmem>>, %arg3: memref<64x16xbf16, #tpu.memory_space<vmem>>, %arg4: memref<64x1xf32, #tpu.memory_space<vmem>>, %arg5: memref<128x64xbf16, #tpu.memory_space<vmem>>, %arg6: memref<128x1xf32, #tpu.memory_space<vmem>>, %arg7: memref<1024x128xbf16, #tpu.memory_space<vmem>>, %arg8: memref<1024x1xf32, #tpu.memory_space<vmem>>, %arg9: memref<1024x512xbf16, #tpu.memory_space<vmem>>, %arg10: memref<1x512xf32, #tpu.memory_space<vmem>>, %arg11: memref<512x256xbf16, #tpu.memory_space<vmem>>, %arg12: memref<1x256xf32, #tpu.memory_space<vmem>>, %arg13: memref<256x256xbf16, #tpu.memory_space<vmem>>, %arg14: memref<1x256xf32, #tpu.memory_space<vmem>>, %arg15: memref<1x1x256xf32, #tpu.memory_space<vmem>>, %arg16: memref<1024x128xf32, #tpu.memory_space<vmem>>) attributes {dimension_semantics = [#tpu.dimension_semantics<parallel>, #tpu.dimension_semantics<arbitrary>], iteration_bounds = array<i64: 2, 3>, scalar_prefetch = 0 : i64, scratch_operands = 1 : i64, tpu.core_type = #tpu.core_type<tc>, window_params = [{transform_indices = @transform_0, window_bounds = array<i64: 1, 16, 128>}, {pipeline_mode = #tpu.pipeline_mode<synchronous>, transform_indices = @transform_1, window_bounds = array<i64: 64, 16>}, {pipeline_mode = #tpu.pipeline_mode<synchronous>, transform_indices = @transform_2, window_bounds = array<i64: 64, 1>}, {pipeline_mode = #tpu.pipeline_mode<synchronous>, transform_indices = @transform_3, window_bounds = array<i64: 128, 64>}, {pipeline_mode = #tpu.pipeline_mode<synchronous>, transform_indices = @transform_4, window_bounds = array<i64: 128, 1>}, {pipeline_mode = #tpu.pipeline_mode<synchronous>, transform_indices = @transform_5, window_bounds = array<i64: 1024, 128>}, {pipeline_mode = #tpu.pipeline_mode<synchronous>, transform_indices = @transform_6, window_bounds = array<i64: 1024, 1>}, {pipeline_mode = #tpu.pipeline_mode<synchronous>, transform_indices = @transform_7, window_bounds = array<i64: 1024, 512>}, {pipeline_mode = #tpu.pipeline_mode<synchronous>, transform_indices = @transform_8, window_bounds = array<i64: 1, 512>}, {pipeline_mode = #tpu.pipeline_mode<synchronous>, transform_indices = @transform_9, window_bounds = array<i64: 512, 256>}, {pipeline_mode = #tpu.pipeline_mode<synchronous>, transform_indices = @transform_10, window_bounds = array<i64: 1, 256>}, {pipeline_mode = #tpu.pipeline_mode<synchronous>, transform_indices = @transform_11, window_bounds = array<i64: 256, 256>}, {pipeline_mode = #tpu.pipeline_mode<synchronous>, transform_indices = @transform_12, window_bounds = array<i64: 1, 256>}, {transform_indices = @transform_13, window_bounds = array<i64: 1, 1, 256>}]} {
    %c0 = arith.constant 0 : index
    %c0_0 = arith.constant 0 : index
    %c0_1 = arith.constant 0 : index
    %0 = vector.load %arg2[%c0, %c0_0, %c0_1] : memref<1x16x128xf32, #tpu.memory_space<vmem>>, vector<1x16x128xf32>
    %1 = vector.shape_cast %0 : vector<1x16x128xf32> to vector<16x128xf32>
    %2 = arith.truncf %1 : vector<16x128xf32> to vector<16x128xbf16>
    %c0_2 = arith.constant 0 : index
    %c0_3 = arith.constant 0 : index
    %3 = vector.load %arg3[%c0_2, %c0_3] : memref<64x16xbf16, #tpu.memory_space<vmem>>, vector<64x16xbf16>
    %cst = arith.constant dense<0.000000e+00> : vector<64x128xf32>
    %4 = tpu.matmul %3, %2, %cst {dimension_numbers = #tpu.dot_dimension_numbers<[1], [0], [0], [1], [0, 0, 1, 1], [], []>} : vector<64x16xbf16>, vector<16x128xbf16>, vector<64x128xf32> -> vector<64x128xf32>
    %c0_4 = arith.constant 0 : index
    %c0_5 = arith.constant 0 : index
    %5 = vector.load %arg4[%c0_4, %c0_5] : memref<64x1xf32, #tpu.memory_space<vmem>>, vector<64x1xf32>
    %6 = vector.broadcast %5 : vector<64x1xf32> to vector<64x128xf32>
    %7 = arith.addf %4, %6 : vector<64x128xf32>
    %cst_6 = arith.constant 0.000000e+00 : f32
    %8 = vector.broadcast %cst_6 : f32 to vector<64x128xf32>
    %9 = arith.maximumf %7, %8 : vector<64x128xf32>
    %c0_7 = arith.constant 0 : index
    %c0_8 = arith.constant 0 : index
    %10 = vector.load %arg5[%c0_7, %c0_8] : memref<128x64xbf16, #tpu.memory_space<vmem>>, vector<128x64xbf16>
    %11 = arith.truncf %9 : vector<64x128xf32> to vector<64x128xbf16>
    %cst_9 = arith.constant dense<0.000000e+00> : vector<128x128xf32>
    %12 = tpu.matmul %10, %11, %cst_9 {dimension_numbers = #tpu.dot_dimension_numbers<[1], [0], [0], [1], [0, 0, 1, 1], [], []>} : vector<128x64xbf16>, vector<64x128xbf16>, vector<128x128xf32> -> vector<128x128xf32>
    %c0_10 = arith.constant 0 : index
    %c0_11 = arith.constant 0 : index
    %13 = vector.load %arg6[%c0_10, %c0_11] : memref<128x1xf32, #tpu.memory_space<vmem>>, vector<128x1xf32>
    %14 = vector.broadcast %13 : vector<128x1xf32> to vector<128x128xf32>
    %15 = arith.addf %12, %14 : vector<128x128xf32>
    %cst_12 = arith.constant 0.000000e+00 : f32
    %16 = vector.broadcast %cst_12 : f32 to vector<128x128xf32>
    %17 = arith.maximumf %15, %16 : vector<128x128xf32>
    %c0_13 = arith.constant 0 : index
    %c0_14 = arith.constant 0 : index
    %18 = vector.load %arg7[%c0_13, %c0_14] : memref<1024x128xbf16, #tpu.memory_space<vmem>>, vector<1024x128xbf16>
    %19 = arith.truncf %17 : vector<128x128xf32> to vector<128x128xbf16>
    %cst_15 = arith.constant dense<0.000000e+00> : vector<1024x128xf32>
    %20 = tpu.matmul %18, %19, %cst_15 {dimension_numbers = #tpu.dot_dimension_numbers<[1], [0], [0], [1], [0, 0, 1, 1], [], []>} : vector<1024x128xbf16>, vector<128x128xbf16>, vector<1024x128xf32> -> vector<1024x128xf32>
    %c0_16 = arith.constant 0 : index
    %c0_17 = arith.constant 0 : index
    %21 = vector.load %arg8[%c0_16, %c0_17] : memref<1024x1xf32, #tpu.memory_space<vmem>>, vector<1024x1xf32>
    %22 = vector.broadcast %21 : vector<1024x1xf32> to vector<1024x128xf32>
    %23 = arith.addf %20, %22 : vector<1024x128xf32>
    %cst_18 = arith.constant 0.000000e+00 : f32
    %24 = vector.broadcast %cst_18 : f32 to vector<1024x128xf32>
    %25 = arith.maximumf %23, %24 : vector<1024x128xf32>
    %c0_i32 = arith.constant 0 : i32
    %26 = arith.cmpi eq, %arg1, %c0_i32 : i32
    %27 = arith.extui %26 : i1 to i32
    %c0_i32_19 = arith.constant 0 : i32
    %28 = arith.cmpi ne, %27, %c0_i32_19 : i32
    scf.if %28 {
      %c0_23 = arith.constant 0 : index
      %c0_24 = arith.constant 0 : index
      %35 = vector.load %arg16[%c0_23, %c0_24] : memref<1024x128xf32, #tpu.memory_space<vmem>>, vector<1024x128xf32>
      tpu.vector_store %arg16[%c0_23, %c0_24], %25 {strides = array<i32>} : memref<1024x128xf32, #tpu.memory_space<vmem>>, vector<1024x128xf32>,
    } else {
    }
    %c0_i32_20 = arith.constant 0 : i32
    %29 = arith.cmpi sgt, %arg1, %c0_i32_20 : i32
    %30 = arith.extui %29 : i1 to i32
    %c0_i32_21 = arith.constant 0 : i32
    %31 = arith.cmpi ne, %30, %c0_i32_21 : i32
    scf.if %31 {
      %c0_23 = arith.constant 0 : index
      %c0_24 = arith.constant 0 : index
      %35 = vector.load %arg16[%c0_23, %c0_24] : memref<1024x128xf32, #tpu.memory_space<vmem>>, vector<1024x128xf32>
      %36 = arith.maximumf %35, %25 : vector<1024x128xf32>
      %c0_25 = arith.constant 0 : index
      %c0_26 = arith.constant 0 : index
      %37 = vector.load %arg16[%c0_25, %c0_26] : memref<1024x128xf32, #tpu.memory_space<vmem>>, vector<1024x128xf32>
      tpu.vector_store %arg16[%c0_25, %c0_26], %36 {strides = array<i32>} : memref<1024x128xf32, #tpu.memory_space<vmem>>, vector<1024x128xf32>,
    } else {
    }
    %c2_i32 = arith.constant 2 : i32
    %32 = arith.cmpi eq, %arg1, %c2_i32 : i32
    %33 = arith.extui %32 : i1 to i32
    %c0_i32_22 = arith.constant 0 : i32
    %34 = arith.cmpi ne, %33, %c0_i32_22 : i32
    scf.if %34 {
      %c0_23 = arith.constant 0 : index
      %c0_24 = arith.constant 0 : index
      %35 = vector.load %arg16[%c0_23, %c0_24] : memref<1024x128xf32, #tpu.memory_space<vmem>>, vector<1024x128xf32>
      %36 = tpu.transpose %35, [1, 0] : vector<1024x128xf32> -> vector<128x1024xf32>
      %cst_25 = arith.constant dense<0xFF800000> : vector<1024xf32>
      %37 = vector.multi_reduction <maximumf>, %36, %cst_25 [0] : vector<128x1024xf32> to vector<1024xf32>
      %38 = vector.shape_cast %37 : vector<1024xf32> to vector<1x1024xf32>
      %39 = arith.truncf %38 : vector<1x1024xf32> to vector<1x1024xbf16>
      %c0_26 = arith.constant 0 : index
      %c0_27 = arith.constant 0 : index
      %40 = vector.load %arg9[%c0_26, %c0_27] : memref<1024x512xbf16, #tpu.memory_space<vmem>>, vector<1024x512xbf16>
      %cst_28 = arith.constant dense<0.000000e+00> : vector<1x512xf32>
      %41 = tpu.matmul %39, %40, %cst_28 {dimension_numbers = #tpu.dot_dimension_numbers<[1], [0], [0], [1], [0, 0, 1, 1], [], []>} : vector<1x1024xbf16>, vector<1024x512xbf16>, vector<1x512xf32> -> vector<1x512xf32>
      %c0_29 = arith.constant 0 : index
      %c0_30 = arith.constant 0 : index
      %42 = vector.load %arg10[%c0_29, %c0_30] : memref<1x512xf32, #tpu.memory_space<vmem>>, vector<1x512xf32>
      %43 = arith.addf %41, %42 : vector<1x512xf32>
      %cst_31 = arith.constant 0.000000e+00 : f32
      %44 = vector.broadcast %cst_31 : f32 to vector<1x512xf32>
      %45 = arith.maximumf %43, %44 : vector<1x512xf32>
      %46 = arith.truncf %45 : vector<1x512xf32> to vector<1x512xbf16>
      %c0_32 = arith.constant 0 : index
      %c0_33 = arith.constant 0 : index
      %47 = vector.load %arg11[%c0_32, %c0_33] : memref<512x256xbf16, #tpu.memory_space<vmem>>, vector<512x256xbf16>
      %cst_34 = arith.constant dense<0.000000e+00> : vector<1x256xf32>
      %48 = tpu.matmul %46, %47, %cst_34 {dimension_numbers = #tpu.dot_dimension_numbers<[1], [0], [0], [1], [0, 0, 1, 1], [], []>} : vector<1x512xbf16>, vector<512x256xbf16>, vector<1x256xf32> -> vector<1x256xf32>
      %c0_35 = arith.constant 0 : index
      %c0_36 = arith.constant 0 : index
      %49 = vector.load %arg12[%c0_35, %c0_36] : memref<1x256xf32, #tpu.memory_space<vmem>>, vector<1x256xf32>
      %50 = arith.addf %48, %49 : vector<1x256xf32>
      %cst_37 = arith.constant 0.000000e+00 : f32
      %51 = vector.broadcast %cst_37 : f32 to vector<1x256xf32>
      %52 = arith.maximumf %50, %51 : vector<1x256xf32>
      %53 = arith.truncf %52 : vector<1x256xf32> to vector<1x256xbf16>
      %c0_38 = arith.constant 0 : index
      %c0_39 = arith.constant 0 : index
      %54 = vector.load %arg13[%c0_38, %c0_39] : memref<256x256xbf16, #tpu.memory_space<vmem>>, vector<256x256xbf16>
      %cst_40 = arith.constant dense<0.000000e+00> : vector<1x256xf32>
      %55 = tpu.matmul %53, %54, %cst_40 {dimension_numbers = #tpu.dot_dimension_numbers<[1], [0], [0], [1], [0, 0, 1, 1], [], []>} : vector<1x256xbf16>, vector<256x256xbf16>, vector<1x256xf32> -> vector<1x256xf32>
      %c0_41 = arith.constant 0 : index
      %c0_42 = arith.constant 0 : index
      %56 = vector.load %arg14[%c0_41, %c0_42] : memref<1x256xf32, #tpu.memory_space<vmem>>, vector<1x256xf32>
      %57 = arith.addf %55, %56 : vector<1x256xf32>
      %c0_43 = arith.constant 0 : index
      %c0_44 = arith.constant 0 : index
      %c0_45 = arith.constant 0 : index
      %58 = vector.load %arg15[%c0_43, %c0_44, %c0_45] : memref<1x1x256xf32, #tpu.memory_space<vmem>>, vector<1x1x256xf32>
      %59 = vector.shape_cast %58 : vector<1x1x256xf32> to vector<1x256xf32>
      %60 = vector.shape_cast %57 : vector<1x256xf32> to vector<1x1x256xf32>
      tpu.vector_store %arg15[%c0_43, %c0_44, %c0_45], %60 {strides = array<i32>} : memref<1x1x256xf32, #tpu.memory_space<vmem>>, vector<1x1x256xf32>,
    } else {
    }
    return
  }
  func.func @transform_0(%arg0: i32, %arg1: i32) -> (i32, i32, i32) {
    %c0_i32 = arith.constant 0 : i32
    %c0_i32_0 = arith.constant 0 : i32
    return %arg0, %c0_i32, %arg1 : i32, i32, i32
  }
  func.func @transform_1(%arg0: i32, %arg1: i32) -> (i32, i32) {
    %c0_i32 = arith.constant 0 : i32
    %c0_i32_0 = arith.constant 0 : i32
    %c0_i32_1 = arith.constant 0 : i32
    return %c0_i32, %c0_i32_0 : i32, i32
  }
  func.func @transform_2(%arg0: i32, %arg1: i32) -> (i32, i32) {
    %c0_i32 = arith.constant 0 : i32
    %c0_i32_0 = arith.constant 0 : i32
    %c0_i32_1 = arith.constant 0 : i32
    return %c0_i32, %c0_i32_0 : i32, i32
  }
  func.func @transform_3(%arg0: i32, %arg1: i32) -> (i32, i32) {
    %c0_i32 = arith.constant 0 : i32
    %c0_i32_0 = arith.constant 0 : i32
    %c0_i32_1 = arith.constant 0 : i32
    return %c0_i32, %c0_i32_0 : i32, i32
  }
  func.func @transform_4(%arg0: i32, %arg1: i32) -> (i32, i32) {
    %c0_i32 = arith.constant 0 : i32
    %c0_i32_0 = arith.constant 0 : i32
    %c0_i32_1 = arith.constant 0 : i32
    return %c0_i32, %c0_i32_0 : i32, i32
  }
  func.func @transform_5(%arg0: i32, %arg1: i32) -> (i32, i32) {
    %c0_i32 = arith.constant 0 : i32
    %c0_i32_0 = arith.constant 0 : i32
    %c0_i32_1 = arith.constant 0 : i32
    return %c0_i32, %c0_i32_0 : i32, i32
  }
  func.func @transform_6(%arg0: i32, %arg1: i32) -> (i32, i32) {
    %c0_i32 = arith.constant 0 : i32
    %c0_i32_0 = arith.constant 0 : i32
    %c0_i32_1 = arith.constant 0 : i32
    return %c0_i32, %c0_i32_0 : i32, i32
  }
  func.func @transform_7(%arg0: i32, %arg1: i32) -> (i32, i32) {
    %c0_i32 = arith.constant 0 : i32
    %c0_i32_0 = arith.constant 0 : i32
    %c0_i32_1 = arith.constant 0 : i32
    return %c0_i32, %c0_i32_0 : i32, i32
  }
  func.func @transform_8(%arg0: i32, %arg1: i32) -> (i32, i32) {
    %c0_i32 = arith.constant 0 : i32
    %c0_i32_0 = arith.constant 0 : i32
    %c0_i32_1 = arith.constant 0 : i32
    return %c0_i32, %c0_i32_0 : i32, i32
  }
  func.func @transform_9(%arg0: i32, %arg1: i32) -> (i32, i32) {
    %c0_i32 = arith.constant 0 : i32
    %c0_i32_0 = arith.constant 0 : i32
    %c0_i32_1 = arith.constant 0 : i32
    return %c0_i32, %c0_i32_0 : i32, i32
  }
  func.func @transform_10(%arg0: i32, %arg1: i32) -> (i32, i32) {
    %c0_i32 = arith.constant 0 : i32
    %c0_i32_0 = arith.constant 0 : i32
    %c0_i32_1 = arith.constant 0 : i32
    return %c0_i32, %c0_i32_0 : i32, i32
  }
  func.func @transform_11(%arg0: i32, %arg1: i32) -> (i32, i32) {
    %c0_i32 = arith.constant 0 : i32
    %c0_i32_0 = arith.constant 0 : i32
    %c0_i32_1 = arith.constant 0 : i32
    return %c0_i32, %c0_i32_0 : i32, i32
  }
  func.func @transform_12(%arg0: i32, %arg1: i32) -> (i32, i32) {
    %c0_i32 = arith.constant 0 : i32
    %c0_i32_0 = arith.constant 0 : i32
    %c0_i32_1 = arith.constant 0 : i32
    return %c0_i32, %c0_i32_0 : i32, i32
  }
  func.func @transform_13(%arg0: i32, %arg1: i32) -> (i32, i32, i32) {
    %c0_i32 = arith.constant 0 : i32
    %c0_i32_0 = arith.constant 0 : i32
    %c0_i32_1 = arith.constant 0 : i32
    return %arg0, %c0_i32, %c0_i32_0 : i32, i32, i32
  }
}

</mosaic_0001>

<llo_original>
// kernel: tpu_custom_call.1
$region0: #{tpu_custom_call.1}
  #allocation0 [shape = 'u32[]', space=smem, size = 0x4, offset = 0x4, fixed_abs, tag = 'smem constant byte address 0x4 - core index']
  #allocation1 [shape = 'u32[144,128]{1,0:T(1,128)}', space=vmem, size = 0x12000, scoped, tag = 'internal scratch']
  #allocation2 [shape = 'f32[1024,128]{1,0:T(8,128)}', space=vmem, size = 0x80000, scoped, tag = 'scratch operand']
  %s0 = inlined_call_operand.hbm [shape: f32[2,16,384], index: 0, kind: input, shape index: {}]
  %s1 = inlined_call_operand.vmem [shape: bf16[64,16], index: 1, kind: input, shape index: {}]
  %s2 = inlined_call_operand.vmem [shape: f32[64,1], index: 2, kind: input, shape index: {}]
  %s3 = inlined_call_operand.vmem [shape: bf16[128,64], index: 3, kind: input, shape index: {}]
  %s4 = inlined_call_operand.vmem [shape: f32[128,1], index: 4, kind: input, shape index: {}]
  %s5 = inlined_call_operand.vmem [shape: bf16[1024,128], index: 5, kind: input, shape index: {}]
  %s6 = inlined_call_operand.vmem [shape: f32[1024,1], index: 6, kind: input, shape index: {}]
  %s7 = inlined_call_operand.hbm [shape: bf16[1024,512], index: 7, kind: input, shape index: {}]
  %s8 = inlined_call_operand.vmem [shape: f32[1,512], index: 8, kind: input, shape index: {}]
  %s9 = inlined_call_operand.vmem [shape: bf16[512,256], index: 9, kind: input, shape index: {}]
  %s10 = inlined_call_operand.vmem [shape: f32[1,256], index: 10, kind: input, shape index: {}]
  %s11 = inlined_call_operand.vmem [shape: bf16[256,256], index: 11, kind: input, shape index: {}]
  %s12 = inlined_call_operand.vmem [shape: f32[1,256], index: 12, kind: input, shape index: {}]
  %s13 = inlined_call_operand.hbm [shape: f32[2,1,256], index: 13, kind: output, shape index: {}]
  %s14 = sld [smem:[#allocation0]]
  $region105: #{tpu_custom_call.1} parent=0
    _
  %s16 = ssub.s32 1, %s14
  %s17 = scalar_select 0, %s16, %s14
  $region1: #{tpu_custom_call.1} parent=0
    #allocation3 [shape = 'u8[16384]{0}', space=vmem, size = 0x4000, scoped, tag = 'input window, operand 0']
    #allocation4 [shape = 's32[2]{0}', space=sflag, size = 0x8, scoped, tag = 'scoped memory for tpu_custom_call.1']
    #allocation5 [shape = 's32[2]{0}', space=sflag, size = 0x8, scoped, tag = 'scoped memory for tpu_custom_call.1']
    #allocation6 [shape = 'u8[1048576]{0}', space=vmem, size = 0x100000, scoped, tag = 'input window, operand 7, single buffered']
    #allocation7 [shape = 's32[1]{0}', space=sflag, size = 0x4, scoped, tag = 'scoped memory for tpu_custom_call.1']
    #allocation8 [shape = 'u8[2048]{0}', space=vmem, size = 0x800, scoped, tag = 'output window, operand 0']
    %18 = vsyncpa [#allocation4], 0
    %s19 = scalar_lea.sflag [#allocation4], 1
    %20 = vsyncpa %s19, 0
    %21 = vsyncpa [#allocation7], 0
    %22 = vsyncpa [#allocation5], 0
    %s23 = scalar_lea.sflag [#allocation5], 1
    %24 = vsyncpa %s23, 0
    loop: start=0, step=1, limit=8
    $region2: #{tpu_custom_call.1} parent=1 // loop_pre_header
      _
    $region3: #{tpu_custom_call.1} parent=1 // loop_header
      %s26 = sphi 0, %s30
      %p27 = scmp.ge.s32.totalorder %s26, 8
      %s33 = sphi 0, %s45
      %s34 = sphi 0, %s41
      %s35 = sphi 0, %s33
      %s36 = sphi 0, %s34
      %s37 = sphi 0, %s35
      %s38 = sphi 0, %s36
      %s50 = sphi 0, %s52
      %s53 = sphi 0, %s50
      %s54 = sphi 0, %s53
      %s70 = sphi 0, %s54
      %s74 = sphi 0, %s74
      %s76 = sphi 0, %s74
      %s77 = sphi 0, %s76
      %s91 = sphi 0, %s77
      %s95 = sphi 0, %s95
      %s97 = sphi 0, %s95
      %s98 = sphi 0, %s97
      %s112 = sphi 0, %s98
      %s116 = sphi 0, %s116
      %s118 = sphi 0, %s116
      %s119 = sphi 0, %s118
      %s133 = sphi 0, %s119
      %s137 = sphi 0, %s137
      %s139 = sphi 0, %s137
      %s140 = sphi 0, %s139
      %s154 = sphi 0, %s140
      %s158 = sphi 0, %s158
      %s160 = sphi 0, %s158
      %s161 = sphi 0, %s160
      %s175 = sphi 0, %s161
      %s179 = sphi 0, %s179
      %s181 = sphi 0, %s179
      %s182 = sphi 0, %s181
      %s196 = sphi 0, %s182
      %s200 = sphi 0, %s200
      %s202 = sphi 0, %s200
      %s203 = sphi 0, %s202
      %s217 = sphi 0, %s203
      %s221 = sphi 0, %s221
      %s223 = sphi 0, %s221
      %s224 = sphi 0, %s223
      %s238 = sphi 0, %s224
      %s242 = sphi 0, %s242
      %s244 = sphi 0, %s242
      %s245 = sphi 0, %s244
      %s259 = sphi 0, %s245
      %s263 = sphi 0, %s263
      %s265 = sphi 0, %s263
      %s266 = sphi 0, %s265
      %s280 = sphi 0, %s266
      %s284 = sphi 0, %s284
      %s286 = sphi 0, %s284
      %s287 = sphi 0, %s286
      %s301 = sphi 0, %s287
      %s305 = sphi 0, %s305
      %s307 = sphi 0, %s305
      %s308 = sphi 0, %s307
      %s322 = sphi 0, %s308
      %s328 = sphi 0, %s330
      %s331 = sphi 0, %s328
      %s332 = sphi 0, %s331
      %s348 = sphi 0, %s332
    $region4: #{tpu_custom_call.1} parent=1 // loop_header_branch
      %29 = sbr.rel (%p27) target = $region8
    $region5: #{tpu_custom_call.1} parent=1 // loop_body
      %s31 = ssub.s32 %s26, 1
      %s32 = ssub.s32 %s26, 2
      %s39 = sadd.s32 1, %s34
      %p40 = scmp.ge.s32.totalorder %s39, 3
      %s41 = scalar_select %p40, 0, %s39
      %s42 = sadd.s32 1, %s33
      %s43 = scalar_select %p40, %s42, %s33
      %p44 = scmp.ge.s32.totalorder %s43, 2
      %s45 = scalar_select %p44, 0, %s43
      %s46 = ssub.s32 %s33, %s45
      %s47 = ssub.s32 %s34, %s41
      %s48 = sor.u32 %s46, %s47
      %p49 = scmp.eq.s32.totalorder %s48, 0
      %s51 = sadd.s32 %s50, 1
      %s52 = scalar_select %p49, %s50, %s51
      %p55 = pneg %p49
      %p56 = scmp.eq.s32.totalorder %s26, 5
      %p57 = por %p55, %p56
      %p58 = scmp.ne.s32.totalorder %s50, %s53
      %p59 = scmp.eq.s32.totalorder %s26, 0
      %p60 = por %p58, %p59
      %p61 = scmp.ne.s32.totalorder %s50, %s53
      %p62 = scmp.eq.s32.totalorder %s31, 5
      %p63 = por %p61, %p62
      %p64 = scmp.ne.s32.totalorder %s53, %s54
      %p65 = scmp.eq.s32.totalorder %s31, 0
      %p66 = por %p64, %p65
      %p67 = scmp.ne.s32.totalorder %s53, %s54
      %p68 = scmp.eq.s32.totalorder %s32, 5
      %p69 = por %p67, %p68
      %p71 = scmp.ne.s32.totalorder %s54, %s70
      %p72 = scmp.eq.s32.totalorder %s32, 0
      %p73 = por %p71, %p72
      %s75 = sadd.s32 %s74, 1
      %p78 = scmp.eq.s32.totalorder %s26, 5
      %p79 = scmp.ne.s32.totalorder %s74, %s76
      %p80 = scmp.eq.s32.totalorder %s26, 0
      %p81 = por %p79, %p80
      %p82 = scmp.ne.s32.totalorder %s74, %s76
      %p83 = scmp.eq.s32.totalorder %s31, 5
      %p84 = por %p82, %p83
      %p85 = scmp.ne.s32.totalorder %s76, %s77
      %p86 = scmp.eq.s32.totalorder %s31, 0
      %p87 = por %p85, %p86
      %p88 = scmp.ne.s32.totalorder %s76, %s77
      %p89 = scmp.eq.s32.totalorder %s32, 5
      %p90 = por %p88, %p89
      %p92 = scmp.ne.s32.totalorder %s77, %s91
      %p93 = scmp.eq.s32.totalorder %s32, 0
      %p94 = por %p92, %p93
      %s96 = sadd.s32 %s95, 1
      %p99 = scmp.eq.s32.totalorder %s26, 5
      %p100 = scmp.ne.s32.totalorder %s95, %s97
      %p101 = scmp.eq.s32.totalorder %s26, 0
      %p102 = por %p100, %p101
      %p103 = scmp.ne.s32.totalorder %s95, %s97
      %p104 = scmp.eq.s32.totalorder %s31, 5
      %p105 = por %p103, %p104
      %p106 = scmp.ne.s32.totalorder %s97, %s98
      %p107 = scmp.eq.s32.totalorder %s31, 0
      %p108 = por %p106, %p107
      %p109 = scmp.ne.s32.totalorder %s97, %s98
      %p110 = scmp.eq.s32.totalorder %s32, 5
      %p111 = por %p109, %p110
      %p113 = scmp.ne.s32.totalorder %s98, %s112
      %p114 = scmp.eq.s32.totalorder %s32, 0
      %p115 = por %p113, %p114
      %s117 = sadd.s32 %s116, 1
      %p120 = scmp.eq.s32.totalorder %s26, 5
      %p121 = scmp.ne.s32.totalorder %s116, %s118
      %p122 = scmp.eq.s32.totalorder %s26, 0
      %p123 = por %p121, %p122
      %p124 = scmp.ne.s32.totalorder %s116, %s118
      %p125 = scmp.eq.s32.totalorder %s31, 5
      %p126 = por %p124, %p125
      %p127 = scmp.ne.s32.totalorder %s118, %s119
      %p128 = scmp.eq.s32.totalorder %s31, 0
      %p129 = por %p127, %p128
      %p130 = scmp.ne.s32.totalorder %s118, %s119
      %p131 = scmp.eq.s32.totalorder %s32, 5
      %p132 = por %p130, %p131
      %p134 = scmp.ne.s32.totalorder %s119, %s133
      %p135 = scmp.eq.s32.totalorder %s32, 0
      %p136 = por %p134, %p135
      %s138 = sadd.s32 %s137, 1
      %p141 = scmp.eq.s32.totalorder %s26, 5
      %p142 = scmp.ne.s32.totalorder %s137, %s139
      %p143 = scmp.eq.s32.totalorder %s26, 0
      %p144 = por %p142, %p143
      %p145 = scmp.ne.s32.totalorder %s137, %s139
      %p146 = scmp.eq.s32.totalorder %s31, 5
      %p147 = por %p145, %p146
      %p148 = scmp.ne.s32.totalorder %s139, %s140
      %p149 = scmp.eq.s32.totalorder %s31, 0
      %p150 = por %p148, %p149
      %p151 = scmp.ne.s32.totalorder %s139, %s140
      %p152 = scmp.eq.s32.totalorder %s32, 5
      %p153 = por %p151, %p152
      %p155 = scmp.ne.s32.totalorder %s140, %s154
      %p156 = scmp.eq.s32.totalorder %s32, 0
      %p157 = por %p155, %p156
      %s159 = sadd.s32 %s158, 1
      %p162 = scmp.eq.s32.totalorder %s26, 5
      %p163 = scmp.ne.s32.totalorder %s158, %s160
      %p164 = scmp.eq.s32.totalorder %s26, 0
      %p165 = por %p163, %p164
      %p166 = scmp.ne.s32.totalorder %s158, %s160
      %p167 = scmp.eq.s32.totalorder %s31, 5
      %p168 = por %p166, %p167
      %p169 = scmp.ne.s32.totalorder %s160, %s161
      %p170 = scmp.eq.s32.totalorder %s31, 0
      %p171 = por %p169, %p170
      %p172 = scmp.ne.s32.totalorder %s160, %s161
      %p173 = scmp.eq.s32.totalorder %s32, 5
      %p174 = por %p172, %p173
      %p176 = scmp.ne.s32.totalorder %s161, %s175
      %p177 = scmp.eq.s32.totalorder %s32, 0
      %p178 = por %p176, %p177
      %s180 = sadd.s32 %s179, 1
      %p183 = scmp.eq.s32.totalorder %s26, 5
      %p184 = scmp.ne.s32.totalorder %s179, %s181
      %p185 = scmp.eq.s32.totalorder %s26, 0
      %p186 = por %p184, %p185
      %p187 = scmp.ne.s32.totalorder %s179, %s181
      %p188 = scmp.eq.s32.totalorder %s31, 5
      %p189 = por %p187, %p188
      %p190 = scmp.ne.s32.totalorder %s181, %s182
      %p191 = scmp.eq.s32.totalorder %s31, 0
      %p192 = por %p190, %p191
      %p193 = scmp.ne.s32.totalorder %s181, %s182
      %p194 = scmp.eq.s32.totalorder %s32, 5
      %p195 = por %p193, %p194
      %p197 = scmp.ne.s32.totalorder %s182, %s196
      %p198 = scmp.eq.s32.totalorder %s32, 0
      %p199 = por %p197, %p198
      %s201 = sadd.s32 %s200, 1
      %p204 = scmp.eq.s32.totalorder %s26, 5
      %p205 = scmp.ne.s32.totalorder %s200, %s202
      %p206 = scmp.eq.s32.totalorder %s26, 0
      %p207 = por %p205, %p206
      %p208 = scmp.ne.s32.totalorder %s200, %s202
      %p209 = scmp.eq.s32.totalorder %s31, 5
      %p210 = por %p208, %p209
      %p211 = scmp.ne.s32.totalorder %s202, %s203
      %p212 = scmp.eq.s32.totalorder %s31, 0
      %p213 = por %p211, %p212
      %p214 = scmp.ne.s32.totalorder %s202, %s203
      %p215 = scmp.eq.s32.totalorder %s32, 5
      %p216 = por %p214, %p215
      %p218 = scmp.ne.s32.totalorder %s203, %s217
      %p219 = scmp.eq.s32.totalorder %s32, 0
      %p220 = por %p218, %p219
      %s222 = sadd.s32 %s221, 1
      %p225 = scmp.eq.s32.totalorder %s26, 5
      %p226 = scmp.ne.s32.totalorder %s221, %s223
      %p227 = scmp.eq.s32.totalorder %s26, 0
      %p228 = por %p226, %p227
      %p229 = scmp.ne.s32.totalorder %s221, %s223
      %p230 = scmp.eq.s32.totalorder %s31, 5
      %p231 = por %p229, %p230
      %p232 = scmp.ne.s32.totalorder %s223, %s224
      %p233 = scmp.eq.s32.totalorder %s31, 0
      %p234 = por %p232, %p233
      %p235 = scmp.ne.s32.totalorder %s223, %s224
      %p236 = scmp.eq.s32.totalorder %s32, 5
      %p237 = por %p235, %p236
      %p239 = scmp.ne.s32.totalorder %s224, %s238
      %p240 = scmp.eq.s32.totalorder %s32, 0
      %p241 = por %p239, %p240
      %s243 = sadd.s32 %s242, 1
      %p246 = scmp.eq.s32.totalorder %s26, 5
      %p247 = scmp.ne.s32.totalorder %s242, %s244
      %p248 = scmp.eq.s32.totalorder %s26, 0
      %p249 = por %p247, %p248
      %p250 = scmp.ne.s32.totalorder %s242, %s244
      %p251 = scmp.eq.s32.totalorder %s31, 5
      %p252 = por %p250, %p251
      %p253 = scmp.ne.s32.totalorder %s244, %s245
      %p254 = scmp.eq.s32.totalorder %s31, 0
      %p255 = por %p253, %p254
      %p256 = scmp.ne.s32.totalorder %s244, %s245
      %p257 = scmp.eq.s32.totalorder %s32, 5
      %p258 = por %p256, %p257
      %p260 = scmp.ne.s32.totalorder %s245, %s259
      %p261 = scmp.eq.s32.totalorder %s32, 0
      %p262 = por %p260, %p261
      %s264 = sadd.s32 %s263, 1
      %p267 = scmp.eq.s32.totalorder %s26, 5
      %p268 = scmp.ne.s32.totalorder %s263, %s265
      %p269 = scmp.eq.s32.totalorder %s26, 0
      %p270 = por %p268, %p269
      %p271 = scmp.ne.s32.totalorder %s263, %s265
      %p272 = scmp.eq.s32.totalorder %s31, 5
      %p273 = por %p271, %p272
      %p274 = scmp.ne.s32.totalorder %s265, %s266
      %p275 = scmp.eq.s32.totalorder %s31, 0
      %p276 = por %p274, %p275
      %p277 = scmp.ne.s32.totalorder %s265, %s266
      %p278 = scmp.eq.s32.totalorder %s32, 5
      %p279 = por %p277, %p278
      %p281 = scmp.ne.s32.totalorder %s266, %s280
      %p282 = scmp.eq.s32.totalorder %s32, 0
      %p283 = por %p281, %p282
      %s285 = sadd.s32 %s284, 1
      %p288 = scmp.eq.s32.totalorder %s26, 5
      %p289 = scmp.ne.s32.totalorder %s284, %s286
      %p290 = scmp.eq.s32.totalorder %s26, 0
      %p291 = por %p289, %p290
      %p292 = scmp.ne.s32.totalorder %s284, %s286
      %p293 = scmp.eq.s32.totalorder %s31, 5
      %p294 = por %p292, %p293
      %p295 = scmp.ne.s32.totalorder %s286, %s287
      %p296 = scmp.eq.s32.totalorder %s31, 0
      %p297 = por %p295, %p296
      %p298 = scmp.ne.s32.totalorder %s286, %s287
      %p299 = scmp.eq.s32.totalorder %s32, 5
      %p300 = por %p298, %p299
      %p302 = scmp.ne.s32.totalorder %s287, %s301
      %p303 = scmp.eq.s32.totalorder %s32, 0
      %p304 = por %p302, %p303
      %s306 = sadd.s32 %s305, 1
      %p309 = scmp.eq.s32.totalorder %s26, 5
      %p310 = scmp.ne.s32.totalorder %s305, %s307
      %p311 = scmp.eq.s32.totalorder %s26, 0
      %p312 = por %p310, %p311
      %p313 = scmp.ne.s32.totalorder %s305, %s307
      %p314 = scmp.eq.s32.totalorder %s31, 5
      %p315 = por %p313, %p314
      %p316 = scmp.ne.s32.totalorder %s307, %s308
      %p317 = scmp.eq.s32.totalorder %s31, 0
      %p318 = por %p316, %p317
      %p319 = scmp.ne.s32.totalorder %s307, %s308
      %p320 = scmp.eq.s32.totalorder %s32, 5
      %p321 = por %p319, %p320
      %p323 = scmp.ne.s32.totalorder %s308, %s322
      %p324 = scmp.eq.s32.totalorder %s32, 0
      %p325 = por %p323, %p324
      %s326 = ssub.s32 %s33, %s45
      %p327 = scmp.eq.s32.totalorder %s326, 0
      %s329 = sadd.s32 %s328, 1
      %s330 = scalar_select %p327, %s328, %s329
      %p333 = pneg %p327
      %p334 = scmp.eq.s32.totalorder %s26, 5
      %p335 = por %p333, %p334
      %p336 = scmp.ne.s32.totalorder %s328, %s331
      %p337 = scmp.eq.s32.totalorder %s26, 0
      %p338 = por %p336, %p337
      %p339 = scmp.ne.s32.totalorder %s328, %s331
      %p340 = scmp.eq.s32.totalorder %s31, 5
      %p341 = por %p339, %p340
      %p342 = scmp.ne.s32.totalorder %s331, %s332
      %p343 = scmp.eq.s32.totalorder %s31, 0
      %p344 = por %p342, %p343
      %p345 = scmp.ne.s32.totalorder %s331, %s332
      %p346 = scmp.eq.s32.totalorder %s32, 5
      %p347 = por %p345, %p346
      %p349 = scmp.ne.s32.totalorder %s332, %s348
      %p350 = scmp.eq.s32.totalorder %s32, 0
      %p351 = por %p349, %p350
      %p352 = scmp.le.s32.totalorder 1, %s26
      %p353 = scmp.lt.s32.totalorder %s26, 7
      %p354 = pnand %p352, %p353
      %p355 = pneg %p354
      // Predicated region
      $region9: #{tpu_custom_call.1} parent=5 // pred_check
        _
      $region10: #{tpu_custom_call.1} parent=5 // pred_check_branch
        %357 = sbr.rel (%p354) target = $region12
      $region11: #{tpu_custom_call.1} parent=5 // pred_region
        %s358 = ssub.s32 %s26, 1
        // Predicated region
        $region13: #{tpu_custom_call.1} parent=11 // pred_check
          %p359 = pneg %p87
        $region14: #{tpu_custom_call.1} parent=11 // pred_check_branch
          %361 = sbr.rel (%p359) target = $region16
        $region15: #{tpu_custom_call.1} parent=11 // pred_region
          _
        $region16: #{tpu_custom_call.1} parent=11 // pred_fallthru
          _
        // Predicated region
        $region17: #{tpu_custom_call.1} parent=11 // pred_check
          %p362 = pneg %p108
        $region18: #{tpu_custom_call.1} parent=11 // pred_check_branch
          %364 = sbr.rel (%p362) target = $region20
        $region19: #{tpu_custom_call.1} parent=11 // pred_region
          _
        $region20: #{tpu_custom_call.1} parent=11 // pred_fallthru
          _
        // Predicated region
        $region21: #{tpu_custom_call.1} parent=11 // pred_check
          %p365 = pneg %p129
        $region22: #{tpu_custom_call.1} parent=11 // pred_check_branch
          %367 = sbr.rel (%p365) target = $region24
        $region23: #{tpu_custom_call.1} parent=11 // pred_region
          _
        $region24: #{tpu_custom_call.1} parent=11 // pred_fallthru
          _
        // Predicated region
        $region25: #{tpu_custom_call.1} parent=11 // pred_check
          %p368 = pneg %p150
        $region26: #{tpu_custom_call.1} parent=11 // pred_check_branch
          %370 = sbr.rel (%p368) target = $region28
        $region27: #{tpu_custom_call.1} parent=11 // pred_region
          _
        $region28: #{tpu_custom_call.1} parent=11 // pred_fallthru
          _
        // Predicated region
        $region29: #{tpu_custom_call.1} parent=11 // pred_check
          %p371 = pneg %p171
        $region30: #{tpu_custom_call.1} parent=11 // pred_check_branch
          %373 = sbr.rel (%p371) target = $region32
        $region31: #{tpu_custom_call.1} parent=11 // pred_region
          _
        $region32: #{tpu_custom_call.1} parent=11 // pred_fallthru
          _
        // Predicated region
        $region33: #{tpu_custom_call.1} parent=11 // pred_check
          %p374 = pneg %p192
        $region34: #{tpu_custom_call.1} parent=11 // pred_check_branch
          %376 = sbr.rel (%p374) target = $region36
        $region35: #{tpu_custom_call.1} parent=11 // pred_region
          _
        $region36: #{tpu_custom_call.1} parent=11 // pred_fallthru
          _
        // Predicated region
        $region37: #{tpu_custom_call.1} parent=11 // pred_check
          %p377 = pneg %p213
        $region38: #{tpu_custom_call.1} parent=11 // pred_check_branch
          %379 = sbr.rel (%p377) target = $region40
        $region39: #{tpu_custom_call.1} parent=11 // pred_region
          %s381 = ssub.s32 32768, 32768
          %382 = vsyncadd [#allocation7], %s381
          %s383 = sshll.u32 [#allocation6], 4
          %s384 = int_to_ptr.vmem [resolvable:$true] %s383
          %389 = dma.hbm_to_vmem [thread:$0]  %s7, 32768, %s384, [#allocation7], 256, 256, 16
        $region40: #{tpu_custom_call.1} parent=11 // pred_fallthru
          _
        // Predicated region
        $region41: #{tpu_custom_call.1} parent=11 // pred_check
          %p390 = pneg %p234
        $region42: #{tpu_custom_call.1} parent=11 // pred_check_branch
          %392 = sbr.rel (%p390) target = $region44
        $region43: #{tpu_custom_call.1} parent=11 // pred_region
          _
        $region44: #{tpu_custom_call.1} parent=11 // pred_fallthru
          _
        // Predicated region
        $region45: #{tpu_custom_call.1} parent=11 // pred_check
          %p393 = pneg %p255
        $region46: #{tpu_custom_call.1} parent=11 // pred_check_branch
          %395 = sbr.rel (%p393) target = $region48
        $region47: #{tpu_custom_call.1} parent=11 // pred_region
          _
        $region48: #{tpu_custom_call.1} parent=11 // pred_fallthru
          _
        // Predicated region
        $region49: #{tpu_custom_call.1} parent=11 // pred_check
          %p396 = pneg %p276
        $region50: #{tpu_custom_call.1} parent=11 // pred_check_branch
          %398 = sbr.rel (%p396) target = $region52
        $region51: #{tpu_custom_call.1} parent=11 // pred_region
          _
        $region52: #{tpu_custom_call.1} parent=11 // pred_fallthru
          _
        // Predicated region
        $region53: #{tpu_custom_call.1} parent=11 // pred_check
          %p399 = pneg %p297
        $region54: #{tpu_custom_call.1} parent=11 // pred_check_branch
          %401 = sbr.rel (%p399) target = $region56
        $region55: #{tpu_custom_call.1} parent=11 // pred_region
          _
        $region56: #{tpu_custom_call.1} parent=11 // pred_fallthru
          _
        // Predicated region
        $region57: #{tpu_custom_call.1} parent=11 // pred_check
          %p402 = pneg %p318
        $region58: #{tpu_custom_call.1} parent=11 // pred_check_branch
          %404 = sbr.rel (%p402) target = $region60
        $region59: #{tpu_custom_call.1} parent=11 // pred_region
          _
        $region60: #{tpu_custom_call.1} parent=11 // pred_fallthru
          _
      $region12: #{tpu_custom_call.1} parent=5 // pred_fallthru
        _
      %p405 = scmp.lt.s32.totalorder %s26, 6
      // Predicated region
      $region61: #{tpu_custom_call.1} parent=5 // pred_check
        %p406 = pneg %p405
      $region62: #{tpu_custom_call.1} parent=5 // pred_check_branch
        %408 = sbr.rel (%p406) target = $region64
      $region63: #{tpu_custom_call.1} parent=5 // pred_region
        // Predicated region
        $region65: #{tpu_custom_call.1} parent=63 // pred_check
          %p409 = pneg %p60
        $region66: #{tpu_custom_call.1} parent=63 // pred_check_branch
          %411 = sbr.rel (%p409) target = $region68
        $region67: #{tpu_custom_call.1} parent=63 // pred_region
          %s412 = sand.u32 %s50, 1
          %s413 = scalar_lea.sflag [#allocation4], %s412
          %s414 = sand.u32 %s50, 1
          %s415 = smul.addr %s414, 16
          %s416 = scalar_lea.vmem [#allocation3], %s415
          %s418 = ssub.s32 256, 256
          %419 = vsyncadd %s413, %s418
          %s420 = smul.addr %s33, 6
          %s421 = sadd.s32 %s34, %s420
          %s422 = smul.addr %s421, 128
          %s423 = scalar_lea.hbm %s0, %s422
          %s424 = sshll.u32 %s416, 4
          %s425 = int_to_ptr.vmem [resolvable:$true] %s424
          %430 = dma.hbm_to_vmem [thread:$0]  %s423, 256, %s425, %s413, 384, 128, 8
        $region68: #{tpu_custom_call.1} parent=63 // pred_fallthru
          _
      $region64: #{tpu_custom_call.1} parent=5 // pred_fallthru
        _
      %p431 = scmp.le.s32.totalorder 1, %s26
      %p432 = scmp.lt.s32.totalorder %s26, 7
      %p433 = pnand %p431, %p432
      %p434 = pneg %p433
      // Predicated region
      $region69: #{tpu_custom_call.1} parent=5 // pred_check
        _
      $region70: #{tpu_custom_call.1} parent=5 // pred_check_branch
        %436 = sbr.rel (%p433) target = $region72
      $region71: #{tpu_custom_call.1} parent=5 // pred_region
        %s437 = ssub.s32 %s26, 1
        %s438 = sand.u32 %s53, 1
        %s439 = scalar_lea.sflag [#allocation4], %s438
        %s440 = sand.u32 %s53, 1
        %s441 = smul.addr %s440, 16
        %s442 = scalar_lea.vmem [#allocation3], %s441
        // Predicated region
        $region73: #{tpu_custom_call.1} parent=71 // pred_check
          %p443 = pneg %p66
        $region74: #{tpu_custom_call.1} parent=71 // pred_check_branch
          %445 = sbr.rel (%p443) target = $region76
        $region75: #{tpu_custom_call.1} parent=71 // pred_region
          %446 = dma.done %s439, 256
        $region76: #{tpu_custom_call.1} parent=71 // pred_fallthru
          _
        // Predicated region
        $region77: #{tpu_custom_call.1} parent=71 // pred_check
          %p447 = pneg %p213
        $region78: #{tpu_custom_call.1} parent=71 // pred_check_branch
          %449 = sbr.rel (%p447) target = $region80
        $region79: #{tpu_custom_call.1} parent=71 // pred_region
          %450 = dma.done [#allocation7], 32768
        $region80: #{tpu_custom_call.1} parent=71 // pred_fallthru
          _
        %s451 = sand.u32 %s53, 1
        %s452 = scalar_lea.sflag [#allocation4], %s451
        %s453 = sand.u32 %s53, 1
        %s454 = smul.addr %s453, 16
        %s455 = scalar_lea.vmem [#allocation3], %s454
        %p456 = pneg %p66
        %p457 = pneg %p63
        %p458 = pneg %p87
        %p459 = pneg %p84
        %p460 = pneg %p108
        %p461 = pneg %p105
        %p462 = pneg %p129
        %p463 = pneg %p126
        %p464 = pneg %p150
        %p465 = pneg %p147
        %p466 = pneg %p171
        %p467 = pneg %p168
        %p468 = pneg %p192
        %p469 = pneg %p189
        %p470 = pneg %p213
        %p471 = pneg %p210
        %p472 = pneg %p234
        %p473 = pneg %p231
        %p474 = pneg %p255
        %p475 = pneg %p252
        %p476 = pneg %p276
        %p477 = pneg %p273
        %p478 = pneg %p297
        %p479 = pneg %p294
        %p480 = pneg %p318
        %p481 = pneg %p315
        %p482 = pneg %p344
        %p483 = pneg %p341
        %s484 = sand.u32 %s331, 1
        %s485 = scalar_lea.sflag [#allocation5], %s484
        %s486 = sand.u32 %s331, 1
        %s487 = smul.addr %s486, 2
        %s488 = scalar_lea.vmem [#allocation8], %s487
        %v490 = vld [vmem:[%s442] sm:$0xff]
        %v491 = vld [vmem:[%s442 + $0x8] sm:$0xff]
        %v492 = vpack.c.bf16 %v491, %v490
        %v493 = vld [vmem:[%s1] sm:$0xf]
        %v494 = vld [vmem:[%s1 + $0x4] sm:$0xf]
        %v495 = vld [vmem:[%s1 + $0x8] sm:$0xf]
        %v496 = vld [vmem:[%s1 + $0xc] sm:$0xf]
        %v497 = vld [vmem:[%s1 + $0x10] sm:$0xf]
        %v498 = vld [vmem:[%s1 + $0x14] sm:$0xf]
        %v499 = vld [vmem:[%s1 + $0x18] sm:$0xf]
        %v500 = vld [vmem:[%s1 + $0x1c] sm:$0xf]
        %v501 = vld [vmem:[%s2] sm:$0xff]
        %v502 = vld [vmem:[%s2 + $0x8] sm:$0xff]
        %v503 = vld [vmem:[%s2 + $0x10] sm:$0xff]
        %v504 = vld [vmem:[%s2 + $0x18] sm:$0xff]
        %v505 = vld [vmem:[%s2 + $0x20] sm:$0xff]
        %v506 = vld [vmem:[%s2 + $0x28] sm:$0xff]
        %v507 = vld [vmem:[%s2 + $0x30] sm:$0xff]
        %v508 = vld [vmem:[%s2 + $0x38] sm:$0xff]
        %510 = vset.pattern.permute.xlu0 0
        %511 = vperm.xlu0 %510, %v501
        %v512 = vpop.permute.xlu0 %511
        %515 = vset.pattern.permute.xlu0 0
        %516 = vperm.xlu0 %515, %v502
        %v517 = vpop.permute.xlu0 %516
        %520 = vset.pattern.permute.xlu0 0
        %521 = vperm.xlu0 %520, %v503
        %v522 = vpop.permute.xlu0 %521
        %525 = vset.pattern.permute.xlu0 0
        %526 = vperm.xlu0 %525, %v504
        %v527 = vpop.permute.xlu0 %526
        %530 = vset.pattern.permute.xlu0 0
        %531 = vperm.xlu0 %530, %v505
        %v532 = vpop.permute.xlu0 %531
        %535 = vset.pattern.permute.xlu0 0
        %536 = vperm.xlu0 %535, %v506
        %v537 = vpop.permute.xlu0 %536
        %540 = vset.pattern.permute.xlu0 0
        %541 = vperm.xlu0 %540, %v507
        %v542 = vpop.permute.xlu0 %541
        %545 = vset.pattern.permute.xlu0 0
        %546 = vperm.xlu0 %545, %v508
        %v547 = vpop.permute.xlu0 %546
        %v557 = vunpack.c.l.b16 %v493
        %v558 = vunpack.c.l.b16 %v494
        %v559 = vunpack.c.l.b16 %v495
        %v560 = vunpack.c.l.b16 %v496
        %v561 = vunpack.c.l.b16 %v497
        %v562 = vunpack.c.l.b16 %v498
        %v563 = vunpack.c.l.b16 %v499
        %v564 = vunpack.c.l.b16 %v500
        %v565 = vpack.c.b16 %v558, %v557
        %v566 = vpack.c.b16 %v560, %v559
        %v567 = vpack.c.b16 %v562, %v561
        %v568 = vpack.c.b16 %v564, %v563
        %vm569 = vcmask 130048
        %v571 = vsel %vm569, %v565, 0
        %v574 = vsel %vm569, %v566, 0
        %v577 = vsel %vm569, %v567, 0
        %v580 = vsel %vm569, %v568, 0
        %582 = vmatprep.subr.bf16.mxu0 0
        %583 = vmatpush1.bf16.msra.mxu0 0
        %584 = vmatprep.subr.bf16.mxu0 0
        %585 = vmatpush1.bf16.msra.mxu0 0
        %586 = vmatprep.subr.bf16.mxu0 0
        %587 = vmatpush1.bf16.msra.mxu0 0
        %588 = vmatprep.subr.bf16.mxu0 0
        %589 = vmatpush1.bf16.msra.mxu0 0
        %590 = vmatprep.subr.bf16.mxu0 0
        %591 = vmatpush1.bf16.msra.mxu0 0
        %592 = vmatprep.subr.bf16.mxu0 0
        %593 = vmatpush1.bf16.msra.mxu0 0
        %594 = vmatprep.subr.bf16.mxu0 0
        %595 = vmatpush1.bf16.msra.mxu0 0
        %596 = vmatprep.subr.bf16.mxu0 0
        %597 = vmatpush1.bf16.msra.mxu0 %v492
        %598 = vmatprep.subr.bf16.mxu0 0
        %599 = vmatpush2.bf16.msra.mxu0 0
        %600 = vmatprep.subr.bf16.mxu0 0
        %601 = vmatpush2.bf16.msra.mxu0 0
        %602 = vmatprep.subr.bf16.mxu0 0
        %603 = vmatpush2.bf16.msra.mxu0 0
        %604 = vmatprep.subr.bf16.mxu0 0
        %605 = vmatpush2.bf16.msra.mxu0 0
        %606 = vmatprep.subr.bf16.mxu0 0
        %607 = vmatpush2.bf16.msra.mxu0 0
        %608 = vmatprep.subr.bf16.mxu0 0
        %609 = vmatpush2.bf16.msra.mxu0 0
        %610 = vmatprep.subr.bf16.mxu0 0
        %611 = vmatpush2.bf16.msra.mxu0 0
        %612 = vmatprep.subr.bf16.mxu0 0
        %613 = vmatpush2.bf16.msra.mxu0 0
        %614 = vmatprep.mubr.bf16.mxu0 0
        %615 = vmatmul.mubr.bf16.gmra.mxu0 %v571
        %v616 = vpop.f32.mrf.mxu0
        %v617 = vadd.f32 %v512, %v616
        %v618 = vpop.f32.mrf.mxu0
        %v619 = vpop.f32.mrf.mxu0
        %v620 = vadd.f32 %v517, %v619
        %v621 = vpop.f32.mrf.mxu0
        %622 = vmatprep.mubr.bf16.mxu0 0
        %623 = vmatmul.mubr.bf16.gmra.mxu0 %v574
        %v624 = vpop.f32.mrf.mxu0
        %v625 = vadd.f32 %v522, %v624
        %v626 = vpop.f32.mrf.mxu0
        %v627 = vpop.f32.mrf.mxu0
        %v628 = vadd.f32 %v527, %v627
        %v629 = vpop.f32.mrf.mxu0
        %630 = vmatprep.mubr.bf16.mxu0 0
        %631 = vmatmul.mubr.bf16.gmra.mxu0 %v577
        %v632 = vpop.f32.mrf.mxu0
        %v633 = vadd.f32 %v532, %v632
        %v634 = vpop.f32.mrf.mxu0
        %v635 = vpop.f32.mrf.mxu0
        %v636 = vadd.f32 %v537, %v635
        %v637 = vpop.f32.mrf.mxu0
        %638 = vmatprep.mubr.bf16.mxu0 0
        %639 = vmatmul.mubr.bf16.gmra.mxu0 %v580
        %v640 = vpop.f32.mrf.mxu0
        %v641 = vadd.f32 %v542, %v640
        %v642 = vpop.f32.mrf.mxu0
        %v643 = vpop.f32.mrf.mxu0
        %v644 = vadd.f32 %v547, %v643
        %v645 = vpop.f32.mrf.mxu0
        %646 = vdwg.mxu0
        %v647 = vmax.f32 %v617, 0.0
        %v648 = vmax.f32 %v620, 0.0
        %v649 = vmax.f32 %v625, 0.0
        %v650 = vmax.f32 %v628, 0.0
        %v651 = vmax.f32 %v633, 0.0
        %v652 = vmax.f32 %v636, 0.0
        %v653 = vmax.f32 %v641, 0.0
        %v654 = vmax.f32 %v644, 0.0
        %v655 = vld [vmem:[%s3] sm:$0xf]
        %v656 = vld [vmem:[%s3 + $0x4] sm:$0xf]
        %v657 = vld [vmem:[%s3 + $0x8] sm:$0xf]
        %v658 = vld [vmem:[%s3 + $0xc] sm:$0xf]
        %v659 = vld [vmem:[%s3 + $0x10] sm:$0xf]
        %v660 = vld [vmem:[%s3 + $0x14] sm:$0xf]
        %v661 = vld [vmem:[%s3 + $0x18] sm:$0xf]
        %v662 = vld [vmem:[%s3 + $0x1c] sm:$0xf]
        %v663 = vld [vmem:[%s3 + $0x20] sm:$0xf]
        %v664 = vld [vmem:[%s3 + $0x24] sm:$0xf]
        %v665 = vld [vmem:[%s3 + $0x28] sm:$0xf]
        %v666 = vld [vmem:[%s3 + $0x2c] sm:$0xf]
        %v667 = vld [vmem:[%s3 + $0x30] sm:$0xf]
        %v668 = vld [vmem:[%s3 + $0x34] sm:$0xf]
        %v669 = vld [vmem:[%s3 + $0x38] sm:$0xf]
        %v670 = vld [vmem:[%s3 + $0x3c] sm:$0xf]
        %v671 = vpack.c.bf16 %v648, %v647
        %v672 = vpack.c.bf16 %v650, %v649
        %v673 = vpack.c.bf16 %v652, %v651
        %v674 = vpack.c.bf16 %v654, %v653
        %v675 = vld [vmem:[%s4] sm:$0xff]
        %v676 = vld [vmem:[%s4 + $0x8] sm:$0xff]
        %v677 = vld [vmem:[%s4 + $0x10] sm:$0xff]
        %v678 = vld [vmem:[%s4 + $0x18] sm:$0xff]
        %v679 = vld [vmem:[%s4 + $0x20] sm:$0xff]
        %v680 = vld [vmem:[%s4 + $0x28] sm:$0xff]
        %v681 = vld [vmem:[%s4 + $0x30] sm:$0xff]
        %v682 = vld [vmem:[%s4 + $0x38] sm:$0xff]
        %v683 = vld [vmem:[%s4 + $0x40] sm:$0xff]
        %v684 = vld [vmem:[%s4 + $0x48] sm:$0xff]
        %v685 = vld [vmem:[%s4 + $0x50] sm:$0xff]
        %v686 = vld [vmem:[%s4 + $0x58] sm:$0xff]
        %v687 = vld [vmem:[%s4 + $0x60] sm:$0xff]
        %v688 = vld [vmem:[%s4 + $0x68] sm:$0xff]
        %v689 = vld [vmem:[%s4 + $0x70] sm:$0xff]
        %v690 = vld [vmem:[%s4 + $0x78] sm:$0xff]
        %692 = vset.pattern.permute.xlu0 0
        %693 = vperm.xlu0 %692, %v675
        %v694 = vpop.permute.xlu0 %693
        %697 = vset.pattern.permute.xlu0 0
        %698 = vperm.xlu0 %697, %v676
        %v699 = vpop.permute.xlu0 %698
        %702 = vset.pattern.permute.xlu0 0
        %703 = vperm.xlu0 %702, %v677
        %v704 = vpop.permute.xlu0 %703
        %707 = vset.pattern.permute.xlu0 0
        %708 = vperm.xlu0 %707, %v678
        %v709 = vpop.permute.xlu0 %708
        %712 = vset.pattern.permute.xlu0 0
        %713 = vperm.xlu0 %712, %v679
        %v714 = vpop.permute.xlu0 %713
        %717 = vset.pattern.permute.xlu0 0
        %718 = vperm.xlu0 %717, %v680
        %v719 = vpop.permute.xlu0 %718
        %722 = vset.pattern.permute.xlu0 0
        %723 = vperm.xlu0 %722, %v681
        %v724 = vpop.permute.xlu0 %723
        %727 = vset.pattern.permute.xlu0 0
        %728 = vperm.xlu0 %727, %v682
        %v729 = vpop.permute.xlu0 %728
        %732 = vset.pattern.permute.xlu0 0
        %733 = vperm.xlu0 %732, %v683
        %v734 = vpop.permute.xlu0 %733
        %737 = vset.pattern.permute.xlu0 0
        %738 = vperm.xlu0 %737, %v684
        %v739 = vpop.permute.xlu0 %738
        %742 = vset.pattern.permute.xlu0 0
        %743 = vperm.xlu0 %742, %v685
        %v744 = vpop.permute.xlu0 %743
        %747 = vset.pattern.permute.xlu0 0
        %748 = vperm.xlu0 %747, %v686
        %v749 = vpop.permute.xlu0 %748
        %752 = vset.pattern.permute.xlu0 0
        %753 = vperm.xlu0 %752, %v687
        %v754 = vpop.permute.xlu0 %753
        %757 = vset.pattern.permute.xlu0 0
        %758 = vperm.xlu0 %757, %v688
        %v759 = vpop.permute.xlu0 %758
        %762 = vset.pattern.permute.xlu0 0
        %763 = vperm.xlu0 %762, %v689
        %v764 = vpop.permute.xlu0 %763
        %767 = vset.pattern.permute.xlu0 0
        %768 = vperm.xlu0 %767, %v690
        %v769 = vpop.permute.xlu0 %768
        %v787 = vunpack.c.l.b16 %v655
        %v788 = vunpack.c.l.b16 %v656
        %v789 = vunpack.c.l.b16 %v657
        %v790 = vunpack.c.l.b16 %v658
        %v791 = vunpack.c.l.b16 %v659
        %v792 = vunpack.c.l.b16 %v660
        %v793 = vunpack.c.l.b16 %v661
        %v794 = vunpack.c.l.b16 %v662
        %v795 = vunpack.c.l.b16 %v663
        %v796 = vunpack.c.l.b16 %v664
        %v797 = vunpack.c.l.b16 %v665
        %v798 = vunpack.c.l.b16 %v666
        %v799 = vunpack.c.l.b16 %v667
        %v800 = vunpack.c.l.b16 %v668
        %v801 = vunpack.c.l.b16 %v669
        %v802 = vunpack.c.l.b16 %v670
        %v803 = vpack.c.b16 %v788, %v787
        %v804 = vpack.c.b16 %v790, %v789
        %v805 = vpack.c.b16 %v792, %v791
        %v806 = vpack.c.b16 %v794, %v793
        %v807 = vpack.c.b16 %v796, %v795
        %v808 = vpack.c.b16 %v798, %v797
        %v809 = vpack.c.b16 %v800, %v799
        %v810 = vpack.c.b16 %v802, %v801
        %vm811 = vcmask 523264
        %v813 = vsel %vm811, %v803, 0
        %v816 = vsel %vm811, %v804, 0
        %v819 = vsel %vm811, %v805, 0
        %v822 = vsel %vm811, %v806, 0
        %v825 = vsel %vm811, %v807, 0
        %v828 = vsel %vm811, %v808, 0
        %v831 = vsel %vm811, %v809, 0
        %v834 = vsel %vm811, %v810, 0
        %836 = vmatprep.subr.bf16.mxu0 0
        %837 = vmatpush1.bf16.msra.mxu0 0
        %838 = vmatprep.subr.bf16.mxu0 0
        %839 = vmatpush1.bf16.msra.mxu0 0
        %840 = vmatprep.subr.bf16.mxu0 0
        %841 = vmatpush1.bf16.msra.mxu0 0
        %842 = vmatprep.subr.bf16.mxu0 0
        %843 = vmatpush1.bf16.msra.mxu0 0
        %844 = vmatprep.subr.bf16.mxu0 0
        %845 = vmatpush1.bf16.msra.mxu0 %v674
        %846 = vmatprep.subr.bf16.mxu0 0
        %847 = vmatpush1.bf16.msra.mxu0 %v673
        %848 = vmatprep.subr.bf16.mxu0 0
        %849 = vmatpush1.bf16.msra.mxu0 %v672
        %850 = vmatprep.subr.bf16.mxu0 0
        %851 = vmatpush1.bf16.msra.mxu0 %v671
        %852 = vmatprep.subr.bf16.mxu0 0
        %853 = vmatpush2.bf16.msra.mxu0 0
        %854 = vmatprep.subr.bf16.mxu0 0
        %855 = vmatpush2.bf16.msra.mxu0 0
        %856 = vmatprep.subr.bf16.mxu0 0
        %857 = vmatpush2.bf16.msra.mxu0 0
        %858 = vmatprep.subr.bf16.mxu0 0
        %859 = vmatpush2.bf16.msra.mxu0 0
        %860 = vmatprep.subr.bf16.mxu0 0
        %861 = vmatpush2.bf16.msra.mxu0 0
        %862 = vmatprep.subr.bf16.mxu0 0
        %863 = vmatpush2.bf16.msra.mxu0 0
        %864 = vmatprep.subr.bf16.mxu0 0
        %865 = vmatpush2.bf16.msra.mxu0 0
        %866 = vmatprep.subr.bf16.mxu0 0
        %867 = vmatpush2.bf16.msra.mxu0 0
        %868 = vmatprep.mubr.bf16.mxu0 0
        %869 = vmatmul.mubr.bf16.gmra.mxu0 %v813
        %v870 = vpop.f32.mrf.mxu0
        %v871 = vadd.f32 %v694, %v870
        %v872 = vpop.f32.mrf.mxu0
        %v873 = vpop.f32.mrf.mxu0
        %v874 = vadd.f32 %v699, %v873
        %v875 = vpop.f32.mrf.mxu0
        %876 = vmatprep.mubr.bf16.mxu0 0
        %877 = vmatmul.mubr.bf16.gmra.mxu0 %v816
        %v878 = vpop.f32.mrf.mxu0
        %v879 = vadd.f32 %v704, %v878
        %v880 = vpop.f32.mrf.mxu0
        %v881 = vpop.f32.mrf.mxu0
        %v882 = vadd.f32 %v709, %v881
        %v883 = vpop.f32.mrf.mxu0
        %884 = vmatprep.mubr.bf16.mxu0 0
        %885 = vmatmul.mubr.bf16.gmra.mxu0 %v819
        %v886 = vpop.f32.mrf.mxu0
        %v887 = vadd.f32 %v714, %v886
        %v888 = vpop.f32.mrf.mxu0
        %v889 = vpop.f32.mrf.mxu0
        %v890 = vadd.f32 %v719, %v889
        %v891 = vpop.f32.mrf.mxu0
        %892 = vmatprep.mubr.bf16.mxu0 0
        %893 = vmatmul.mubr.bf16.gmra.mxu0 %v822
        %v894 = vpop.f32.mrf.mxu0
        %v895 = vadd.f32 %v724, %v894
        %v896 = vpop.f32.mrf.mxu0
        %v897 = vpop.f32.mrf.mxu0
        %v898 = vadd.f32 %v729, %v897
        %v899 = vpop.f32.mrf.mxu0
        %900 = vmatprep.mubr.bf16.mxu0 0
        %901 = vmatmul.mubr.bf16.gmra.mxu0 %v825
        %v902 = vpop.f32.mrf.mxu0
        %v903 = vadd.f32 %v734, %v902
        %v904 = vpop.f32.mrf.mxu0
        %v905 = vpop.f32.mrf.mxu0
        %v906 = vadd.f32 %v739, %v905
        %v907 = vpop.f32.mrf.mxu0
        %908 = vmatprep.mubr.bf16.mxu0 0
        %909 = vmatmul.mubr.bf16.gmra.mxu0 %v828
        %v910 = vpop.f32.mrf.mxu0
        %v911 = vadd.f32 %v744, %v910
        %v912 = vpop.f32.mrf.mxu0
        %v913 = vpop.f32.mrf.mxu0
        %v914 = vadd.f32 %v749, %v913
        %v915 = vpop.f32.mrf.mxu0
        %916 = vmatprep.mubr.bf16.mxu0 0
        %917 = vmatmul.mubr.bf16.gmra.mxu0 %v831
        %v918 = vpop.f32.mrf.mxu0
        %v919 = vadd.f32 %v754, %v918
        %v920 = vpop.f32.mrf.mxu0
        %v921 = vpop.f32.mrf.mxu0
        %v922 = vadd.f32 %v759, %v921
        %v923 = vpop.f32.mrf.mxu0
        %924 = vmatprep.mubr.bf16.mxu0 0
        %925 = vmatmul.mubr.bf16.gmra.mxu0 %v834
        %v926 = vpop.f32.mrf.mxu0
        %v927 = vadd.f32 %v764, %v926
        %v928 = vpop.f32.mrf.mxu0
        %v929 = vpop.f32.mrf.mxu0
        %v930 = vadd.f32 %v769, %v929
        %v931 = vpop.f32.mrf.mxu0
        %932 = vdwg.mxu0
        %v933 = vmax.f32 %v871, 0.0
        %v934 = vmax.f32 %v874, 0.0
        %v935 = vmax.f32 %v879, 0.0
        %v936 = vmax.f32 %v882, 0.0
        %v937 = vmax.f32 %v887, 0.0
        %v938 = vmax.f32 %v890, 0.0
        %v939 = vmax.f32 %v895, 0.0
        %v940 = vmax.f32 %v898, 0.0
        %v941 = vmax.f32 %v903, 0.0
        %v942 = vmax.f32 %v906, 0.0
        %v943 = vmax.f32 %v911, 0.0
        %v944 = vmax.f32 %v914, 0.0
        %v945 = vmax.f32 %v919, 0.0
        %v946 = vmax.f32 %v922, 0.0
        %v947 = vmax.f32 %v927, 0.0
        %v948 = vmax.f32 %v930, 0.0
        %v949 = vld [vmem:[%s5] sm:$0xf]
        %v950 = vld [vmem:[%s5 + $0x4] sm:$0xf]
        %v951 = vld [vmem:[%s5 + $0x8] sm:$0xf]
        %v952 = vld [vmem:[%s5 + $0xc] sm:$0xf]
        %v953 = vld [vmem:[%s5 + $0x10] sm:$0xf]
        %v954 = vld [vmem:[%s5 + $0x14] sm:$0xf]
        %v955 = vld [vmem:[%s5 + $0x18] sm:$0xf]
        %v956 = vld [vmem:[%s5 + $0x1c] sm:$0xf]
        %v957 = vld [vmem:[%s5 + $0x20] sm:$0xf]
        %v958 = vld [vmem:[%s5 + $0x24] sm:$0xf]
        %v959 = vld [vmem:[%s5 + $0x28] sm:$0xf]
        %v960 = vld [vmem:[%s5 + $0x2c] sm:$0xf]
        %v961 = vld [vmem:[%s5 + $0x30] sm:$0xf]
        %v962 = vld [vmem:[%s5 + $0x34] sm:$0xf]
        %v963 = vld [vmem:[%s5 + $0x38] sm:$0xf]
        %v964 = vld [vmem:[%s5 + $0x3c] sm:$0xf]
        %v965 = vld [vmem:[%s5 + $0x40] sm:$0xf]
        %v966 = vld [vmem:[%s5 + $0x44] sm:$0xf]
        %v967 = vld [vmem:[%s5 + $0x48] sm:$0xf]
        %v968 = vld [vmem:[%s5 + $0x4c] sm:$0xf]
        %v969 = vld [vmem:[%s5 + $0x50] sm:$0xf]
        %v970 = vld [vmem:[%s5 + $0x54] sm:$0xf]
        %v971 = vld [vmem:[%s5 + $0x58] sm:$0xf]
        %v972 = vld [vmem:[%s5 + $0x5c] sm:$0xf]
        %v973 = vld [vmem:[%s5 + $0x60] sm:$0xf]
        %v974 = vld [vmem:[%s5 + $0x64] sm:$0xf]
        %v975 = vld [vmem:[%s5 + $0x68] sm:$0xf]
        %v976 = vld [vmem:[%s5 + $0x6c] sm:$0xf]
        %v977 = vld [vmem:[%s5 + $0x70] sm:$0xf]
        %v978 = vld [vmem:[%s5 + $0x74] sm:$0xf]
        %v979 = vld [vmem:[%s5 + $0x78] sm:$0xf]
        %v980 = vld [vmem:[%s5 + $0x7c] sm:$0xf]
        %v981 = vld [vmem:[%s5 + $0x80] sm:$0xf]
        %v982 = vld [vmem:[%s5 + $0x84] sm:$0xf]
        %v983 = vld [vmem:[%s5 + $0x88] sm:$0xf]
        %v984 = vld [vmem:[%s5 + $0x8c] sm:$0xf]
        %v985 = vld [vmem:[%s5 + $0x90] sm:$0xf]
        %v986 = vld [vmem:[%s5 + $0x94] sm:$0xf]
        %v987 = vld [vmem:[%s5 + $0x98] sm:$0xf]
        %v988 = vld [vmem:[%s5 + $0x9c] sm:$0xf]
        %v989 = vld [vmem:[%s5 + $0xa0] sm:$0xf]
        %v990 = vld [vmem:[%s5 + $0xa4] sm:$0xf]
        %v991 = vld [vmem:[%s5 + $0xa8] sm:$0xf]
        %v992 = vld [vmem:[%s5 + $0xac] sm:$0xf]
        %v993 = vld [vmem:[%s5 + $0xb0] sm:$0xf]
        %v994 = vld [vmem:[%s5 + $0xb4] sm:$0xf]
        %v995 = vld [vmem:[%s5 + $0xb8] sm:$0xf]
        %v996 = vld [vmem:[%s5 + $0xbc] sm:$0xf]
        %v997 = vld [vmem:[%s5 + $0xc0] sm:$0xf]
        %v998 = vld [vmem:[%s5 + $0xc4] sm:$0xf]
        %v999 = vld [vmem:[%s5 + $0xc8] sm:$0xf]
        %v1000 = vld [vmem:[%s5 + $0xcc] sm:$0xf]
        %v1001 = vld [vmem:[%s5 + $0xd0] sm:$0xf]
        %v1002 = vld [vmem:[%s5 + $0xd4] sm:$0xf]
        %v1003 = vld [vmem:[%s5 + $0xd8] sm:$0xf]
        %v1004 = vld [vmem:[%s5 + $0xdc] sm:$0xf]
        %v1005 = vld [vmem:[%s5 + $0xe0] sm:$0xf]
        %v1006 = vld [vmem:[%s5 + $0xe4] sm:$0xf]
        %v1007 = vld [vmem:[%s5 + $0xe8] sm:$0xf]
        %v1008 = vld [vmem:[%s5 + $0xec] sm:$0xf]
        %v1009 = vld [vmem:[%s5 + $0xf0] sm:$0xf]
        %v1010 = vld [vmem:[%s5 + $0xf4] sm:$0xf]
        %v1011 = vld [vmem:[%s5 + $0xf8] sm:$0xf]
        %v1012 = vld [vmem:[%s5 + $0xfc] sm:$0xf]
        %v1013 = vld [vmem:[%s5 + $0x100] sm:$0xf]
        %v1014 = vld [vmem:[%s5 + $0x104] sm:$0xf]
        %v1015 = vld [vmem:[%s5 + $0x108] sm:$0xf]
        %v1016 = vld [vmem:[%s5 + $0x10c] sm:$0xf]
        %v1017 = vld [vmem:[%s5 + $0x110] sm:$0xf]
        %v1018 = vld [vmem:[%s5 + $0x114] sm:$0xf]
        %v1019 = vld [vmem:[%s5 + $0x118] sm:$0xf]
        %v1020 = vld [vmem:[%s5 + $0x11c] sm:$0xf]
        %v1021 = vld [vmem:[%s5 + $0x120] sm:$0xf]
        %v1022 = vld [vmem:[%s5 + $0x124] sm:$0xf]
        %v1023 = vld [vmem:[%s5 + $0x128] sm:$0xf]
        %v1024 = vld [vmem:[%s5 + $0x12c] sm:$0xf]
        %v1025 = vld [vmem:[%s5 + $0x130] sm:$0xf]
        %v1026 = vld [vmem:[%s5 + $0x134] sm:$0xf]
        %v1027 = vld [vmem:[%s5 + $0x138] sm:$0xf]
        %v1028 = vld [vmem:[%s5 + $0x13c] sm:$0xf]
        %v1029 = vld [vmem:[%s5 + $0x140] sm:$0xf]
        %v1030 = vld [vmem:[%s5 + $0x144] sm:$0xf]
        %v1031 = vld [vmem:[%s5 + $0x148] sm:$0xf]
        %v1032 = vld [vmem:[%s5 + $0x14c] sm:$0xf]
        %v1033 = vld [vmem:[%s5 + $0x150] sm:$0xf]
        %v1034 = vld [vmem:[%s5 + $0x154] sm:$0xf]
        %v1035 = vld [vmem:[%s5 + $0x158] sm:$0xf]
        %v1036 = vld [vmem:[%s5 + $0x15c] sm:$0xf]
        %v1037 = vld [vmem:[%s5 + $0x160] sm:$0xf]
        %v1038 = vld [vmem:[%s5 + $0x164] sm:$0xf]
        %v1039 = vld [vmem:[%s5 + $0x168] sm:$0xf]
        %v1040 = vld [vmem:[%s5 + $0x16c] sm:$0xf]
        %v1041 = vld [vmem:[%s5 + $0x170] sm:$0xf]
        %v1042 = vld [vmem:[%s5 + $0x174] sm:$0xf]
        %v1043 = vld [vmem:[%s5 + $0x178] sm:$0xf]
        %v1044 = vld [vmem:[%s5 + $0x17c] sm:$0xf]
        %v1045 = vld [vmem:[%s5 + $0x180] sm:$0xf]
        %v1046 = vld [vmem:[%s5 + $0x184] sm:$0xf]
        %v1047 = vld [vmem:[%s5 + $0x188] sm:$0xf]
        %v1048 = vld [vmem:[%s5 + $0x18c] sm:$0xf]
        %v1049 = vld [vmem:[%s5 + $0x190] sm:$0xf]
        %v1050 = vld [vmem:[%s5 + $0x194] sm:$0xf]
        %v1051 = vld [vmem:[%s5 + $0x198] sm:$0xf]
        %v1052 = vld [vmem:[%s5 + $0x19c] sm:$0xf]
        %v1053 = vld [vmem:[%s5 + $0x1a0] sm:$0xf]
        %v1054 = vld [vmem:[%s5 + $0x1a4] sm:$0xf]
        %v1055 = vld [vmem:[%s5 + $0x1a8] sm:$0xf]
        %v1056 = vld [vmem:[%s5 + $0x1ac] sm:$0xf]
        %v1057 = vld [vmem:[%s5 + $0x1b0] sm:$0xf]
        %v1058 = vld [vmem:[%s5 + $0x1b4] sm:$0xf]
        %v1059 = vld [vmem:[%s5 + $0x1b8] sm:$0xf]
        %v1060 = vld [vmem:[%s5 + $0x1bc] sm:$0xf]
        %v1061 = vld [vmem:[%s5 + $0x1c0] sm:$0xf]
        %v1062 = vld [vmem:[%s5 + $0x1c4] sm:$0xf]
        %v1063 = vld [vmem:[%s5 + $0x1c8] sm:$0xf]
        %v1064 = vld [vmem:[%s5 + $0x1cc] sm:$0xf]
        %v1065 = vld [vmem:[%s5 + $0x1d0] sm:$0xf]
        %v1066 = vld [vmem:[%s5 + $0x1d4] sm:$0xf]
        %v1067 = vld [vmem:[%s5 + $0x1d8] sm:$0xf]
        %v1068 = vld [vmem:[%s5 + $0x1dc] sm:$0xf]
        %v1069 = vld [vmem:[%s5 + $0x1e0] sm:$0xf]
        %v1070 = vld [vmem:[%s5 + $0x1e4] sm:$0xf]
        %v1071 = vld [vmem:[%s5 + $0x1e8] sm:$0xf]
        %v1072 = vld [vmem:[%s5 + $0x1ec] sm:$0xf]
        %v1073 = vld [vmem:[%s5 + $0x1f0] sm:$0xf]
        %v1074 = vld [vmem:[%s5 + $0x1f4] sm:$0xf]
        %v1075 = vld [vmem:[%s5 + $0x1f8] sm:$0xf]
        %v1076 = vld [vmem:[%s5 + $0x1fc] sm:$0xf]
        %v1077 = vpack.c.bf16 %v934, %v933
        %v1078 = vpack.c.bf16 %v936, %v935
        %v1079 = vpack.c.bf16 %v938, %v937
        %v1080 = vpack.c.bf16 %v940, %v939
        %v1081 = vpack.c.bf16 %v942, %v941
        %v1082 = vpack.c.bf16 %v944, %v943
        %v1083 = vpack.c.bf16 %v946, %v945
        %v1084 = vpack.c.bf16 %v948, %v947
        %v1085 = vld [vmem:[%s6] sm:$0xff]
        %v1086 = vld [vmem:[%s6 + $0x8] sm:$0xff]
        %v1087 = vld [vmem:[%s6 + $0x10] sm:$0xff]
        %v1088 = vld [vmem:[%s6 + $0x18] sm:$0xff]
        %v1089 = vld [vmem:[%s6 + $0x20] sm:$0xff]
        %v1090 = vld [vmem:[%s6 + $0x28] sm:$0xff]
        %v1091 = vld [vmem:[%s6 + $0x30] sm:$0xff]
        %v1092 = vld [vmem:[%s6 + $0x38] sm:$0xff]
        %v1093 = vld [vmem:[%s6 + $0x40] sm:$0xff]
        %v1094 = vld [vmem:[%s6 + $0x48] sm:$0xff]
        %v1095 = vld [vmem:[%s6 + $0x50] sm:$0xff]
        %v1096 = vld [vmem:[%s6 + $0x58] sm:$0xff]
        %v1097 = vld [vmem:[%s6 + $0x60] sm:$0xff]
        %v1098 = vld [vmem:[%s6 + $0x68] sm:$0xff]
        %v1099 = vld [vmem:[%s6 + $0x70] sm:$0xff]
        %v1100 = vld [vmem:[%s6 + $0x78] sm:$0xff]
        %v1101 = vld [vmem:[%s6 + $0x80] sm:$0xff]
        %v1102 = vld [vmem:[%s6 + $0x88] sm:$0xff]
        %v1103 = vld [vmem:[%s6 + $0x90] sm:$0xff]
        %v1104 = vld [vmem:[%s6 + $0x98] sm:$0xff]
        %v1105 = vld [vmem:[%s6 + $0xa0] sm:$0xff]
        %v1106 = vld [vmem:[%s6 + $0xa8] sm:$0xff]
        %v1107 = vld [vmem:[%s6 + $0xb0] sm:$0xff]
        %v1108 = vld [vmem:[%s6 + $0xb8] sm:$0xff]
        %v1109 = vld [vmem:[%s6 + $0xc0] sm:$0xff]
        %v1110 = vld [vmem:[%s6 + $0xc8] sm:$0xff]
        %v1111 = vld [vmem:[%s6 + $0xd0] sm:$0xff]
        %v1112 = vld [vmem:[%s6 + $0xd8] sm:$0xff]
        %v1113 = vld [vmem:[%s6 + $0xe0] sm:$0xff]
        %v1114 = vld [vmem:[%s6 + $0xe8] sm:$0xff]
        %v1115 = vld [vmem:[%s6 + $0xf0] sm:$0xff]
        %v1116 = vld [vmem:[%s6 + $0xf8] sm:$0xff]
        %v1117 = vld [vmem:[%s6 + $0x100] sm:$0xff]
        %v1118 = vld [vmem:[%s6 + $0x108] sm:$0xff]
        %v1119 = vld [vmem:[%s6 + $0x110] sm:$0xff]
        %v1120 = vld [vmem:[%s6 + $0x118] sm:$0xff]
        %v1121 = vld [vmem:[%s6 + $0x120] sm:$0xff]
        %v1122 = vld [vmem:[%s6 + $0x128] sm:$0xff]
        %v1123 = vld [vmem:[%s6 + $0x130] sm:$0xff]
        %v1124 = vld [vmem:[%s6 + $0x138] sm:$0xff]
        %v1125 = vld [vmem:[%s6 + $0x140] sm:$0xff]
        %v1126 = vld [vmem:[%s6 + $0x148] sm:$0xff]
        %v1127 = vld [vmem:[%s6 + $0x150] sm:$0xff]
        %v1128 = vld [vmem:[%s6 + $0x158] sm:$0xff]
        %v1129 = vld [vmem:[%s6 + $0x160] sm:$0xff]
        %v1130 = vld [vmem:[%s6 + $0x168] sm:$0xff]
        %v1131 = vld [vmem:[%s6 + $0x170] sm:$0xff]
        %v1132 = vld [vmem:[%s6 + $0x178] sm:$0xff]
        %v1133 = vld [vmem:[%s6 + $0x180] sm:$0xff]
        %v1134 = vld [vmem:[%s6 + $0x188] sm:$0xff]
        %v1135 = vld [vmem:[%s6 + $0x190] sm:$0xff]
        %v1136 = vld [vmem:[%s6 + $0x198] sm:$0xff]
        %v1137 = vld [vmem:[%s6 + $0x1a0] sm:$0xff]
        %v1138 = vld [vmem:[%s6 + $0x1a8] sm:$0xff]
        %v1139 = vld [vmem:[%s6 + $0x1b0] sm:$0xff]
        %v1140 = vld [vmem:[%s6 + $0x1b8] sm:$0xff]
        %v1141 = vld [vmem:[%s6 + $0x1c0] sm:$0xff]
        %v1142 = vld [vmem:[%s6 + $0x1c8] sm:$0xff]
        %v1143 = vld [vmem:[%s6 + $0x1d0] sm:$0xff]
        %v1144 = vld [vmem:[%s6 + $0x1d8] sm:$0xff]
        %v1145 = vld [vmem:[%s6 + $0x1e0] sm:$0xff]
        %v1146 = vld [vmem:[%s6 + $0x1e8] sm:$0xff]
        %v1147 = vld [vmem:[%s6 + $0x1f0] sm:$0xff]
        %v1148 = vld [vmem:[%s6 + $0x1f8] sm:$0xff]
        %v1149 = vld [vmem:[%s6 + $0x200] sm:$0xff]
        %v1150 = vld [vmem:[%s6 + $0x208] sm:$0xff]
        %v1151 = vld [vmem:[%s6 + $0x210] sm:$0xff]
        %v1152 = vld [vmem:[%s6 + $0x218] sm:$0xff]
        %v1153 = vld [vmem:[%s6 + $0x220] sm:$0xff]
        %v1154 = vld [vmem:[%s6 + $0x228] sm:$0xff]
        %v1155 = vld [vmem:[%s6 + $0x230] sm:$0xff]
        %v1156 = vld [vmem:[%s6 + $0x238] sm:$0xff]
        %v1157 = vld [vmem:[%s6 + $0x240] sm:$0xff]
        %v1158 = vld [vmem:[%s6 + $0x248] sm:$0xff]
        %v1159 = vld [vmem:[%s6 + $0x250] sm:$0xff]
        %v1160 = vld [vmem:[%s6 + $0x258] sm:$0xff]
        %v1161 = vld [vmem:[%s6 + $0x260] sm:$0xff]
        %v1162 = vld [vmem:[%s6 + $0x268] sm:$0xff]
        %v1163 = vld [vmem:[%s6 + $0x270] sm:$0xff]
        %v1164 = vld [vmem:[%s6 + $0x278] sm:$0xff]
        %v1165 = vld [vmem:[%s6 + $0x280] sm:$0xff]
        %v1166 = vld [vmem:[%s6 + $0x288] sm:$0xff]
        %v1167 = vld [vmem:[%s6 + $0x290] sm:$0xff]
        %v1168 = vld [vmem:[%s6 + $0x298] sm:$0xff]
        %v1169 = vld [vmem:[%s6 + $0x2a0] sm:$0xff]
        %v1170 = vld [vmem:[%s6 + $0x2a8] sm:$0xff]
        %v1171 = vld [vmem:[%s6 + $0x2b0] sm:$0xff]
        %v1172 = vld [vmem:[%s6 + $0x2b8] sm:$0xff]
        %v1173 = vld [vmem:[%s6 + $0x2c0] sm:$0xff]
        %v1174 = vld [vmem:[%s6 + $0x2c8] sm:$0xff]
        %v1175 = vld [vmem:[%s6 + $0x2d0] sm:$0xff]
        %v1176 = vld [vmem:[%s6 + $0x2d8] sm:$0xff]
        %v1177 = vld [vmem:[%s6 + $0x2e0] sm:$0xff]
        %v1178 = vld [vmem:[%s6 + $0x2e8] sm:$0xff]
        %v1179 = vld [vmem:[%s6 + $0x2f0] sm:$0xff]
        %v1180 = vld [vmem:[%s6 + $0x2f8] sm:$0xff]
        %v1181 = vld [vmem:[%s6 + $0x300] sm:$0xff]
        %v1182 = vld [vmem:[%s6 + $0x308] sm:$0xff]
        %v1183 = vld [vmem:[%s6 + $0x310] sm:$0xff]
        %v1184 = vld [vmem:[%s6 + $0x318] sm:$0xff]
        %v1185 = vld [vmem:[%s6 + $0x320] sm:$0xff]
        %v1186 = vld [vmem:[%s6 + $0x328] sm:$0xff]
        %v1187 = vld [vmem:[%s6 + $0x330] sm:$0xff]
        %v1188 = vld [vmem:[%s6 + $0x338] sm:$0xff]
        %v1189 = vld [vmem:[%s6 + $0x340] sm:$0xff]
        %v1190 = vld [vmem:[%s6 + $0x348] sm:$0xff]
        %v1191 = vld [vmem:[%s6 + $0x350] sm:$0xff]
        %v1192 = vld [vmem:[%s6 + $0x358] sm:$0xff]
        %v1193 = vld [vmem:[%s6 + $0x360] sm:$0xff]
        %v1194 = vld [vmem:[%s6 + $0x368] sm:$0xff]
        %v1195 = vld [vmem:[%s6 + $0x370] sm:$0xff]
        %v1196 = vld [vmem:[%s6 + $0x378] sm:$0xff]
        %v1197 = vld [vmem:[%s6 + $0x380] sm:$0xff]
        %v1198 = vld [vmem:[%s6 + $0x388] sm:$0xff]
        %v1199 = vld [vmem:[%s6 + $0x390] sm:$0xff]
        %v1200 = vld [vmem:[%s6 + $0x398] sm:$0xff]
        %v1201 = vld [vmem:[%s6 + $0x3a0] sm:$0xff]
        %v1202 = vld [vmem:[%s6 + $0x3a8] sm:$0xff]
        %v1203 = vld [vmem:[%s6 + $0x3b0] sm:$0xff]
        %v1204 = vld [vmem:[%s6 + $0x3b8] sm:$0xff]
        %v1205 = vld [vmem:[%s6 + $0x3c0] sm:$0xff]
        %v1206 = vld [vmem:[%s6 + $0x3c8] sm:$0xff]
        %v1207 = vld [vmem:[%s6 + $0x3d0] sm:$0xff]
        %v1208 = vld [vmem:[%s6 + $0x3d8] sm:$0xff]
        %v1209 = vld [vmem:[%s6 + $0x3e0] sm:$0xff]
        %v1210 = vld [vmem:[%s6 + $0x3e8] sm:$0xff]
        %v1211 = vld [vmem:[%s6 + $0x3f0] sm:$0xff]
        %v1212 = vld [vmem:[%s6 + $0x3f8] sm:$0xff]
        %1214 = vset.pattern.permute.xlu0 0
        %1215 = vperm.xlu0 %1214, %v1085
        %v1216 = vpop.permute.xlu0 %1215
        %1219 = vset.pattern.permute.xlu0 0
        %1220 = vperm.xlu0 %1219, %v1086
        %v1221 = vpop.permute.xlu0 %1220
        %1224 = vset.pattern.permute.xlu0 0
        %1225 = vperm.xlu0 %1224, %v1087
        %v1226 = vpop.permute.xlu0 %1225
        %1229 = vset.pattern.permute.xlu0 0
        %1230 = vperm.xlu0 %1229, %v1088
        %v1231 = vpop.permute.xlu0 %1230
        %1234 = vset.pattern.permute.xlu0 0
        %1235 = vperm.xlu0 %1234, %v1089
        %v1236 = vpop.permute.xlu0 %1235
        %1239 = vset.pattern.permute.xlu0 0
        %1240 = vperm.xlu0 %1239, %v1090
        %v1241 = vpop.permute.xlu0 %1240
        %1244 = vset.pattern.permute.xlu0 0
        %1245 = vperm.xlu0 %1244, %v1091
        %v1246 = vpop.permute.xlu0 %1245
        %1249 = vset.pattern.permute.xlu0 0
        %1250 = vperm.xlu0 %1249, %v1092
        %v1251 = vpop.permute.xlu0 %1250
        %1254 = vset.pattern.permute.xlu0 0
        %1255 = vperm.xlu0 %1254, %v1093
        %v1256 = vpop.permute.xlu0 %1255
        %1259 = vset.pattern.permute.xlu0 0
        %1260 = vperm.xlu0 %1259, %v1094
        %v1261 = vpop.permute.xlu0 %1260
        %1264 = vset.pattern.permute.xlu0 0
        %1265 = vperm.xlu0 %1264, %v1095
        %v1266 = vpop.permute.xlu0 %1265
        %1269 = vset.pattern.permute.xlu0 0
        %1270 = vperm.xlu0 %1269, %v1096
        %v1271 = vpop.permute.xlu0 %1270
        %1274 = vset.pattern.permute.xlu0 0
        %1275 = vperm.xlu0 %1274, %v1097
        %v1276 = vpop.permute.xlu0 %1275
        %1279 = vset.pattern.permute.xlu0 0
        %1280 = vperm.xlu0 %1279, %v1098
        %v1281 = vpop.permute.xlu0 %1280
        %1284 = vset.pattern.permute.xlu0 0
        %1285 = vperm.xlu0 %1284, %v1099
        %v1286 = vpop.permute.xlu0 %1285
        %1289 = vset.pattern.permute.xlu0 0
        %1290 = vperm.xlu0 %1289, %v1100
        %v1291 = vpop.permute.xlu0 %1290
        %1294 = vset.pattern.permute.xlu0 0
        %1295 = vperm.xlu0 %1294, %v1101
        %v1296 = vpop.permute.xlu0 %1295
        %1299 = vset.pattern.permute.xlu0 0
        %1300 = vperm.xlu0 %1299, %v1102
        %v1301 = vpop.permute.xlu0 %1300
        %1304 = vset.pattern.permute.xlu0 0
        %1305 = vperm.xlu0 %1304, %v1103
        %v1306 = vpop.permute.xlu0 %1305
        %1309 = vset.pattern.permute.xlu0 0
        %1310 = vperm.xlu0 %1309, %v1104
        %v1311 = vpop.permute.xlu0 %1310
        %1314 = vset.pattern.permute.xlu0 0
        %1315 = vperm.xlu0 %1314, %v1105
        %v1316 = vpop.permute.xlu0 %1315
        %1319 = vset.pattern.permute.xlu0 0
        %1320 = vperm.xlu0 %1319, %v1106
        %v1321 = vpop.permute.xlu0 %1320
        %1324 = vset.pattern.permute.xlu0 0
        %1325 = vperm.xlu0 %1324, %v1107
        %v1326 = vpop.permute.xlu0 %1325
        %1329 = vset.pattern.permute.xlu0 0
        %1330 = vperm.xlu0 %1329, %v1108
        %v1331 = vpop.permute.xlu0 %1330
        %1334 = vset.pattern.permute.xlu0 0
        %1335 = vperm.xlu0 %1334, %v1109
        %v1336 = vpop.permute.xlu0 %1335
        %1339 = vset.pattern.permute.xlu0 0
        %1340 = vperm.xlu0 %1339, %v1110
        %v1341 = vpop.permute.xlu0 %1340
        %1344 = vset.pattern.permute.xlu0 0
        %1345 = vperm.xlu0 %1344, %v1111
        %v1346 = vpop.permute.xlu0 %1345
        %1349 = vset.pattern.permute.xlu0 0
        %1350 = vperm.xlu0 %1349, %v1112
        %v1351 = vpop.permute.xlu0 %1350
        %1354 = vset.pattern.permute.xlu0 0
        %1355 = vperm.xlu0 %1354, %v1113
        %v1356 = vpop.permute.xlu0 %1355
        %1359 = vset.pattern.permute.xlu0 0
        %1360 = vperm.xlu0 %1359, %v1114
        %v1361 = vpop.permute.xlu0 %1360
        %1364 = vset.pattern.permute.xlu0 0
        %1365 = vperm.xlu0 %1364, %v1115
        %v1366 = vpop.permute.xlu0 %1365
        %1369 = vset.pattern.permute.xlu0 0
        %1370 = vperm.xlu0 %1369, %v1116
        %v1371 = vpop.permute.xlu0 %1370
        %1374 = vset.pattern.permute.xlu0 0
        %1375 = vperm.xlu0 %1374, %v1117
        %v1376 = vpop.permute.xlu0 %1375
        %1379 = vset.pattern.permute.xlu0 0
        %1380 = vperm.xlu0 %1379, %v1118
        %v1381 = vpop.permute.xlu0 %1380
        %1384 = vset.pattern.permute.xlu0 0
        %1385 = vperm.xlu0 %1384, %v1119
        %v1386 = vpop.permute.xlu0 %1385
        %1389 = vset.pattern.permute.xlu0 0
        %1390 = vperm.xlu0 %1389, %v1120
        %v1391 = vpop.permute.xlu0 %1390
        %1394 = vset.pattern.permute.xlu0 0
        %1395 = vperm.xlu0 %1394, %v1121
        %v1396 = vpop.permute.xlu0 %1395
        %1399 = vset.pattern.permute.xlu0 0
        %1400 = vperm.xlu0 %1399, %v1122
        %v1401 = vpop.permute.xlu0 %1400
        %1404 = vset.pattern.permute.xlu0 0
        %1405 = vperm.xlu0 %1404, %v1123
        %v1406 = vpop.permute.xlu0 %1405
        %1409 = vset.pattern.permute.xlu0 0
        %1410 = vperm.xlu0 %1409, %v1124
        %v1411 = vpop.permute.xlu0 %1410
        %1414 = vset.pattern.permute.xlu0 0
        %1415 = vperm.xlu0 %1414, %v1125
        %v1416 = vpop.permute.xlu0 %1415
        %1419 = vset.pattern.permute.xlu0 0
        %1420 = vperm.xlu0 %1419, %v1126
        %v1421 = vpop.permute.xlu0 %1420
        %1424 = vset.pattern.permute.xlu0 0
        %1425 = vperm.xlu0 %1424, %v1127
        %v1426 = vpop.permute.xlu0 %1425
        %1429 = vset.pattern.permute.xlu0 0
        %1430 = vperm.xlu0 %1429, %v1128
        %v1431 = vpop.permute.xlu0 %1430
        %1434 = vset.pattern.permute.xlu0 0
        %1435 = vperm.xlu0 %1434, %v1129
        %v1436 = vpop.permute.xlu0 %1435
        %1439 = vset.pattern.permute.xlu0 0
        %1440 = vperm.xlu0 %1439, %v1130
        %v1441 = vpop.permute.xlu0 %1440
        %1444 = vset.pattern.permute.xlu0 0
        %1445 = vperm.xlu0 %1444, %v1131
        %v1446 = vpop.permute.xlu0 %1445
        %1449 = vset.pattern.permute.xlu0 0
        %1450 = vperm.xlu0 %1449, %v1132
        %v1451 = vpop.permute.xlu0 %1450
        %1454 = vset.pattern.permute.xlu0 0
        %1455 = vperm.xlu0 %1454, %v1133
        %v1456 = vpop.permute.xlu0 %1455
        %1459 = vset.pattern.permute.xlu0 0
        %1460 = vperm.xlu0 %1459, %v1134
        %v1461 = vpop.permute.xlu0 %1460
        %1464 = vset.pattern.permute.xlu0 0
        %1465 = vperm.xlu0 %1464, %v1135
        %v1466 = vpop.permute.xlu0 %1465
        %1469 = vset.pattern.permute.xlu0 0
        %1470 = vperm.xlu0 %1469, %v1136
        %v1471 = vpop.permute.xlu0 %1470
        %1474 = vset.pattern.permute.xlu0 0
        %1475 = vperm.xlu0 %1474, %v1137
        %v1476 = vpop.permute.xlu0 %1475
        %1479 = vset.pattern.permute.xlu0 0
        %1480 = vperm.xlu0 %1479, %v1138
        %v1481 = vpop.permute.xlu0 %1480
        %1484 = vset.pattern.permute.xlu0 0
        %1485 = vperm.xlu0 %1484, %v1139
        %v1486 = vpop.permute.xlu0 %1485
        %1489 = vset.pattern.permute.xlu0 0
        %1490 = vperm.xlu0 %1489, %v1140
        %v1491 = vpop.permute.xlu0 %1490
        %1494 = vset.pattern.permute.xlu0 0
        %1495 = vperm.xlu0 %1494, %v1141
        %v1496 = vpop.permute.xlu0 %1495
        %1499 = vset.pattern.permute.xlu0 0
        %1500 = vperm.xlu0 %1499, %v1142
        %v1501 = vpop.permute.xlu0 %1500
        %1504 = vset.pattern.permute.xlu0 0
        %1505 = vperm.xlu0 %1504, %v1143
        %v1506 = vpop.permute.xlu0 %1505
        %1509 = vset.pattern.permute.xlu0 0
        %1510 = vperm.xlu0 %1509, %v1144
        %v1511 = vpop.permute.xlu0 %1510
        %1514 = vset.pattern.permute.xlu0 0
        %1515 = vperm.xlu0 %1514, %v1145
        %v1516 = vpop.permute.xlu0 %1515
        %1519 = vset.pattern.permute.xlu0 0
        %1520 = vperm.xlu0 %1519, %v1146
        %v1521 = vpop.permute.xlu0 %1520
        %1524 = vset.pattern.permute.xlu0 0
        %1525 = vperm.xlu0 %1524, %v1147
        %v1526 = vpop.permute.xlu0 %1525
        %1529 = vset.pattern.permute.xlu0 0
        %1530 = vperm.xlu0 %1529, %v1148
        %v1531 = vpop.permute.xlu0 %1530
        %1534 = vset.pattern.permute.xlu0 0
        %1535 = vperm.xlu0 %1534, %v1149
        %v1536 = vpop.permute.xlu0 %1535
        %1539 = vset.pattern.permute.xlu0 0
        %1540 = vperm.xlu0 %1539, %v1150
        %v1541 = vpop.permute.xlu0 %1540
        %1544 = vset.pattern.permute.xlu0 0
        %1545 = vperm.xlu0 %1544, %v1151
        %v1546 = vpop.permute.xlu0 %1545
        %1549 = vset.pattern.permute.xlu0 0
        %1550 = vperm.xlu0 %1549, %v1152
        %v1551 = vpop.permute.xlu0 %1550
        %1554 = vset.pattern.permute.xlu0 0
        %1555 = vperm.xlu0 %1554, %v1153
        %v1556 = vpop.permute.xlu0 %1555
        %1559 = vset.pattern.permute.xlu0 0
        %1560 = vperm.xlu0 %1559, %v1154
        %v1561 = vpop.permute.xlu0 %1560
        %1564 = vset.pattern.permute.xlu0 0
        %1565 = vperm.xlu0 %1564, %v1155
        %v1566 = vpop.permute.xlu0 %1565
        %1569 = vset.pattern.permute.xlu0 0
        %1570 = vperm.xlu0 %1569, %v1156
        %v1571 = vpop.permute.xlu0 %1570
        %1574 = vset.pattern.permute.xlu0 0
        %1575 = vperm.xlu0 %1574, %v1157
        %v1576 = vpop.permute.xlu0 %1575
        %1579 = vset.pattern.permute.xlu0 0
        %1580 = vperm.xlu0 %1579, %v1158
        %v1581 = vpop.permute.xlu0 %1580
        %1584 = vset.pattern.permute.xlu0 0
        %1585 = vperm.xlu0 %1584, %v1159
        %v1586 = vpop.permute.xlu0 %1585
        %1589 = vset.pattern.permute.xlu0 0
        %1590 = vperm.xlu0 %1589, %v1160
        %v1591 = vpop.permute.xlu0 %1590
        %1594 = vset.pattern.permute.xlu0 0
        %1595 = vperm.xlu0 %1594, %v1161
        %v1596 = vpop.permute.xlu0 %1595
        %1599 = vset.pattern.permute.xlu0 0
        %1600 = vperm.xlu0 %1599, %v1162
        %v1601 = vpop.permute.xlu0 %1600
        %1604 = vset.pattern.permute.xlu0 0
        %1605 = vperm.xlu0 %1604, %v1163
        %v1606 = vpop.permute.xlu0 %1605
        %1609 = vset.pattern.permute.xlu0 0
        %1610 = vperm.xlu0 %1609, %v1164
        %v1611 = vpop.permute.xlu0 %1610
        %1614 = vset.pattern.permute.xlu0 0
        %1615 = vperm.xlu0 %1614, %v1165
        %v1616 = vpop.permute.xlu0 %1615
        %1619 = vset.pattern.permute.xlu0 0
        %1620 = vperm.xlu0 %1619, %v1166
        %v1621 = vpop.permute.xlu0 %1620
        %1624 = vset.pattern.permute.xlu0 0
        %1625 = vperm.xlu0 %1624, %v1167
        %v1626 = vpop.permute.xlu0 %1625
        %1629 = vset.pattern.permute.xlu0 0
        %1630 = vperm.xlu0 %1629, %v1168
        %v1631 = vpop.permute.xlu0 %1630
        %1634 = vset.pattern.permute.xlu0 0
        %1635 = vperm.xlu0 %1634, %v1169
        %v1636 = vpop.permute.xlu0 %1635
        %1639 = vset.pattern.permute.xlu0 0
        %1640 = vperm.xlu0 %1639, %v1170
        %v1641 = vpop.permute.xlu0 %1640
        %1644 = vset.pattern.permute.xlu0 0
        %1645 = vperm.xlu0 %1644, %v1171
        %v1646 = vpop.permute.xlu0 %1645
        %1649 = vset.pattern.permute.xlu0 0
        %1650 = vperm.xlu0 %1649, %v1172
        %v1651 = vpop.permute.xlu0 %1650
        %1654 = vset.pattern.permute.xlu0 0
        %1655 = vperm.xlu0 %1654, %v1173
        %v1656 = vpop.permute.xlu0 %1655
        %1659 = vset.pattern.permute.xlu0 0
        %1660 = vperm.xlu0 %1659, %v1174
        %v1661 = vpop.permute.xlu0 %1660
        %1664 = vset.pattern.permute.xlu0 0
        %1665 = vperm.xlu0 %1664, %v1175
        %v1666 = vpop.permute.xlu0 %1665
        %1669 = vset.pattern.permute.xlu0 0
        %1670 = vperm.xlu0 %1669, %v1176
        %v1671 = vpop.permute.xlu0 %1670
        %1674 = vset.pattern.permute.xlu0 0
        %1675 = vperm.xlu0 %1674, %v1177
        %v1676 = vpop.permute.xlu0 %1675
        %1679 = vset.pattern.permute.xlu0 0
        %1680 = vperm.xlu0 %1679, %v1178
        %v1681 = vpop.permute.xlu0 %1680
        %1684 = vset.pattern.permute.xlu0 0
        %1685 = vperm.xlu0 %1684, %v1179
        %v1686 = vpop.permute.xlu0 %1685
        %1689 = vset.pattern.permute.xlu0 0
        %1690 = vperm.xlu0 %1689, %v1180
        %v1691 = vpop.permute.xlu0 %1690
        %1694 = vset.pattern.permute.xlu0 0
        %1695 = vperm.xlu0 %1694, %v1181
        %v1696 = vpop.permute.xlu0 %1695
        %1699 = vset.pattern.permute.xlu0 0
        %1700 = vperm.xlu0 %1699, %v1182
        %v1701 = vpop.permute.xlu0 %1700
        %1704 = vset.pattern.permute.xlu0 0
        %1705 = vperm.xlu0 %1704, %v1183
        %v1706 = vpop.permute.xlu0 %1705
        %1709 = vset.pattern.permute.xlu0 0
        %1710 = vperm.xlu0 %1709, %v1184
        %v1711 = vpop.permute.xlu0 %1710
        %1714 = vset.pattern.permute.xlu0 0
        %1715 = vperm.xlu0 %1714, %v1185
        %v1716 = vpop.permute.xlu0 %1715
        %1719 = vset.pattern.permute.xlu0 0
        %1720 = vperm.xlu0 %1719, %v1186
        %v1721 = vpop.permute.xlu0 %1720
        %1724 = vset.pattern.permute.xlu0 0
        %1725 = vperm.xlu0 %1724, %v1187
        %v1726 = vpop.permute.xlu0 %1725
        %1729 = vset.pattern.permute.xlu0 0
        %1730 = vperm.xlu0 %1729, %v1188
        %v1731 = vpop.permute.xlu0 %1730
        %1734 = vset.pattern.permute.xlu0 0
        %1735 = vperm.xlu0 %1734, %v1189
        %v1736 = vpop.permute.xlu0 %1735
        %1739 = vset.pattern.permute.xlu0 0
        %1740 = vperm.xlu0 %1739, %v1190
        %v1741 = vpop.permute.xlu0 %1740
        %1744 = vset.pattern.permute.xlu0 0
        %1745 = vperm.xlu0 %1744, %v1191
        %v1746 = vpop.permute.xlu0 %1745
        %1749 = vset.pattern.permute.xlu0 0
        %1750 = vperm.xlu0 %1749, %v1192
        %v1751 = vpop.permute.xlu0 %1750
        %1754 = vset.pattern.permute.xlu0 0
        %1755 = vperm.xlu0 %1754, %v1193
        %v1756 = vpop.permute.xlu0 %1755
        %1759 = vset.pattern.permute.xlu0 0
        %1760 = vperm.xlu0 %1759, %v1194
        %v1761 = vpop.permute.xlu0 %1760
        %1764 = vset.pattern.permute.xlu0 0
        %1765 = vperm.xlu0 %1764, %v1195
        %v1766 = vpop.permute.xlu0 %1765
        %1769 = vset.pattern.permute.xlu0 0
        %1770 = vperm.xlu0 %1769, %v1196
        %v1771 = vpop.permute.xlu0 %1770
        %1774 = vset.pattern.permute.xlu0 0
        %1775 = vperm.xlu0 %1774, %v1197
        %v1776 = vpop.permute.xlu0 %1775
        %1779 = vset.pattern.permute.xlu0 0
        %1780 = vperm.xlu0 %1779, %v1198
        %v1781 = vpop.permute.xlu0 %1780
        %1784 = vset.pattern.permute.xlu0 0
        %1785 = vperm.xlu0 %1784, %v1199
        %v1786 = vpop.permute.xlu0 %1785
        %1789 = vset.pattern.permute.xlu0 0
        %1790 = vperm.xlu0 %1789, %v1200
        %v1791 = vpop.permute.xlu0 %1790
        %1794 = vset.pattern.permute.xlu0 0
        %1795 = vperm.xlu0 %1794, %v1201
        %v1796 = vpop.permute.xlu0 %1795
        %1799 = vset.pattern.permute.xlu0 0
        %1800 = vperm.xlu0 %1799, %v1202
        %v1801 = vpop.permute.xlu0 %1800
        %1804 = vset.pattern.permute.xlu0 0
        %1805 = vperm.xlu0 %1804, %v1203
        %v1806 = vpop.permute.xlu0 %1805
        %1809 = vset.pattern.permute.xlu0 0
        %1810 = vperm.xlu0 %1809, %v1204
        %v1811 = vpop.permute.xlu0 %1810
        %1814 = vset.pattern.permute.xlu0 0
        %1815 = vperm.xlu0 %1814, %v1205
        %v1816 = vpop.permute.xlu0 %1815
        %1819 = vset.pattern.permute.xlu0 0
        %1820 = vperm.xlu0 %1819, %v1206
        %v1821 = vpop.permute.xlu0 %1820
        %1824 = vset.pattern.permute.xlu0 0
        %1825 = vperm.xlu0 %1824, %v1207
        %v1826 = vpop.permute.xlu0 %1825
        %1829 = vset.pattern.permute.xlu0 0
        %1830 = vperm.xlu0 %1829, %v1208
        %v1831 = vpop.permute.xlu0 %1830
        %1834 = vset.pattern.permute.xlu0 0
        %1835 = vperm.xlu0 %1834, %v1209
        %v1836 = vpop.permute.xlu0 %1835
        %1839 = vset.pattern.permute.xlu0 0
        %1840 = vperm.xlu0 %1839, %v1210
        %v1841 = vpop.permute.xlu0 %1840
        %1844 = vset.pattern.permute.xlu0 0
        %1845 = vperm.xlu0 %1844, %v1211
        %v1846 = vpop.permute.xlu0 %1845
        %1849 = vset.pattern.permute.xlu0 0
        %1850 = vperm.xlu0 %1849, %v1212
        %v1851 = vpop.permute.xlu0 %1850
        %v1981 = vunpack.c.l.b16 %v949
        %v1982 = vunpack.c.l.b16 %v950
        %v1983 = vunpack.c.l.b16 %v951
        %v1984 = vunpack.c.l.b16 %v952
        %v1985 = vunpack.c.l.b16 %v953
        %v1986 = vunpack.c.l.b16 %v954
        %v1987 = vunpack.c.l.b16 %v955
        %v1988 = vunpack.c.l.b16 %v956
        %v1989 = vunpack.c.l.b16 %v957
        %v1990 = vunpack.c.l.b16 %v958
        %v1991 = vunpack.c.l.b16 %v959
        %v1992 = vunpack.c.l.b16 %v960
        %v1993 = vunpack.c.l.b16 %v961
        %v1994 = vunpack.c.l.b16 %v962
        %v1995 = vunpack.c.l.b16 %v963
        %v1996 = vunpack.c.l.b16 %v964
        %v1997 = vunpack.c.l.b16 %v965
        %v1998 = vunpack.c.l.b16 %v966
        %v1999 = vunpack.c.l.b16 %v967
        %v2000 = vunpack.c.l.b16 %v968
        %v2001 = vunpack.c.l.b16 %v969
        %v2002 = vunpack.c.l.b16 %v970
        %v2003 = vunpack.c.l.b16 %v971
        %v2004 = vunpack.c.l.b16 %v972
        %v2005 = vunpack.c.l.b16 %v973
        %v2006 = vunpack.c.l.b16 %v974
        %v2007 = vunpack.c.l.b16 %v975
        %v2008 = vunpack.c.l.b16 %v976
        %v2009 = vunpack.c.l.b16 %v977
        %v2010 = vunpack.c.l.b16 %v978
        %v2011 = vunpack.c.l.b16 %v979
        %v2012 = vunpack.c.l.b16 %v980
        %v2013 = vunpack.c.l.b16 %v981
        %v2014 = vunpack.c.l.b16 %v982
        %v2015 = vunpack.c.l.b16 %v983
        %v2016 = vunpack.c.l.b16 %v984
        %v2017 = vunpack.c.l.b16 %v985
        %v2018 = vunpack.c.l.b16 %v986
        %v2019 = vunpack.c.l.b16 %v987
        %v2020 = vunpack.c.l.b16 %v988
        %v2021 = vunpack.c.l.b16 %v989
        %v2022 = vunpack.c.l.b16 %v990
        %v2023 = vunpack.c.l.b16 %v991
        %v2024 = vunpack.c.l.b16 %v992
        %v2025 = vunpack.c.l.b16 %v993
        %v2026 = vunpack.c.l.b16 %v994
        %v2027 = vunpack.c.l.b16 %v995
        %v2028 = vunpack.c.l.b16 %v996
        %v2029 = vunpack.c.l.b16 %v997
        %v2030 = vunpack.c.l.b16 %v998
        %v2031 = vunpack.c.l.b16 %v999
        %v2032 = vunpack.c.l.b16 %v1000
        %v2033 = vunpack.c.l.b16 %v1001
        %v2034 = vunpack.c.l.b16 %v1002
        %v2035 = vunpack.c.l.b16 %v1003
        %v2036 = vunpack.c.l.b16 %v1004
        %v2037 = vunpack.c.l.b16 %v1005
        %v2038 = vunpack.c.l.b16 %v1006
        %v2039 = vunpack.c.l.b16 %v1007
        %v2040 = vunpack.c.l.b16 %v1008
        %v2041 = vunpack.c.l.b16 %v1009
        %v2042 = vunpack.c.l.b16 %v1010
        %v2043 = vunpack.c.l.b16 %v1011
        %v2044 = vunpack.c.l.b16 %v1012
        %v2045 = vunpack.c.l.b16 %v1013
        %v2046 = vunpack.c.l.b16 %v1014
        %v2047 = vunpack.c.l.b16 %v1015
        %v2048 = vunpack.c.l.b16 %v1016
        %v2049 = vunpack.c.l.b16 %v1017
        %v2050 = vunpack.c.l.b16 %v1018
        %v2051 = vunpack.c.l.b16 %v1019
        %v2052 = vunpack.c.l.b16 %v1020
        %v2053 = vunpack.c.l.b16 %v1021
        %v2054 = vunpack.c.l.b16 %v1022
        %v2055 = vunpack.c.l.b16 %v1023
        %v2056 = vunpack.c.l.b16 %v1024
        %v2057 = vunpack.c.l.b16 %v1025
        %v2058 = vunpack.c.l.b16 %v1026
        %v2059 = vunpack.c.l.b16 %v1027
        %v2060 = vunpack.c.l.b16 %v1028
        %v2061 = vunpack.c.l.b16 %v1029
        %v2062 = vunpack.c.l.b16 %v1030
        %v2063 = vunpack.c.l.b16 %v1031
        %v2064 = vunpack.c.l.b16 %v1032
        %v2065 = vunpack.c.l.b16 %v1033
        %v2066 = vunpack.c.l.b16 %v1034
        %v2067 = vunpack.c.l.b16 %v1035
        %v2068 = vunpack.c.l.b16 %v1036
        %v2069 = vunpack.c.l.b16 %v1037
        %v2070 = vunpack.c.l.b16 %v1038
        %v2071 = vunpack.c.l.b16 %v1039
        %v2072 = vunpack.c.l.b16 %v1040
        %v2073 = vunpack.c.l.b16 %v1041
        %v2074 = vunpack.c.l.b16 %v1042
        %v2075 = vunpack.c.l.b16 %v1043
        %v2076 = vunpack.c.l.b16 %v1044
        %v2077 = vunpack.c.l.b16 %v1045
        %v2078 = vunpack.c.l.b16 %v1046
        %v2079 = vunpack.c.l.b16 %v1047
        %v2080 = vunpack.c.l.b16 %v1048
        %v2081 = vunpack.c.l.b16 %v1049
        %v2082 = vunpack.c.l.b16 %v1050
        %v2083 = vunpack.c.l.b16 %v1051
        %v2084 = vunpack.c.l.b16 %v1052
        %v2085 = vunpack.c.l.b16 %v1053
        %v2086 = vunpack.c.l.b16 %v1054
        %v2087 = vunpack.c.l.b16 %v1055
        %v2088 = vunpack.c.l.b16 %v1056
        %v2089 = vunpack.c.l.b16 %v1057
        %v2090 = vunpack.c.l.b16 %v1058
        %v2091 = vunpack.c.l.b16 %v1059
        %v2092 = vunpack.c.l.b16 %v1060
        %v2093 = vunpack.c.l.b16 %v1061
        %v2094 = vunpack.c.l.b16 %v1062
        %v2095 = vunpack.c.l.b16 %v1063
        %v2096 = vunpack.c.l.b16 %v1064
        %v2097 = vunpack.c.l.b16 %v1065
        %v2098 = vunpack.c.l.b16 %v1066
        %v2099 = vunpack.c.l.b16 %v1067
        %v2100 = vunpack.c.l.b16 %v1068
        %v2101 = vunpack.c.l.b16 %v1069
        %v2102 = vunpack.c.l.b16 %v1070
        %v2103 = vunpack.c.l.b16 %v1071
        %v2104 = vunpack.c.l.b16 %v1072
        %v2105 = vunpack.c.l.b16 %v1073
        %v2106 = vunpack.c.l.b16 %v1074
        %v2107 = vunpack.c.l.b16 %v1075
        %v2108 = vunpack.c.l.b16 %v1076
        %v2109 = vpack.c.b16 %v1982, %v1981
        %v2110 = vpack.c.b16 %v1984, %v1983
        %v2111 = vpack.c.b16 %v1986, %v1985
        %v2112 = vpack.c.b16 %v1988, %v1987
        %v2113 = vpack.c.b16 %v1990, %v1989
        %v2114 = vpack.c.b16 %v1992, %v1991
        %v2115 = vpack.c.b16 %v1994, %v1993
        %v2116 = vpack.c.b16 %v1996, %v1995
        %v2117 = vpack.c.b16 %v1998, %v1997
        %v2118 = vpack.c.b16 %v2000, %v1999
        %v2119 = vpack.c.b16 %v2002, %v2001
        %v2120 = vpack.c.b16 %v2004, %v2003
        %v2121 = vpack.c.b16 %v2006, %v2005
        %v2122 = vpack.c.b16 %v2008, %v2007
        %v2123 = vpack.c.b16 %v2010, %v2009
        %v2124 = vpack.c.b16 %v2012, %v2011
        %v2125 = vpack.c.b16 %v2014, %v2013
        %v2126 = vpack.c.b16 %v2016, %v2015
        %v2127 = vpack.c.b16 %v2018, %v2017
        %v2128 = vpack.c.b16 %v2020, %v2019
        %v2129 = vpack.c.b16 %v2022, %v2021
        %v2130 = vpack.c.b16 %v2024, %v2023
        %v2131 = vpack.c.b16 %v2026, %v2025
        %v2132 = vpack.c.b16 %v2028, %v2027
        %v2133 = vpack.c.b16 %v2030, %v2029
        %v2134 = vpack.c.b16 %v2032, %v2031
        %v2135 = vpack.c.b16 %v2034, %v2033
        %v2136 = vpack.c.b16 %v2036, %v2035
        %v2137 = vpack.c.b16 %v2038, %v2037
        %v2138 = vpack.c.b16 %v2040, %v2039
        %v2139 = vpack.c.b16 %v2042, %v2041
        %v2140 = vpack.c.b16 %v2044, %v2043
        %v2141 = vpack.c.b16 %v2046, %v2045
        %v2142 = vpack.c.b16 %v2048, %v2047
        %v2143 = vpack.c.b16 %v2050, %v2049
        %v2144 = vpack.c.b16 %v2052, %v2051
        %v2145 = vpack.c.b16 %v2054, %v2053
        %v2146 = vpack.c.b16 %v2056, %v2055
        %v2147 = vpack.c.b16 %v2058, %v2057
        %v2148 = vpack.c.b16 %v2060, %v2059
        %v2149 = vpack.c.b16 %v2062, %v2061
        %v2150 = vpack.c.b16 %v2064, %v2063
        %v2151 = vpack.c.b16 %v2066, %v2065
        %v2152 = vpack.c.b16 %v2068, %v2067
        %v2153 = vpack.c.b16 %v2070, %v2069
        %v2154 = vpack.c.b16 %v2072, %v2071
        %v2155 = vpack.c.b16 %v2074, %v2073
        %v2156 = vpack.c.b16 %v2076, %v2075
        %v2157 = vpack.c.b16 %v2078, %v2077
        %v2158 = vpack.c.b16 %v2080, %v2079
        %v2159 = vpack.c.b16 %v2082, %v2081
        %v2160 = vpack.c.b16 %v2084, %v2083
        %v2161 = vpack.c.b16 %v2086, %v2085
        %v2162 = vpack.c.b16 %v2088, %v2087
        %v2163 = vpack.c.b16 %v2090, %v2089
        %v2164 = vpack.c.b16 %v2092, %v2091
        %v2165 = vpack.c.b16 %v2094, %v2093
        %v2166 = vpack.c.b16 %v2096, %v2095
        %v2167 = vpack.c.b16 %v2098, %v2097
        %v2168 = vpack.c.b16 %v2100, %v2099
        %v2169 = vpack.c.b16 %v2102, %v2101
        %v2170 = vpack.c.b16 %v2104, %v2103
        %v2171 = vpack.c.b16 %v2106, %v2105
        %v2172 = vpack.c.b16 %v2108, %v2107
        %2237 = vmatprep.subr.bf16.mxu0 0
        %2238 = vmatpush1.bf16.msra.mxu0 %v1084
        %2239 = vmatprep.subr.bf16.mxu0 0
        %2240 = vmatpush1.bf16.msra.mxu0 %v1083
        %2241 = vmatprep.subr.bf16.mxu0 0
        %2242 = vmatpush1.bf16.msra.mxu0 %v1082
        %2243 = vmatprep.subr.bf16.mxu0 0
        %2244 = vmatpush1.bf16.msra.mxu0 %v1081
        %2245 = vmatprep.subr.bf16.mxu0 0
        %2246 = vmatpush1.bf16.msra.mxu0 %v1080
        %2247 = vmatprep.subr.bf16.mxu0 0
        %2248 = vmatpush1.bf16.msra.mxu0 %v1079
        %2249 = vmatprep.subr.bf16.mxu0 0
        %2250 = vmatpush1.bf16.msra.mxu0 %v1078
        %2251 = vmatprep.subr.bf16.mxu0 0
        %2252 = vmatpush1.bf16.msra.mxu0 %v1077
        %2253 = vmatprep.subr.bf16.mxu0 0
        %2254 = vmatpush2.bf16.msra.mxu0 0
        %2255 = vmatprep.subr.bf16.mxu0 0
        %2256 = vmatpush2.bf16.msra.mxu0 0
        %2257 = vmatprep.subr.bf16.mxu0 0
        %2258 = vmatpush2.bf16.msra.mxu0 0
        %2259 = vmatprep.subr.bf16.mxu0 0
        %2260 = vmatpush2.bf16.msra.mxu0 0
        %2261 = vmatprep.subr.bf16.mxu0 0
        %2262 = vmatpush2.bf16.msra.mxu0 0
        %2263 = vmatprep.subr.bf16.mxu0 0
        %2264 = vmatpush2.bf16.msra.mxu0 0
        %2265 = vmatprep.subr.bf16.mxu0 0
        %2266 = vmatpush2.bf16.msra.mxu0 0
        %2267 = vmatprep.subr.bf16.mxu0 0
        %2268 = vmatpush2.bf16.msra.mxu0 0
        %2269 = vmatprep.mubr.bf16.mxu0 0
        %2270 = vmatmul.mubr.bf16.gmra.mxu0 %v2109
        %v2271 = vpop.f32.mrf.mxu0
        %v2272 = vadd.f32 %v1216, %v2271
        %v2273 = vpop.f32.mrf.mxu0
        %v2274 = vpop.f32.mrf.mxu0
        %v2275 = vadd.f32 %v1221, %v2274
        %v2276 = vpop.f32.mrf.mxu0
        %2277 = vmatprep.mubr.bf16.mxu0 0
        %2278 = vmatmul.mubr.bf16.gmra.mxu0 %v2110
        %v2279 = vpop.f32.mrf.mxu0
        %v2280 = vadd.f32 %v1226, %v2279
        %v2281 = vpop.f32.mrf.mxu0
        %v2282 = vpop.f32.mrf.mxu0
        %v2283 = vadd.f32 %v1231, %v2282
        %v2284 = vpop.f32.mrf.mxu0
        %2285 = vmatprep.mubr.bf16.mxu0 0
        %2286 = vmatmul.mubr.bf16.gmra.mxu0 %v2111
        %v2287 = vpop.f32.mrf.mxu0
        %v2288 = vadd.f32 %v1236, %v2287
        %v2289 = vpop.f32.mrf.mxu0
        %v2290 = vpop.f32.mrf.mxu0
        %v2291 = vadd.f32 %v1241, %v2290
        %v2292 = vpop.f32.mrf.mxu0
        %2293 = vmatprep.mubr.bf16.mxu0 0
        %2294 = vmatmul.mubr.bf16.gmra.mxu0 %v2112
        %v2295 = vpop.f32.mrf.mxu0
        %v2296 = vadd.f32 %v1246, %v2295
        %v2297 = vpop.f32.mrf.mxu0
        %v2298 = vpop.f32.mrf.mxu0
        %v2299 = vadd.f32 %v1251, %v2298
        %v2300 = vpop.f32.mrf.mxu0
        %2301 = vmatprep.mubr.bf16.mxu0 0
        %2302 = vmatmul.mubr.bf16.gmra.mxu0 %v2113
        %v2303 = vpop.f32.mrf.mxu0
        %v2304 = vadd.f32 %v1256, %v2303
        %v2305 = vpop.f32.mrf.mxu0
        %v2306 = vpop.f32.mrf.mxu0
        %v2307 = vadd.f32 %v1261, %v2306
        %v2308 = vpop.f32.mrf.mxu0
        %2309 = vmatprep.mubr.bf16.mxu0 0
        %2310 = vmatmul.mubr.bf16.gmra.mxu0 %v2114
        %v2311 = vpop.f32.mrf.mxu0
        %v2312 = vadd.f32 %v1266, %v2311
        %v2313 = vpop.f32.mrf.mxu0
        %v2314 = vpop.f32.mrf.mxu0
        %v2315 = vadd.f32 %v1271, %v2314
        %v2316 = vpop.f32.mrf.mxu0
        %2317 = vmatprep.mubr.bf16.mxu0 0
        %2318 = vmatmul.mubr.bf16.gmra.mxu0 %v2115
        %v2319 = vpop.f32.mrf.mxu0
        %v2320 = vadd.f32 %v1276, %v2319
        %v2321 = vpop.f32.mrf.mxu0
        %v2322 = vpop.f32.mrf.mxu0
        %v2323 = vadd.f32 %v1281, %v2322
        %v2324 = vpop.f32.mrf.mxu0
        %2325 = vmatprep.mubr.bf16.mxu0 0
        %2326 = vmatmul.mubr.bf16.gmra.mxu0 %v2116
        %v2327 = vpop.f32.mrf.mxu0
        %v2328 = vadd.f32 %v1286, %v2327
        %v2329 = vpop.f32.mrf.mxu0
        %v2330 = vpop.f32.mrf.mxu0
        %v2331 = vadd.f32 %v1291, %v2330
        %v2332 = vpop.f32.mrf.mxu0
        %2333 = vmatprep.mubr.bf16.mxu0 0
        %2334 = vmatmul.mubr.bf16.gmra.mxu0 %v2117
        %v2335 = vpop.f32.mrf.mxu0
        %v2336 = vadd.f32 %v1296, %v2335
        %v2337 = vpop.f32.mrf.mxu0
        %v2338 = vpop.f32.mrf.mxu0
        %v2339 = vadd.f32 %v1301, %v2338
        %v2340 = vpop.f32.mrf.mxu0
        %2341 = vmatprep.mubr.bf16.mxu0 0
        %2342 = vmatmul.mubr.bf16.gmra.mxu0 %v2118
        %v2343 = vpop.f32.mrf.mxu0
        %v2344 = vadd.f32 %v1306, %v2343
        %v2345 = vpop.f32.mrf.mxu0
        %v2346 = vpop.f32.mrf.mxu0
        %v2347 = vadd.f32 %v1311, %v2346
        %v2348 = vpop.f32.mrf.mxu0
        %2349 = vmatprep.mubr.bf16.mxu0 0
        %2350 = vmatmul.mubr.bf16.gmra.mxu0 %v2119
        %v2351 = vpop.f32.mrf.mxu0
        %v2352 = vadd.f32 %v1316, %v2351
        %v2353 = vpop.f32.mrf.mxu0
        %v2354 = vpop.f32.mrf.mxu0
        %v2355 = vadd.f32 %v1321, %v2354
        %v2356 = vpop.f32.mrf.mxu0
        %2357 = vmatprep.mubr.bf16.mxu0 0
        %2358 = vmatmul.mubr.bf16.gmra.mxu0 %v2120
        %v2359 = vpop.f32.mrf.mxu0
        %v2360 = vadd.f32 %v1326, %v2359
        %v2361 = vpop.f32.mrf.mxu0
        %v2362 = vpop.f32.mrf.mxu0
        %v2363 = vadd.f32 %v1331, %v2362
        %v2364 = vpop.f32.mrf.mxu0
        %2365 = vmatprep.mubr.bf16.mxu0 0
        %2366 = vmatmul.mubr.bf16.gmra.mxu0 %v2121
        %v2367 = vpop.f32.mrf.mxu0
        %v2368 = vadd.f32 %v1336, %v2367
        %v2369 = vpop.f32.mrf.mxu0
        %v2370 = vpop.f32.mrf.mxu0
        %v2371 = vadd.f32 %v1341, %v2370
        %v2372 = vpop.f32.mrf.mxu0
        %2373 = vmatprep.mubr.bf16.mxu0 0
        %2374 = vmatmul.mubr.bf16.gmra.mxu0 %v2122
        %v2375 = vpop.f32.mrf.mxu0
        %v2376 = vadd.f32 %v1346, %v2375
        %v2377 = vpop.f32.mrf.mxu0
        %v2378 = vpop.f32.mrf.mxu0
        %v2379 = vadd.f32 %v1351, %v2378
        %v2380 = vpop.f32.mrf.mxu0
        %2381 = vmatprep.mubr.bf16.mxu0 0
        %2382 = vmatmul.mubr.bf16.gmra.mxu0 %v2123
        %v2383 = vpop.f32.mrf.mxu0
        %v2384 = vadd.f32 %v1356, %v2383
        %v2385 = vpop.f32.mrf.mxu0
        %v2386 = vpop.f32.mrf.mxu0
        %v2387 = vadd.f32 %v1361, %v2386
        %v2388 = vpop.f32.mrf.mxu0
        %2389 = vmatprep.mubr.bf16.mxu0 0
        %2390 = vmatmul.mubr.bf16.gmra.mxu0 %v2124
        %v2391 = vpop.f32.mrf.mxu0
        %v2392 = vadd.f32 %v1366, %v2391
        %v2393 = vpop.f32.mrf.mxu0
        %v2394 = vpop.f32.mrf.mxu0
        %v2395 = vadd.f32 %v1371, %v2394
        %v2396 = vpop.f32.mrf.mxu0
        %2397 = vmatprep.mubr.bf16.mxu0 0
        %2398 = vmatmul.mubr.bf16.gmra.mxu0 %v2125
        %v2399 = vpop.f32.mrf.mxu0
        %v2400 = vadd.f32 %v1376, %v2399
        %v2401 = vpop.f32.mrf.mxu0
        %v2402 = vpop.f32.mrf.mxu0
        %v2403 = vadd.f32 %v1381, %v2402
        %v2404 = vpop.f32.mrf.mxu0
        %2405 = vmatprep.mubr.bf16.mxu0 0
        %2406 = vmatmul.mubr.bf16.gmra.mxu0 %v2126
        %v2407 = vpop.f32.mrf.mxu0
        %v2408 = vadd.f32 %v1386, %v2407
        %v2409 = vpop.f32.mrf.mxu0
        %v2410 = vpop.f32.mrf.mxu0
        %v2411 = vadd.f32 %v1391, %v2410
        %v2412 = vpop.f32.mrf.mxu0
        %2413 = vmatprep.mubr.bf16.mxu0 0
        %2414 = vmatmul.mubr.bf16.gmra.mxu0 %v2127
        %v2415 = vpop.f32.mrf.mxu0
        %v2416 = vadd.f32 %v1396, %v2415
        %v2417 = vpop.f32.mrf.mxu0
        %v2418 = vpop.f32.mrf.mxu0
        %v2419 = vadd.f32 %v1401, %v2418
        %v2420 = vpop.f32.mrf.mxu0
        %2421 = vmatprep.mubr.bf16.mxu0 0
        %2422 = vmatmul.mubr.bf16.gmra.mxu0 %v2128
        %v2423 = vpop.f32.mrf.mxu0
        %v2424 = vadd.f32 %v1406, %v2423
        %v2425 = vpop.f32.mrf.mxu0
        %v2426 = vpop.f32.mrf.mxu0
        %v2427 = vadd.f32 %v1411, %v2426
        %v2428 = vpop.f32.mrf.mxu0
        %2429 = vmatprep.mubr.bf16.mxu0 0
        %2430 = vmatmul.mubr.bf16.gmra.mxu0 %v2129
        %v2431 = vpop.f32.mrf.mxu0
        %v2432 = vadd.f32 %v1416, %v2431
        %v2433 = vpop.f32.mrf.mxu0
        %v2434 = vpop.f32.mrf.mxu0
        %v2435 = vadd.f32 %v1421, %v2434
        %v2436 = vpop.f32.mrf.mxu0
        %2437 = vmatprep.mubr.bf16.mxu0 0
        %2438 = vmatmul.mubr.bf16.gmra.mxu0 %v2130
        %v2439 = vpop.f32.mrf.mxu0
        %v2440 = vadd.f32 %v1426, %v2439
        %v2441 = vpop.f32.mrf.mxu0
        %v2442 = vpop.f32.mrf.mxu0
        %v2443 = vadd.f32 %v1431, %v2442
        %v2444 = vpop.f32.mrf.mxu0
        %2445 = vmatprep.mubr.bf16.mxu0 0
        %2446 = vmatmul.mubr.bf16.gmra.mxu0 %v2131
        %v2447 = vpop.f32.mrf.mxu0
        %v2448 = vadd.f32 %v1436, %v2447
        %v2449 = vpop.f32.mrf.mxu0
        %v2450 = vpop.f32.mrf.mxu0
        %v2451 = vadd.f32 %v1441, %v2450
        %v2452 = vpop.f32.mrf.mxu0
        %2453 = vmatprep.mubr.bf16.mxu0 0
        %2454 = vmatmul.mubr.bf16.gmra.mxu0 %v2132
        %v2455 = vpop.f32.mrf.mxu0
        %v2456 = vadd.f32 %v1446, %v2455
        %v2457 = vpop.f32.mrf.mxu0
        %v2458 = vpop.f32.mrf.mxu0
        %v2459 = vadd.f32 %v1451, %v2458
        %v2460 = vpop.f32.mrf.mxu0
        %2461 = vmatprep.mubr.bf16.mxu0 0
        %2462 = vmatmul.mubr.bf16.gmra.mxu0 %v2133
        %v2463 = vpop.f32.mrf.mxu0
        %v2464 = vadd.f32 %v1456, %v2463
        %v2465 = vpop.f32.mrf.mxu0
        %v2466 = vpop.f32.mrf.mxu0
        %v2467 = vadd.f32 %v1461, %v2466
        %v2468 = vpop.f32.mrf.mxu0
        %2469 = vmatprep.mubr.bf16.mxu0 0
        %2470 = vmatmul.mubr.bf16.gmra.mxu0 %v2134
        %v2471 = vpop.f32.mrf.mxu0
        %v2472 = vadd.f32 %v1466, %v2471
        %v2473 = vpop.f32.mrf.mxu0
        %v2474 = vpop.f32.mrf.mxu0
        %v2475 = vadd.f32 %v1471, %v2474
        %v2476 = vpop.f32.mrf.mxu0
        %2477 = vmatprep.mubr.bf16.mxu0 0
        %2478 = vmatmul.mubr.bf16.gmra.mxu0 %v2135
        %v2479 = vpop.f32.mrf.mxu0
        %v2480 = vadd.f32 %v1476, %v2479
        %v2481 = vpop.f32.mrf.mxu0
        %v2482 = vpop.f32.mrf.mxu0
        %v2483 = vadd.f32 %v1481, %v2482
        %v2484 = vpop.f32.mrf.mxu0
        %2485 = vmatprep.mubr.bf16.mxu0 0
        %2486 = vmatmul.mubr.bf16.gmra.mxu0 %v2136
        %v2487 = vpop.f32.mrf.mxu0
        %v2488 = vadd.f32 %v1486, %v2487
        %v2489 = vpop.f32.mrf.mxu0
        %v2490 = vpop.f32.mrf.mxu0
        %v2491 = vadd.f32 %v1491, %v2490
        %v2492 = vpop.f32.mrf.mxu0
        %2493 = vmatprep.mubr.bf16.mxu0 0
        %2494 = vmatmul.mubr.bf16.gmra.mxu0 %v2137
        %v2495 = vpop.f32.mrf.mxu0
        %v2496 = vadd.f32 %v1496, %v2495
        %v2497 = vpop.f32.mrf.mxu0
        %v2498 = vpop.f32.mrf.mxu0
        %v2499 = vadd.f32 %v1501, %v2498
        %v2500 = vpop.f32.mrf.mxu0
        %2501 = vmatprep.mubr.bf16.mxu0 0
        %2502 = vmatmul.mubr.bf16.gmra.mxu0 %v2138
        %v2503 = vpop.f32.mrf.mxu0
        %v2504 = vadd.f32 %v1506, %v2503
        %v2505 = vpop.f32.mrf.mxu0
        %v2506 = vpop.f32.mrf.mxu0
        %v2507 = vadd.f32 %v1511, %v2506
        %v2508 = vpop.f32.mrf.mxu0
        %2509 = vmatprep.mubr.bf16.mxu0 0
        %2510 = vmatmul.mubr.bf16.gmra.mxu0 %v2139
        %v2511 = vpop.f32.mrf.mxu0
        %v2512 = vadd.f32 %v1516, %v2511
        %v2513 = vpop.f32.mrf.mxu0
        %v2514 = vpop.f32.mrf.mxu0
        %v2515 = vadd.f32 %v1521, %v2514
        %v2516 = vpop.f32.mrf.mxu0
        %2517 = vmatprep.mubr.bf16.mxu0 0
        %2518 = vmatmul.mubr.bf16.gmra.mxu0 %v2140
        %v2519 = vpop.f32.mrf.mxu0
        %v2520 = vadd.f32 %v1526, %v2519
        %v2521 = vpop.f32.mrf.mxu0
        %v2522 = vpop.f32.mrf.mxu0
        %v2523 = vadd.f32 %v1531, %v2522
        %v2524 = vpop.f32.mrf.mxu0
        %2525 = vmatprep.mubr.bf16.mxu0 0
        %2526 = vmatmul.mubr.bf16.gmra.mxu0 %v2141
        %v2527 = vpop.f32.mrf.mxu0
        %v2528 = vadd.f32 %v1536, %v2527
        %v2529 = vpop.f32.mrf.mxu0
        %v2530 = vpop.f32.mrf.mxu0
        %v2531 = vadd.f32 %v1541, %v2530
        %v2532 = vpop.f32.mrf.mxu0
        %2533 = vmatprep.mubr.bf16.mxu0 0
        %2534 = vmatmul.mubr.bf16.gmra.mxu0 %v2142
        %v2535 = vpop.f32.mrf.mxu0
        %v2536 = vadd.f32 %v1546, %v2535
        %v2537 = vpop.f32.mrf.mxu0
        %v2538 = vpop.f32.mrf.mxu0
        %v2539 = vadd.f32 %v1551, %v2538
        %v2540 = vpop.f32.mrf.mxu0
        %2541 = vmatprep.mubr.bf16.mxu0 0
        %2542 = vmatmul.mubr.bf16.gmra.mxu0 %v2143
        %v2543 = vpop.f32.mrf.mxu0
        %v2544 = vadd.f32 %v1556, %v2543
        %v2545 = vpop.f32.mrf.mxu0
        %v2546 = vpop.f32.mrf.mxu0
        %v2547 = vadd.f32 %v1561, %v2546
        %v2548 = vpop.f32.mrf.mxu0
        %2549 = vmatprep.mubr.bf16.mxu0 0
        %2550 = vmatmul.mubr.bf16.gmra.mxu0 %v2144
        %v2551 = vpop.f32.mrf.mxu0
        %v2552 = vadd.f32 %v1566, %v2551
        %v2553 = vpop.f32.mrf.mxu0
        %v2554 = vpop.f32.mrf.mxu0
        %v2555 = vadd.f32 %v1571, %v2554
        %v2556 = vpop.f32.mrf.mxu0
        %2557 = vmatprep.mubr.bf16.mxu0 0
        %2558 = vmatmul.mubr.bf16.gmra.mxu0 %v2145
        %v2559 = vpop.f32.mrf.mxu0
        %v2560 = vadd.f32 %v1576, %v2559
        %v2561 = vpop.f32.mrf.mxu0
        %v2562 = vpop.f32.mrf.mxu0
        %v2563 = vadd.f32 %v1581, %v2562
        %v2564 = vpop.f32.mrf.mxu0
        %2565 = vmatprep.mubr.bf16.mxu0 0
        %2566 = vmatmul.mubr.bf16.gmra.mxu0 %v2146
        %v2567 = vpop.f32.mrf.mxu0
        %v2568 = vadd.f32 %v1586, %v2567
        %v2569 = vpop.f32.mrf.mxu0
        %v2570 = vpop.f32.mrf.mxu0
        %v2571 = vadd.f32 %v1591, %v2570
        %v2572 = vpop.f32.mrf.mxu0
        %2573 = vmatprep.mubr.bf16.mxu0 0
        %2574 = vmatmul.mubr.bf16.gmra.mxu0 %v2147
        %v2575 = vpop.f32.mrf.mxu0
        %v2576 = vadd.f32 %v1596, %v2575
        %v2577 = vpop.f32.mrf.mxu0
        %v2578 = vpop.f32.mrf.mxu0
        %v2579 = vadd.f32 %v1601, %v2578
        %v2580 = vpop.f32.mrf.mxu0
        %2581 = vmatprep.mubr.bf16.mxu0 0
        %2582 = vmatmul.mubr.bf16.gmra.mxu0 %v2148
        %v2583 = vpop.f32.mrf.mxu0
        %v2584 = vadd.f32 %v1606, %v2583
        %v2585 = vpop.f32.mrf.mxu0
        %v2586 = vpop.f32.mrf.mxu0
        %v2587 = vadd.f32 %v1611, %v2586
        %v2588 = vpop.f32.mrf.mxu0
        %2589 = vmatprep.mubr.bf16.mxu0 0
        %2590 = vmatmul.mubr.bf16.gmra.mxu0 %v2149
        %v2591 = vpop.f32.mrf.mxu0
        %v2592 = vadd.f32 %v1616, %v2591
        %v2593 = vpop.f32.mrf.mxu0
        %v2594 = vpop.f32.mrf.mxu0
        %v2595 = vadd.f32 %v1621, %v2594
        %v2596 = vpop.f32.mrf.mxu0
        %2597 = vmatprep.mubr.bf16.mxu0 0
        %2598 = vmatmul.mubr.bf16.gmra.mxu0 %v2150
        %v2599 = vpop.f32.mrf.mxu0
        %v2600 = vadd.f32 %v1626, %v2599
        %v2601 = vpop.f32.mrf.mxu0
        %v2602 = vpop.f32.mrf.mxu0
        %v2603 = vadd.f32 %v1631, %v2602
        %v2604 = vpop.f32.mrf.mxu0
        %2605 = vmatprep.mubr.bf16.mxu0 0
        %2606 = vmatmul.mubr.bf16.gmra.mxu0 %v2151
        %v2607 = vpop.f32.mrf.mxu0
        %v2608 = vadd.f32 %v1636, %v2607
        %v2609 = vpop.f32.mrf.mxu0
        %v2610 = vpop.f32.mrf.mxu0
        %v2611 = vadd.f32 %v1641, %v2610
        %v2612 = vpop.f32.mrf.mxu0
        %2613 = vmatprep.mubr.bf16.mxu0 0
        %2614 = vmatmul.mubr.bf16.gmra.mxu0 %v2152
        %v2615 = vpop.f32.mrf.mxu0
        %v2616 = vadd.f32 %v1646, %v2615
        %v2617 = vpop.f32.mrf.mxu0
        %v2618 = vpop.f32.mrf.mxu0
        %v2619 = vadd.f32 %v1651, %v2618
        %v2620 = vpop.f32.mrf.mxu0
        %2621 = vmatprep.mubr.bf16.mxu0 0
        %2622 = vmatmul.mubr.bf16.gmra.mxu0 %v2153
        %v2623 = vpop.f32.mrf.mxu0
        %v2624 = vadd.f32 %v1656, %v2623
        %v2625 = vpop.f32.mrf.mxu0
        %v2626 = vpop.f32.mrf.mxu0
        %v2627 = vadd.f32 %v1661, %v2626
        %v2628 = vpop.f32.mrf.mxu0
        %2629 = vmatprep.mubr.bf16.mxu0 0
        %2630 = vmatmul.mubr.bf16.gmra.mxu0 %v2154
        %v2631 = vpop.f32.mrf.mxu0
        %v2632 = vadd.f32 %v1666, %v2631
        %v2633 = vpop.f32.mrf.mxu0
        %v2634 = vpop.f32.mrf.mxu0
        %v2635 = vadd.f32 %v1671, %v2634
        %v2636 = vpop.f32.mrf.mxu0
        %2637 = vmatprep.mubr.bf16.mxu0 0
        %2638 = vmatmul.mubr.bf16.gmra.mxu0 %v2155
        %v2639 = vpop.f32.mrf.mxu0
        %v2640 = vadd.f32 %v1676, %v2639
        %v2641 = vpop.f32.mrf.mxu0
        %v2642 = vpop.f32.mrf.mxu0
        %v2643 = vadd.f32 %v1681, %v2642
        %v2644 = vpop.f32.mrf.mxu0
        %2645 = vmatprep.mubr.bf16.mxu0 0
        %2646 = vmatmul.mubr.bf16.gmra.mxu0 %v2156
        %v2647 = vpop.f32.mrf.mxu0
        %v2648 = vadd.f32 %v1686, %v2647
        %v2649 = vpop.f32.mrf.mxu0
        %v2650 = vpop.f32.mrf.mxu0
        %v2651 = vadd.f32 %v1691, %v2650
        %v2652 = vpop.f32.mrf.mxu0
        %2653 = vmatprep.mubr.bf16.mxu0 0
        %2654 = vmatmul.mubr.bf16.gmra.mxu0 %v2157
        %v2655 = vpop.f32.mrf.mxu0
        %v2656 = vadd.f32 %v1696, %v2655
        %v2657 = vpop.f32.mrf.mxu0
        %v2658 = vpop.f32.mrf.mxu0
        %v2659 = vadd.f32 %v1701, %v2658
        %v2660 = vpop.f32.mrf.mxu0
        %2661 = vmatprep.mubr.bf16.mxu0 0
        %2662 = vmatmul.mubr.bf16.gmra.mxu0 %v2158
        %v2663 = vpop.f32.mrf.mxu0
        %v2664 = vadd.f32 %v1706, %v2663
        %v2665 = vpop.f32.mrf.mxu0
        %v2666 = vpop.f32.mrf.mxu0
        %v2667 = vadd.f32 %v1711, %v2666
        %v2668 = vpop.f32.mrf.mxu0
        %2669 = vmatprep.mubr.bf16.mxu0 0
        %2670 = vmatmul.mubr.bf16.gmra.mxu0 %v2159
        %v2671 = vpop.f32.mrf.mxu0
        %v2672 = vadd.f32 %v1716, %v2671
        %v2673 = vpop.f32.mrf.mxu0
        %v2674 = vpop.f32.mrf.mxu0
        %v2675 = vadd.f32 %v1721, %v2674
        %v2676 = vpop.f32.mrf.mxu0
        %2677 = vmatprep.mubr.bf16.mxu0 0
        %2678 = vmatmul.mubr.bf16.gmra.mxu0 %v2160
        %v2679 = vpop.f32.mrf.mxu0
        %v2680 = vadd.f32 %v1726, %v2679
        %v2681 = vpop.f32.mrf.mxu0
        %v2682 = vpop.f32.mrf.mxu0
        %v2683 = vadd.f32 %v1731, %v2682
        %v2684 = vpop.f32.mrf.mxu0
        %2685 = vmatprep.mubr.bf16.mxu0 0
        %2686 = vmatmul.mubr.bf16.gmra.mxu0 %v2161
        %v2687 = vpop.f32.mrf.mxu0
        %v2688 = vadd.f32 %v1736, %v2687
        %v2689 = vpop.f32.mrf.mxu0
        %v2690 = vpop.f32.mrf.mxu0
        %v2691 = vadd.f32 %v1741, %v2690
        %v2692 = vpop.f32.mrf.mxu0
        %2693 = vmatprep.mubr.bf16.mxu0 0
        %2694 = vmatmul.mubr.bf16.gmra.mxu0 %v2162
        %v2695 = vpop.f32.mrf.mxu0
        %v2696 = vadd.f32 %v1746, %v2695
        %v2697 = vpop.f32.mrf.mxu0
        %v2698 = vpop.f32.mrf.mxu0
        %v2699 = vadd.f32 %v1751, %v2698
        %v2700 = vpop.f32.mrf.mxu0
        %2701 = vmatprep.mubr.bf16.mxu0 0
        %2702 = vmatmul.mubr.bf16.gmra.mxu0 %v2163
        %v2703 = vpop.f32.mrf.mxu0
        %v2704 = vadd.f32 %v1756, %v2703
        %v2705 = vpop.f32.mrf.mxu0
        %v2706 = vpop.f32.mrf.mxu0
        %v2707 = vadd.f32 %v1761, %v2706
        %v2708 = vpop.f32.mrf.mxu0
        %2709 = vmatprep.mubr.bf16.mxu0 0
        %2710 = vmatmul.mubr.bf16.gmra.mxu0 %v2164
        %v2711 = vpop.f32.mrf.mxu0
        %v2712 = vadd.f32 %v1766, %v2711
        %v2713 = vpop.f32.mrf.mxu0
        %v2714 = vpop.f32.mrf.mxu0
        %v2715 = vadd.f32 %v1771, %v2714
        %v2716 = vpop.f32.mrf.mxu0
        %2717 = vmatprep.mubr.bf16.mxu0 0
        %2718 = vmatmul.mubr.bf16.gmra.mxu0 %v2165
        %v2719 = vpop.f32.mrf.mxu0
        %v2720 = vadd.f32 %v1776, %v2719
        %v2721 = vpop.f32.mrf.mxu0
        %v2722 = vpop.f32.mrf.mxu0
        %v2723 = vadd.f32 %v1781, %v2722
        %v2724 = vpop.f32.mrf.mxu0
        %2725 = vmatprep.mubr.bf16.mxu0 0
        %2726 = vmatmul.mubr.bf16.gmra.mxu0 %v2166
        %v2727 = vpop.f32.mrf.mxu0
        %v2728 = vadd.f32 %v1786, %v2727
        %v2729 = vpop.f32.mrf.mxu0
        %v2730 = vpop.f32.mrf.mxu0
        %v2731 = vadd.f32 %v1791, %v2730
        %v2732 = vpop.f32.mrf.mxu0
        %2733 = vmatprep.mubr.bf16.mxu0 0
        %2734 = vmatmul.mubr.bf16.gmra.mxu0 %v2167
        %v2735 = vpop.f32.mrf.mxu0
        %v2736 = vadd.f32 %v1796, %v2735
        %v2737 = vpop.f32.mrf.mxu0
        %v2738 = vpop.f32.mrf.mxu0
        %v2739 = vadd.f32 %v1801, %v2738
        %v2740 = vpop.f32.mrf.mxu0
        %2741 = vmatprep.mubr.bf16.mxu0 0
        %2742 = vmatmul.mubr.bf16.gmra.mxu0 %v2168
        %v2743 = vpop.f32.mrf.mxu0
        %v2744 = vadd.f32 %v1806, %v2743
        %v2745 = vpop.f32.mrf.mxu0
        %v2746 = vpop.f32.mrf.mxu0
        %v2747 = vadd.f32 %v1811, %v2746
        %v2748 = vpop.f32.mrf.mxu0
        %2749 = vmatprep.mubr.bf16.mxu0 0
        %2750 = vmatmul.mubr.bf16.gmra.mxu0 %v2169
        %v2751 = vpop.f32.mrf.mxu0
        %v2752 = vadd.f32 %v1816, %v2751
        %v2753 = vpop.f32.mrf.mxu0
        %v2754 = vpop.f32.mrf.mxu0
        %v2755 = vadd.f32 %v1821, %v2754
        %v2756 = vpop.f32.mrf.mxu0
        %2757 = vmatprep.mubr.bf16.mxu0 0
        %2758 = vmatmul.mubr.bf16.gmra.mxu0 %v2170
        %v2759 = vpop.f32.mrf.mxu0
        %v2760 = vadd.f32 %v1826, %v2759
        %v2761 = vpop.f32.mrf.mxu0
        %v2762 = vpop.f32.mrf.mxu0
        %v2763 = vadd.f32 %v1831, %v2762
        %v2764 = vpop.f32.mrf.mxu0
        %2765 = vmatprep.mubr.bf16.mxu0 0
        %2766 = vmatmul.mubr.bf16.gmra.mxu0 %v2171
        %v2767 = vpop.f32.mrf.mxu0
        %v2768 = vadd.f32 %v1836, %v2767
        %v2769 = vpop.f32.mrf.mxu0
        %v2770 = vpop.f32.mrf.mxu0
        %v2771 = vadd.f32 %v1841, %v2770
        %v2772 = vpop.f32.mrf.mxu0
        %2773 = vmatprep.mubr.bf16.mxu0 0
        %2774 = vmatmul.mubr.bf16.gmra.mxu0 %v2172
        %v2775 = vpop.f32.mrf.mxu0
        %v2776 = vadd.f32 %v1846, %v2775
        %v2777 = vpop.f32.mrf.mxu0
        %v2778 = vpop.f32.mrf.mxu0
        %v2779 = vadd.f32 %v1851, %v2778
        %v2780 = vpop.f32.mrf.mxu0
        %2781 = vdwg.mxu0
        %v2782 = vmax.f32 %v2272, 0.0
        %v2783 = vmax.f32 %v2275, 0.0
        %v2784 = vmax.f32 %v2280, 0.0
        %v2785 = vmax.f32 %v2283, 0.0
        %v2786 = vmax.f32 %v2288, 0.0
        %v2787 = vmax.f32 %v2291, 0.0
        %v2788 = vmax.f32 %v2296, 0.0
        %v2789 = vmax.f32 %v2299, 0.0
        %v2790 = vmax.f32 %v2304, 0.0
        %v2791 = vmax.f32 %v2307, 0.0
        %v2792 = vmax.f32 %v2312, 0.0
        %v2793 = vmax.f32 %v2315, 0.0
        %v2794 = vmax.f32 %v2320, 0.0
        %v2795 = vmax.f32 %v2323, 0.0
        %v2796 = vmax.f32 %v2328, 0.0
        %v2797 = vmax.f32 %v2331, 0.0
        %v2798 = vmax.f32 %v2336, 0.0
        %v2799 = vmax.f32 %v2339, 0.0
        %v2800 = vmax.f32 %v2344, 0.0
        %v2801 = vmax.f32 %v2347, 0.0
        %v2802 = vmax.f32 %v2352, 0.0
        %v2803 = vmax.f32 %v2355, 0.0
        %v2804 = vmax.f32 %v2360, 0.0
        %v2805 = vmax.f32 %v2363, 0.0
        %v2806 = vmax.f32 %v2368, 0.0
        %v2807 = vmax.f32 %v2371, 0.0
        %v2808 = vmax.f32 %v2376, 0.0
        %v2809 = vmax.f32 %v2379, 0.0
        %v2810 = vmax.f32 %v2384, 0.0
        %v2811 = vmax.f32 %v2387, 0.0
        %v2812 = vmax.f32 %v2392, 0.0
        %v2813 = vmax.f32 %v2395, 0.0
        %v2814 = vmax.f32 %v2400, 0.0
        %v2815 = vmax.f32 %v2403, 0.0
        %v2816 = vmax.f32 %v2408, 0.0
        %v2817 = vmax.f32 %v2411, 0.0
        %v2818 = vmax.f32 %v2416, 0.0
        %v2819 = vmax.f32 %v2419, 0.0
        %v2820 = vmax.f32 %v2424, 0.0
        %v2821 = vmax.f32 %v2427, 0.0
        %v2822 = vmax.f32 %v2432, 0.0
        %v2823 = vmax.f32 %v2435, 0.0
        %v2824 = vmax.f32 %v2440, 0.0
        %v2825 = vmax.f32 %v2443, 0.0
        %v2826 = vmax.f32 %v2448, 0.0
        %v2827 = vmax.f32 %v2451, 0.0
        %v2828 = vmax.f32 %v2456, 0.0
        %v2829 = vmax.f32 %v2459, 0.0
        %v2830 = vmax.f32 %v2464, 0.0
        %v2831 = vmax.f32 %v2467, 0.0
        %v2832 = vmax.f32 %v2472, 0.0
        %v2833 = vmax.f32 %v2475, 0.0
        %v2834 = vmax.f32 %v2480, 0.0
        %v2835 = vmax.f32 %v2483, 0.0
        %v2836 = vmax.f32 %v2488, 0.0
        %v2837 = vmax.f32 %v2491, 0.0
        %v2838 = vmax.f32 %v2496, 0.0
        %v2839 = vmax.f32 %v2499, 0.0
        %v2840 = vmax.f32 %v2504, 0.0
        %v2841 = vmax.f32 %v2507, 0.0
        %v2842 = vmax.f32 %v2512, 0.0
        %v2843 = vmax.f32 %v2515, 0.0
        %v2844 = vmax.f32 %v2520, 0.0
        %v2845 = vmax.f32 %v2523, 0.0
        %v2846 = vmax.f32 %v2528, 0.0
        %v2847 = vmax.f32 %v2531, 0.0
        %v2848 = vmax.f32 %v2536, 0.0
        %v2849 = vmax.f32 %v2539, 0.0
        %v2850 = vmax.f32 %v2544, 0.0
        %v2851 = vmax.f32 %v2547, 0.0
        %v2852 = vmax.f32 %v2552, 0.0
        %v2853 = vmax.f32 %v2555, 0.0
        %v2854 = vmax.f32 %v2560, 0.0
        %v2855 = vmax.f32 %v2563, 0.0
        %v2856 = vmax.f32 %v2568, 0.0
        %v2857 = vmax.f32 %v2571, 0.0
        %v2858 = vmax.f32 %v2576, 0.0
        %v2859 = vmax.f32 %v2579, 0.0
        %v2860 = vmax.f32 %v2584, 0.0
        %v2861 = vmax.f32 %v2587, 0.0
        %v2862 = vmax.f32 %v2592, 0.0
        %v2863 = vmax.f32 %v2595, 0.0
        %v2864 = vmax.f32 %v2600, 0.0
        %v2865 = vmax.f32 %v2603, 0.0
        %v2866 = vmax.f32 %v2608, 0.0
        %v2867 = vmax.f32 %v2611, 0.0
        %v2868 = vmax.f32 %v2616, 0.0
        %v2869 = vmax.f32 %v2619, 0.0
        %v2870 = vmax.f32 %v2624, 0.0
        %v2871 = vmax.f32 %v2627, 0.0
        %v2872 = vmax.f32 %v2632, 0.0
        %v2873 = vmax.f32 %v2635, 0.0
        %v2874 = vmax.f32 %v2640, 0.0
        %v2875 = vmax.f32 %v2643, 0.0
        %v2876 = vmax.f32 %v2648, 0.0
        %v2877 = vmax.f32 %v2651, 0.0
        %v2878 = vmax.f32 %v2656, 0.0
        %v2879 = vmax.f32 %v2659, 0.0
        %v2880 = vmax.f32 %v2664, 0.0
        %v2881 = vmax.f32 %v2667, 0.0
        %v2882 = vmax.f32 %v2672, 0.0
        %v2883 = vmax.f32 %v2675, 0.0
        %v2884 = vmax.f32 %v2680, 0.0
        %v2885 = vmax.f32 %v2683, 0.0
        %v2886 = vmax.f32 %v2688, 0.0
        %v2887 = vmax.f32 %v2691, 0.0
        %v2888 = vmax.f32 %v2696, 0.0
        %v2889 = vmax.f32 %v2699, 0.0
        %v2890 = vmax.f32 %v2704, 0.0
        %v2891 = vmax.f32 %v2707, 0.0
        %v2892 = vmax.f32 %v2712, 0.0
        %v2893 = vmax.f32 %v2715, 0.0
        %v2894 = vmax.f32 %v2720, 0.0
        %v2895 = vmax.f32 %v2723, 0.0
        %v2896 = vmax.f32 %v2728, 0.0
        %v2897 = vmax.f32 %v2731, 0.0
        %v2898 = vmax.f32 %v2736, 0.0
        %v2899 = vmax.f32 %v2739, 0.0
        %v2900 = vmax.f32 %v2744, 0.0
        %v2901 = vmax.f32 %v2747, 0.0
        %v2902 = vmax.f32 %v2752, 0.0
        %v2903 = vmax.f32 %v2755, 0.0
        %v2904 = vmax.f32 %v2760, 0.0
        %v2905 = vmax.f32 %v2763, 0.0
        %v2906 = vmax.f32 %v2768, 0.0
        %v2907 = vmax.f32 %v2771, 0.0
        %v2908 = vmax.f32 %v2776, 0.0
        %v2909 = vmax.f32 %v2779, 0.0
        %p2910 = scmp.eq.s32.totalorder %s36, 0
        // Predicated region
        $region81: #{tpu_custom_call.1} parent=71 // pred_check
          %p2911 = pneg %p2910
        $region82: #{tpu_custom_call.1} parent=71 // pred_check_branch
          %2913 = sbr.rel (%p2911) target = $region84
        $region83: #{tpu_custom_call.1} parent=71 // pred_region
          %2914 = vst [vmem:[#allocation2] sm:$0xff] %v2782
          %2915 = vst [vmem:[#allocation2 + $0x8] sm:$0xff] %v2783
          %2916 = vst [vmem:[#allocation2 + $0x10] sm:$0xff] %v2784
          %2917 = vst [vmem:[#allocation2 + $0x18] sm:$0xff] %v2785
          %2918 = vst [vmem:[#allocation2 + $0x20] sm:$0xff] %v2786
          %2919 = vst [vmem:[#allocation2 + $0x28] sm:$0xff] %v2787
          %2920 = vst [vmem:[#allocation2 + $0x30] sm:$0xff] %v2788
          %2921 = vst [vmem:[#allocation2 + $0x38] sm:$0xff] %v2789
          %2922 = vst [vmem:[#allocation2 + $0x40] sm:$0xff] %v2790
          %2923 = vst [vmem:[#allocation2 + $0x48] sm:$0xff] %v2791
          %2924 = vst [vmem:[#allocation2 + $0x50] sm:$0xff] %v2792
          %2925 = vst [vmem:[#allocation2 + $0x58] sm:$0xff] %v2793
          %2926 = vst [vmem:[#allocation2 + $0x60] sm:$0xff] %v2794
          %2927 = vst [vmem:[#allocation2 + $0x68] sm:$0xff] %v2795
          %2928 = vst [vmem:[#allocation2 + $0x70] sm:$0xff] %v2796
          %2929 = vst [vmem:[#allocation2 + $0x78] sm:$0xff] %v2797
          %2930 = vst [vmem:[#allocation2 + $0x80] sm:$0xff] %v2798
          %2931 = vst [vmem:[#allocation2 + $0x88] sm:$0xff] %v2799
          %2932 = vst [vmem:[#allocation2 + $0x90] sm:$0xff] %v2800
          %2933 = vst [vmem:[#allocation2 + $0x98] sm:$0xff] %v2801
          %2934 = vst [vmem:[#allocation2 + $0xa0] sm:$0xff] %v2802
          %2935 = vst [vmem:[#allocation2 + $0xa8] sm:$0xff] %v2803
          %2936 = vst [vmem:[#allocation2 + $0xb0] sm:$0xff] %v2804
          %2937 = vst [vmem:[#allocation2 + $0xb8] sm:$0xff] %v2805
          %2938 = vst [vmem:[#allocation2 + $0xc0] sm:$0xff] %v2806
          %2939 = vst [vmem:[#allocation2 + $0xc8] sm:$0xff] %v2807
          %2940 = vst [vmem:[#allocation2 + $0xd0] sm:$0xff] %v2808
          %2941 = vst [vmem:[#allocation2 + $0xd8] sm:$0xff] %v2809
          %2942 = vst [vmem:[#allocation2 + $0xe0] sm:$0xff] %v2810
          %2943 = vst [vmem:[#allocation2 + $0xe8] sm:$0xff] %v2811
          %2944 = vst [vmem:[#allocation2 + $0xf0] sm:$0xff] %v2812
          %2945 = vst [vmem:[#allocation2 + $0xf8] sm:$0xff] %v2813
          %2946 = vst [vmem:[#allocation2 + $0x100] sm:$0xff] %v2814
          %2947 = vst [vmem:[#allocation2 + $0x108] sm:$0xff] %v2815
          %2948 = vst [vmem:[#allocation2 + $0x110] sm:$0xff] %v2816
          %2949 = vst [vmem:[#allocation2 + $0x118] sm:$0xff] %v2817
          %2950 = vst [vmem:[#allocation2 + $0x120] sm:$0xff] %v2818
          %2951 = vst [vmem:[#allocation2 + $0x128] sm:$0xff] %v2819
          %2952 = vst [vmem:[#allocation2 + $0x130] sm:$0xff] %v2820
          %2953 = vst [vmem:[#allocation2 + $0x138] sm:$0xff] %v2821
          %2954 = vst [vmem:[#allocation2 + $0x140] sm:$0xff] %v2822
          %2955 = vst [vmem:[#allocation2 + $0x148] sm:$0xff] %v2823
          %2956 = vst [vmem:[#allocation2 + $0x150] sm:$0xff] %v2824
          %2957 = vst [vmem:[#allocation2 + $0x158] sm:$0xff] %v2825
          %2958 = vst [vmem:[#allocation2 + $0x160] sm:$0xff] %v2826
          %2959 = vst [vmem:[#allocation2 + $0x168] sm:$0xff] %v2827
          %2960 = vst [vmem:[#allocation2 + $0x170] sm:$0xff] %v2828
          %2961 = vst [vmem:[#allocation2 + $0x178] sm:$0xff] %v2829
          %2962 = vst [vmem:[#allocation2 + $0x180] sm:$0xff] %v2830
          %2963 = vst [vmem:[#allocation2 + $0x188] sm:$0xff] %v2831
          %2964 = vst [vmem:[#allocation2 + $0x190] sm:$0xff] %v2832
          %2965 = vst [vmem:[#allocation2 + $0x198] sm:$0xff] %v2833
          %2966 = vst [vmem:[#allocation2 + $0x1a0] sm:$0xff] %v2834
          %2967 = vst [vmem:[#allocation2 + $0x1a8] sm:$0xff] %v2835
          %2968 = vst [vmem:[#allocation2 + $0x1b0] sm:$0xff] %v2836
          %2969 = vst [vmem:[#allocation2 + $0x1b8] sm:$0xff] %v2837
          %2970 = vst [vmem:[#allocation2 + $0x1c0] sm:$0xff] %v2838
          %2971 = vst [vmem:[#allocation2 + $0x1c8] sm:$0xff] %v2839
          %2972 = vst [vmem:[#allocation2 + $0x1d0] sm:$0xff] %v2840
          %2973 = vst [vmem:[#allocation2 + $0x1d8] sm:$0xff] %v2841
          %2974 = vst [vmem:[#allocation2 + $0x1e0] sm:$0xff] %v2842
          %2975 = vst [vmem:[#allocation2 + $0x1e8] sm:$0xff] %v2843
          %2976 = vst [vmem:[#allocation2 + $0x1f0] sm:$0xff] %v2844
          %2977 = vst [vmem:[#allocation2 + $0x1f8] sm:$0xff] %v2845
          %2978 = vst [vmem:[#allocation2 + $0x200] sm:$0xff] %v2846
          %2979 = vst [vmem:[#allocation2 + $0x208] sm:$0xff] %v2847
          %2980 = vst [vmem:[#allocation2 + $0x210] sm:$0xff] %v2848
          %2981 = vst [vmem:[#allocation2 + $0x218] sm:$0xff] %v2849
          %2982 = vst [vmem:[#allocation2 + $0x220] sm:$0xff] %v2850
          %2983 = vst [vmem:[#allocation2 + $0x228] sm:$0xff] %v2851
          %2984 = vst [vmem:[#allocation2 + $0x230] sm:$0xff] %v2852
          %2985 = vst [vmem:[#allocation2 + $0x238] sm:$0xff] %v2853
          %2986 = vst [vmem:[#allocation2 + $0x240] sm:$0xff] %v2854
          %2987 = vst [vmem:[#allocation2 + $0x248] sm:$0xff] %v2855
          %2988 = vst [vmem:[#allocation2 + $0x250] sm:$0xff] %v2856
          %2989 = vst [vmem:[#allocation2 + $0x258] sm:$0xff] %v2857
          %2990 = vst [vmem:[#allocation2 + $0x260] sm:$0xff] %v2858
          %2991 = vst [vmem:[#allocation2 + $0x268] sm:$0xff] %v2859
          %2992 = vst [vmem:[#allocation2 + $0x270] sm:$0xff] %v2860
          %2993 = vst [vmem:[#allocation2 + $0x278] sm:$0xff] %v2861
          %2994 = vst [vmem:[#allocation2 + $0x280] sm:$0xff] %v2862
          %2995 = vst [vmem:[#allocation2 + $0x288] sm:$0xff] %v2863
          %2996 = vst [vmem:[#allocation2 + $0x290] sm:$0xff] %v2864
          %2997 = vst [vmem:[#allocation2 + $0x298] sm:$0xff] %v2865
          %2998 = vst [vmem:[#allocation2 + $0x2a0] sm:$0xff] %v2866
          %2999 = vst [vmem:[#allocation2 + $0x2a8] sm:$0xff] %v2867
          %3000 = vst [vmem:[#allocation2 + $0x2b0] sm:$0xff] %v2868
          %3001 = vst [vmem:[#allocation2 + $0x2b8] sm:$0xff] %v2869
          %3002 = vst [vmem:[#allocation2 + $0x2c0] sm:$0xff] %v2870
          %3003 = vst [vmem:[#allocation2 + $0x2c8] sm:$0xff] %v2871
          %3004 = vst [vmem:[#allocation2 + $0x2d0] sm:$0xff] %v2872
          %3005 = vst [vmem:[#allocation2 + $0x2d8] sm:$0xff] %v2873
          %3006 = vst [vmem:[#allocation2 + $0x2e0] sm:$0xff] %v2874
          %3007 = vst [vmem:[#allocation2 + $0x2e8] sm:$0xff] %v2875
          %3008 = vst [vmem:[#allocation2 + $0x2f0] sm:$0xff] %v2876
          %3009 = vst [vmem:[#allocation2 + $0x2f8] sm:$0xff] %v2877
          %3010 = vst [vmem:[#allocation2 + $0x300] sm:$0xff] %v2878
          %3011 = vst [vmem:[#allocation2 + $0x308] sm:$0xff] %v2879
          %3012 = vst [vmem:[#allocation2 + $0x310] sm:$0xff] %v2880
          %3013 = vst [vmem:[#allocation2 + $0x318] sm:$0xff] %v2881
          %3014 = vst [vmem:[#allocation2 + $0x320] sm:$0xff] %v2882
          %3015 = vst [vmem:[#allocation2 + $0x328] sm:$0xff] %v2883
          %3016 = vst [vmem:[#allocation2 + $0x330] sm:$0xff] %v2884
          %3017 = vst [vmem:[#allocation2 + $0x338] sm:$0xff] %v2885
          %3018 = vst [vmem:[#allocation2 + $0x340] sm:$0xff] %v2886
          %3019 = vst [vmem:[#allocation2 + $0x348] sm:$0xff] %v2887
          %3020 = vst [vmem:[#allocation2 + $0x350] sm:$0xff] %v2888
          %3021 = vst [vmem:[#allocation2 + $0x358] sm:$0xff] %v2889
          %3022 = vst [vmem:[#allocation2 + $0x360] sm:$0xff] %v2890
          %3023 = vst [vmem:[#allocation2 + $0x368] sm:$0xff] %v2891
          %3024 = vst [vmem:[#allocation2 + $0x370] sm:$0xff] %v2892
          %3025 = vst [vmem:[#allocation2 + $0x378] sm:$0xff] %v2893
          %3026 = vst [vmem:[#allocation2 + $0x380] sm:$0xff] %v2894
          %3027 = vst [vmem:[#allocation2 + $0x388] sm:$0xff] %v2895
          %3028 = vst [vmem:[#allocation2 + $0x390] sm:$0xff] %v2896
          %3029 = vst [vmem:[#allocation2 + $0x398] sm:$0xff] %v2897
          %3030 = vst [vmem:[#allocation2 + $0x3a0] sm:$0xff] %v2898
          %3031 = vst [vmem:[#allocation2 + $0x3a8] sm:$0xff] %v2899
          %3032 = vst [vmem:[#allocation2 + $0x3b0] sm:$0xff] %v2900
          %3033 = vst [vmem:[#allocation2 + $0x3b8] sm:$0xff] %v2901
          %3034 = vst [vmem:[#allocation2 + $0x3c0] sm:$0xff] %v2902
          %3035 = vst [vmem:[#allocation2 + $0x3c8] sm:$0xff] %v2903
          %3036 = vst [vmem:[#allocation2 + $0x3d0] sm:$0xff] %v2904
          %3037 = vst [vmem:[#allocation2 + $0x3d8] sm:$0xff] %v2905
          %3038 = vst [vmem:[#allocation2 + $0x3e0] sm:$0xff] %v2906
          %3039 = vst [vmem:[#allocation2 + $0x3e8] sm:$0xff] %v2907
          %3040 = vst [vmem:[#allocation2 + $0x3f0] sm:$0xff] %v2908
          %3041 = vst [vmem:[#allocation2 + $0x3f8] sm:$0xff] %v2909
        $region84: #{tpu_custom_call.1} parent=71 // pred_fallthru
          _
        %p3042 = scmp.gt.s32.totalorder %s36, 0
        // Predicated region
        $region85: #{tpu_custom_call.1} parent=71 // pred_check
          %p3043 = pneg %p3042
        $region86: #{tpu_custom_call.1} parent=71 // pred_check_branch
          %3045 = sbr.rel (%p3043) target = $region88
        $region87: #{tpu_custom_call.1} parent=71 // pred_region
          %v3046 = vld [vmem:[#allocation2] sm:$0xff]
          %v3047 = vld [vmem:[#allocation2 + $0x8] sm:$0xff]
          %v3048 = vld [vmem:[#allocation2 + $0x10] sm:$0xff]
          %v3049 = vld [vmem:[#allocation2 + $0x18] sm:$0xff]
          %v3050 = vld [vmem:[#allocation2 + $0x20] sm:$0xff]
          %v3051 = vld [vmem:[#allocation2 + $0x28] sm:$0xff]
          %v3052 = vld [vmem:[#allocation2 + $0x30] sm:$0xff]
          %v3053 = vld [vmem:[#allocation2 + $0x38] sm:$0xff]
          %v3054 = vld [vmem:[#allocation2 + $0x40] sm:$0xff]
          %v3055 = vld [vmem:[#allocation2 + $0x48] sm:$0xff]
          %v3056 = vld [vmem:[#allocation2 + $0x50] sm:$0xff]
          %v3057 = vld [vmem:[#allocation2 + $0x58] sm:$0xff]
          %v3058 = vld [vmem:[#allocation2 + $0x60] sm:$0xff]
          %v3059 = vld [vmem:[#allocation2 + $0x68] sm:$0xff]
          %v3060 = vld [vmem:[#allocation2 + $0x70] sm:$0xff]
          %v3061 = vld [vmem:[#allocation2 + $0x78] sm:$0xff]
          %v3062 = vld [vmem:[#allocation2 + $0x80] sm:$0xff]
          %v3063 = vld [vmem:[#allocation2 + $0x88] sm:$0xff]
          %v3064 = vld [vmem:[#allocation2 + $0x90] sm:$0xff]
          %v3065 = vld [vmem:[#allocation2 + $0x98] sm:$0xff]
          %v3066 = vld [vmem:[#allocation2 + $0xa0] sm:$0xff]
          %v3067 = vld [vmem:[#allocation2 + $0xa8] sm:$0xff]
          %v3068 = vld [vmem:[#allocation2 + $0xb0] sm:$0xff]
          %v3069 = vld [vmem:[#allocation2 + $0xb8] sm:$0xff]
          %v3070 = vld [vmem:[#allocation2 + $0xc0] sm:$0xff]
          %v3071 = vld [vmem:[#allocation2 + $0xc8] sm:$0xff]
          %v3072 = vld [vmem:[#allocation2 + $0xd0] sm:$0xff]
          %v3073 = vld [vmem:[#allocation2 + $0xd8] sm:$0xff]
          %v3074 = vld [vmem:[#allocation2 + $0xe0] sm:$0xff]
          %v3075 = vld [vmem:[#allocation2 + $0xe8] sm:$0xff]
          %v3076 = vld [vmem:[#allocation2 + $0xf0] sm:$0xff]
          %v3077 = vld [vmem:[#allocation2 + $0xf8] sm:$0xff]
          %v3078 = vld [vmem:[#allocation2 + $0x100] sm:$0xff]
          %v3079 = vld [vmem:[#allocation2 + $0x108] sm:$0xff]
          %v3080 = vld [vmem:[#allocation2 + $0x110] sm:$0xff]
          %v3081 = vld [vmem:[#allocation2 + $0x118] sm:$0xff]
          %v3082 = vld [vmem:[#allocation2 + $0x120] sm:$0xff]
          %v3083 = vld [vmem:[#allocation2 + $0x128] sm:$0xff]
          %v3084 = vld [vmem:[#allocation2 + $0x130] sm:$0xff]
          %v3085 = vld [vmem:[#allocation2 + $0x138] sm:$0xff]
          %v3086 = vld [vmem:[#allocation2 + $0x140] sm:$0xff]
          %v3087 = vld [vmem:[#allocation2 + $0x148] sm:$0xff]
          %v3088 = vld [vmem:[#allocation2 + $0x150] sm:$0xff]
          %v3089 = vld [vmem:[#allocation2 + $0x158] sm:$0xff]
          %v3090 = vld [vmem:[#allocation2 + $0x160] sm:$0xff]
          %v3091 = vld [vmem:[#allocation2 + $0x168] sm:$0xff]
          %v3092 = vld [vmem:[#allocation2 + $0x170] sm:$0xff]
          %v3093 = vld [vmem:[#allocation2 + $0x178] sm:$0xff]
          %v3094 = vld [vmem:[#allocation2 + $0x180] sm:$0xff]
          %v3095 = vld [vmem:[#allocation2 + $0x188] sm:$0xff]
          %v3096 = vld [vmem:[#allocation2 + $0x190] sm:$0xff]
          %v3097 = vld [vmem:[#allocation2 + $0x198] sm:$0xff]
          %v3098 = vld [vmem:[#allocation2 + $0x1a0] sm:$0xff]
          %v3099 = vld [vmem:[#allocation2 + $0x1a8] sm:$0xff]
          %v3100 = vld [vmem:[#allocation2 + $0x1b0] sm:$0xff]
          %v3101 = vld [vmem:[#allocation2 + $0x1b8] sm:$0xff]
          %v3102 = vld [vmem:[#allocation2 + $0x1c0] sm:$0xff]
          %v3103 = vld [vmem:[#allocation2 + $0x1c8] sm:$0xff]
          %v3104 = vld [vmem:[#allocation2 + $0x1d0] sm:$0xff]
          %v3105 = vld [vmem:[#allocation2 + $0x1d8] sm:$0xff]
          %v3106 = vld [vmem:[#allocation2 + $0x1e0] sm:$0xff]
          %v3107 = vld [vmem:[#allocation2 + $0x1e8] sm:$0xff]
          %v3108 = vld [vmem:[#allocation2 + $0x1f0] sm:$0xff]
          %v3109 = vld [vmem:[#allocation2 + $0x1f8] sm:$0xff]
          %v3110 = vld [vmem:[#allocation2 + $0x200] sm:$0xff]
          %v3111 = vld [vmem:[#allocation2 + $0x208] sm:$0xff]
          %v3112 = vld [vmem:[#allocation2 + $0x210] sm:$0xff]
          %v3113 = vld [vmem:[#allocation2 + $0x218] sm:$0xff]
          %v3114 = vld [vmem:[#allocation2 + $0x220] sm:$0xff]
          %v3115 = vld [vmem:[#allocation2 + $0x228] sm:$0xff]
          %v3116 = vld [vmem:[#allocation2 + $0x230] sm:$0xff]
          %v3117 = vld [vmem:[#allocation2 + $0x238] sm:$0xff]
          %v3118 = vld [vmem:[#allocation2 + $0x240] sm:$0xff]
          %v3119 = vld [vmem:[#allocation2 + $0x248] sm:$0xff]
          %v3120 = vld [vmem:[#allocation2 + $0x250] sm:$0xff]
          %v3121 = vld [vmem:[#allocation2 + $0x258] sm:$0xff]
          %v3122 = vld [vmem:[#allocation2 + $0x260] sm:$0xff]
          %v3123 = vld [vmem:[#allocation2 + $0x268] sm:$0xff]
          %v3124 = vld [vmem:[#allocation2 + $0x270] sm:$0xff]
          %v3125 = vld [vmem:[#allocation2 + $0x278] sm:$0xff]
          %v3126 = vld [vmem:[#allocation2 + $0x280] sm:$0xff]
          %v3127 = vld [vmem:[#allocation2 + $0x288] sm:$0xff]
          %v3128 = vld [vmem:[#allocation2 + $0x290] sm:$0xff]
          %v3129 = vld [vmem:[#allocation2 + $0x298] sm:$0xff]
          %v3130 = vld [vmem:[#allocation2 + $0x2a0] sm:$0xff]
          %v3131 = vld [vmem:[#allocation2 + $0x2a8] sm:$0xff]
          %v3132 = vld [vmem:[#allocation2 + $0x2b0] sm:$0xff]
          %v3133 = vld [vmem:[#allocation2 + $0x2b8] sm:$0xff]
          %v3134 = vld [vmem:[#allocation2 + $0x2c0] sm:$0xff]
          %v3135 = vld [vmem:[#allocation2 + $0x2c8] sm:$0xff]
          %v3136 = vld [vmem:[#allocation2 + $0x2d0] sm:$0xff]
          %v3137 = vld [vmem:[#allocation2 + $0x2d8] sm:$0xff]
          %v3138 = vld [vmem:[#allocation2 + $0x2e0] sm:$0xff]
          %v3139 = vld [vmem:[#allocation2 + $0x2e8] sm:$0xff]
          %v3140 = vld [vmem:[#allocation2 + $0x2f0] sm:$0xff]
          %v3141 = vld [vmem:[#allocation2 + $0x2f8] sm:$0xff]
          %v3142 = vld [vmem:[#allocation2 + $0x300] sm:$0xff]
          %v3143 = vld [vmem:[#allocation2 + $0x308] sm:$0xff]
          %v3144 = vld [vmem:[#allocation2 + $0x310] sm:$0xff]
          %v3145 = vld [vmem:[#allocation2 + $0x318] sm:$0xff]
          %v3146 = vld [vmem:[#allocation2 + $0x320] sm:$0xff]
          %v3147 = vld [vmem:[#allocation2 + $0x328] sm:$0xff]
          %v3148 = vld [vmem:[#allocation2 + $0x330] sm:$0xff]
          %v3149 = vld [vmem:[#allocation2 + $0x338] sm:$0xff]
          %v3150 = vld [vmem:[#allocation2 + $0x340] sm:$0xff]
          %v3151 = vld [vmem:[#allocation2 + $0x348] sm:$0xff]
          %v3152 = vld [vmem:[#allocation2 + $0x350] sm:$0xff]
          %v3153 = vld [vmem:[#allocation2 + $0x358] sm:$0xff]
          %v3154 = vld [vmem:[#allocation2 + $0x360] sm:$0xff]
          %v3155 = vld [vmem:[#allocation2 + $0x368] sm:$0xff]
          %v3156 = vld [vmem:[#allocation2 + $0x370] sm:$0xff]
          %v3157 = vld [vmem:[#allocation2 + $0x378] sm:$0xff]
          %v3158 = vld [vmem:[#allocation2 + $0x380] sm:$0xff]
          %v3159 = vld [vmem:[#allocation2 + $0x388] sm:$0xff]
          %v3160 = vld [vmem:[#allocation2 + $0x390] sm:$0xff]
          %v3161 = vld [vmem:[#allocation2 + $0x398] sm:$0xff]
          %v3162 = vld [vmem:[#allocation2 + $0x3a0] sm:$0xff]
          %v3163 = vld [vmem:[#allocation2 + $0x3a8] sm:$0xff]
          %v3164 = vld [vmem:[#allocation2 + $0x3b0] sm:$0xff]
          %v3165 = vld [vmem:[#allocation2 + $0x3b8] sm:$0xff]
          %v3166 = vld [vmem:[#allocation2 + $0x3c0] sm:$0xff]
          %v3167 = vld [vmem:[#allocation2 + $0x3c8] sm:$0xff]
          %v3168 = vld [vmem:[#allocation2 + $0x3d0] sm:$0xff]
          %v3169 = vld [vmem:[#allocation2 + $0x3d8] sm:$0xff]
          %v3170 = vld [vmem:[#allocation2 + $0x3e0] sm:$0xff]
          %v3171 = vld [vmem:[#allocation2 + $0x3e8] sm:$0xff]
          %v3172 = vld [vmem:[#allocation2 + $0x3f0] sm:$0xff]
          %v3173 = vld [vmem:[#allocation2 + $0x3f8] sm:$0xff]
          %v3174 = vmax.f32 %v3046, %v2782
          %v3175 = vmax.f32 %v3047, %v2783
          %v3176 = vmax.f32 %v3048, %v2784
          %v3177 = vmax.f32 %v3049, %v2785
          %v3178 = vmax.f32 %v3050, %v2786
          %v3179 = vmax.f32 %v3051, %v2787
          %v3180 = vmax.f32 %v3052, %v2788
          %v3181 = vmax.f32 %v3053, %v2789
          %v3182 = vmax.f32 %v3054, %v2790
          %v3183 = vmax.f32 %v3055, %v2791
          %v3184 = vmax.f32 %v3056, %v2792
          %v3185 = vmax.f32 %v3057, %v2793
          %v3186 = vmax.f32 %v3058, %v2794
          %v3187 = vmax.f32 %v3059, %v2795
          %v3188 = vmax.f32 %v3060, %v2796
          %v3189 = vmax.f32 %v3061, %v2797
          %v3190 = vmax.f32 %v3062, %v2798
          %v3191 = vmax.f32 %v3063, %v2799
          %v3192 = vmax.f32 %v3064, %v2800
          %v3193 = vmax.f32 %v3065, %v2801
          %v3194 = vmax.f32 %v3066, %v2802
          %v3195 = vmax.f32 %v3067, %v2803
          %v3196 = vmax.f32 %v3068, %v2804
          %v3197 = vmax.f32 %v3069, %v2805
          %v3198 = vmax.f32 %v3070, %v2806
          %v3199 = vmax.f32 %v3071, %v2807
          %v3200 = vmax.f32 %v3072, %v2808
          %v3201 = vmax.f32 %v3073, %v2809
          %v3202 = vmax.f32 %v3074, %v2810
          %v3203 = vmax.f32 %v3075, %v2811
          %v3204 = vmax.f32 %v3076, %v2812
          %v3205 = vmax.f32 %v3077, %v2813
          %v3206 = vmax.f32 %v3078, %v2814
          %v3207 = vmax.f32 %v3079, %v2815
          %v3208 = vmax.f32 %v3080, %v2816
          %v3209 = vmax.f32 %v3081, %v2817
          %v3210 = vmax.f32 %v3082, %v2818
          %v3211 = vmax.f32 %v3083, %v2819
          %v3212 = vmax.f32 %v3084, %v2820
          %v3213 = vmax.f32 %v3085, %v2821
          %v3214 = vmax.f32 %v3086, %v2822
          %v3215 = vmax.f32 %v3087, %v2823
          %v3216 = vmax.f32 %v3088, %v2824
          %v3217 = vmax.f32 %v3089, %v2825
          %v3218 = vmax.f32 %v3090, %v2826
          %v3219 = vmax.f32 %v3091, %v2827
          %v3220 = vmax.f32 %v3092, %v2828
          %v3221 = vmax.f32 %v3093, %v2829
          %v3222 = vmax.f32 %v3094, %v2830
          %v3223 = vmax.f32 %v3095, %v2831
          %v3224 = vmax.f32 %v3096, %v2832
          %v3225 = vmax.f32 %v3097, %v2833
          %v3226 = vmax.f32 %v3098, %v2834
          %v3227 = vmax.f32 %v3099, %v2835
          %v3228 = vmax.f32 %v3100, %v2836
          %v3229 = vmax.f32 %v3101, %v2837
          %v3230 = vmax.f32 %v3102, %v2838
          %v3231 = vmax.f32 %v3103, %v2839
          %v3232 = vmax.f32 %v3104, %v2840
          %v3233 = vmax.f32 %v3105, %v2841
          %v3234 = vmax.f32 %v3106, %v2842
          %v3235 = vmax.f32 %v3107, %v2843
          %v3236 = vmax.f32 %v3108, %v2844
          %v3237 = vmax.f32 %v3109, %v2845
          %v3238 = vmax.f32 %v3110, %v2846
          %v3239 = vmax.f32 %v3111, %v2847
          %v3240 = vmax.f32 %v3112, %v2848
          %v3241 = vmax.f32 %v3113, %v2849
          %v3242 = vmax.f32 %v3114, %v2850
          %v3243 = vmax.f32 %v3115, %v2851
          %v3244 = vmax.f32 %v3116, %v2852
          %v3245 = vmax.f32 %v3117, %v2853
          %v3246 = vmax.f32 %v3118, %v2854
          %v3247 = vmax.f32 %v3119, %v2855
          %v3248 = vmax.f32 %v3120, %v2856
          %v3249 = vmax.f32 %v3121, %v2857
          %v3250 = vmax.f32 %v3122, %v2858
          %v3251 = vmax.f32 %v3123, %v2859
          %v3252 = vmax.f32 %v3124, %v2860
          %v3253 = vmax.f32 %v3125, %v2861
          %v3254 = vmax.f32 %v3126, %v2862
          %v3255 = vmax.f32 %v3127, %v2863
          %v3256 = vmax.f32 %v3128, %v2864
          %v3257 = vmax.f32 %v3129, %v2865
          %v3258 = vmax.f32 %v3130, %v2866
          %v3259 = vmax.f32 %v3131, %v2867
          %v3260 = vmax.f32 %v3132, %v2868
          %v3261 = vmax.f32 %v3133, %v2869
          %v3262 = vmax.f32 %v3134, %v2870
          %v3263 = vmax.f32 %v3135, %v2871
          %v3264 = vmax.f32 %v3136, %v2872
          %v3265 = vmax.f32 %v3137, %v2873
          %v3266 = vmax.f32 %v3138, %v2874
          %v3267 = vmax.f32 %v3139, %v2875
          %v3268 = vmax.f32 %v3140, %v2876
          %v3269 = vmax.f32 %v3141, %v2877
          %v3270 = vmax.f32 %v3142, %v2878
          %v3271 = vmax.f32 %v3143, %v2879
          %v3272 = vmax.f32 %v3144, %v2880
          %v3273 = vmax.f32 %v3145, %v2881
          %v3274 = vmax.f32 %v3146, %v2882
          %v3275 = vmax.f32 %v3147, %v2883
          %v3276 = vmax.f32 %v3148, %v2884
          %v3277 = vmax.f32 %v3149, %v2885
          %v3278 = vmax.f32 %v3150, %v2886
          %v3279 = vmax.f32 %v3151, %v2887
          %v3280 = vmax.f32 %v3152, %v2888
          %v3281 = vmax.f32 %v3153, %v2889
          %v3282 = vmax.f32 %v3154, %v2890
          %v3283 = vmax.f32 %v3155, %v2891
          %v3284 = vmax.f32 %v3156, %v2892
          %v3285 = vmax.f32 %v3157, %v2893
          %v3286 = vmax.f32 %v3158, %v2894
          %v3287 = vmax.f32 %v3159, %v2895
          %v3288 = vmax.f32 %v3160, %v2896
          %v3289 = vmax.f32 %v3161, %v2897
          %v3290 = vmax.f32 %v3162, %v2898
          %v3291 = vmax.f32 %v3163, %v2899
          %v3292 = vmax.f32 %v3164, %v2900
          %v3293 = vmax.f32 %v3165, %v2901
          %v3294 = vmax.f32 %v3166, %v2902
          %v3295 = vmax.f32 %v3167, %v2903
          %v3296 = vmax.f32 %v3168, %v2904
          %v3297 = vmax.f32 %v3169, %v2905
          %v3298 = vmax.f32 %v3170, %v2906
          %v3299 = vmax.f32 %v3171, %v2907
          %v3300 = vmax.f32 %v3172, %v2908
          %v3301 = vmax.f32 %v3173, %v2909
          %3302 = vst [vmem:[#allocation2] sm:$0xff] %v3174
          %3303 = vst [vmem:[#allocation2 + $0x8] sm:$0xff] %v3175
          %3304 = vst [vmem:[#allocation2 + $0x10] sm:$0xff] %v3176
          %3305 = vst [vmem:[#allocation2 + $0x18] sm:$0xff] %v3177
          %3306 = vst [vmem:[#allocation2 + $0x20] sm:$0xff] %v3178
          %3307 = vst [vmem:[#allocation2 + $0x28] sm:$0xff] %v3179
          %3308 = vst [vmem:[#allocation2 + $0x30] sm:$0xff] %v3180
          %3309 = vst [vmem:[#allocation2 + $0x38] sm:$0xff] %v3181
          %3310 = vst [vmem:[#allocation2 + $0x40] sm:$0xff] %v3182
          %3311 = vst [vmem:[#allocation2 + $0x48] sm:$0xff] %v3183
          %3312 = vst [vmem:[#allocation2 + $0x50] sm:$0xff] %v3184
          %3313 = vst [vmem:[#allocation2 + $0x58] sm:$0xff] %v3185
          %3314 = vst [vmem:[#allocation2 + $0x60] sm:$0xff] %v3186
          %3315 = vst [vmem:[#allocation2 + $0x68] sm:$0xff] %v3187
          %3316 = vst [vmem:[#allocation2 + $0x70] sm:$0xff] %v3188
          %3317 = vst [vmem:[#allocation2 + $0x78] sm:$0xff] %v3189
          %3318 = vst [vmem:[#allocation2 + $0x80] sm:$0xff] %v3190
          %3319 = vst [vmem:[#allocation2 + $0x88] sm:$0xff] %v3191
          %3320 = vst [vmem:[#allocation2 + $0x90] sm:$0xff] %v3192
          %3321 = vst [vmem:[#allocation2 + $0x98] sm:$0xff] %v3193
          %3322 = vst [vmem:[#allocation2 + $0xa0] sm:$0xff] %v3194
          %3323 = vst [vmem:[#allocation2 + $0xa8] sm:$0xff] %v3195
          %3324 = vst [vmem:[#allocation2 + $0xb0] sm:$0xff] %v3196
          %3325 = vst [vmem:[#allocation2 + $0xb8] sm:$0xff] %v3197
          %3326 = vst [vmem:[#allocation2 + $0xc0] sm:$0xff] %v3198
          %3327 = vst [vmem:[#allocation2 + $0xc8] sm:$0xff] %v3199
          %3328 = vst [vmem:[#allocation2 + $0xd0] sm:$0xff] %v3200
          %3329 = vst [vmem:[#allocation2 + $0xd8] sm:$0xff] %v3201
          %3330 = vst [vmem:[#allocation2 + $0xe0] sm:$0xff] %v3202
          %3331 = vst [vmem:[#allocation2 + $0xe8] sm:$0xff] %v3203
          %3332 = vst [vmem:[#allocation2 + $0xf0] sm:$0xff] %v3204
          %3333 = vst [vmem:[#allocation2 + $0xf8] sm:$0xff] %v3205
          %3334 = vst [vmem:[#allocation2 + $0x100] sm:$0xff] %v3206
          %3335 = vst [vmem:[#allocation2 + $0x108] sm:$0xff] %v3207
          %3336 = vst [vmem:[#allocation2 + $0x110] sm:$0xff] %v3208
          %3337 = vst [vmem:[#allocation2 + $0x118] sm:$0xff] %v3209
          %3338 = vst [vmem:[#allocation2 + $0x120] sm:$0xff] %v3210
          %3339 = vst [vmem:[#allocation2 + $0x128] sm:$0xff] %v3211
          %3340 = vst [vmem:[#allocation2 + $0x130] sm:$0xff] %v3212
          %3341 = vst [vmem:[#allocation2 + $0x138] sm:$0xff] %v3213
          %3342 = vst [vmem:[#allocation2 + $0x140] sm:$0xff] %v3214
          %3343 = vst [vmem:[#allocation2 + $0x148] sm:$0xff] %v3215
          %3344 = vst [vmem:[#allocation2 + $0x150] sm:$0xff] %v3216
          %3345 = vst [vmem:[#allocation2 + $0x158] sm:$0xff] %v3217
          %3346 = vst [vmem:[#allocation2 + $0x160] sm:$0xff] %v3218
          %3347 = vst [vmem:[#allocation2 + $0x168] sm:$0xff] %v3219
          %3348 = vst [vmem:[#allocation2 + $0x170] sm:$0xff] %v3220
          %3349 = vst [vmem:[#allocation2 + $0x178] sm:$0xff] %v3221
          %3350 = vst [vmem:[#allocation2 + $0x180] sm:$0xff] %v3222
          %3351 = vst [vmem:[#allocation2 + $0x188] sm:$0xff] %v3223
          %3352 = vst [vmem:[#allocation2 + $0x190] sm:$0xff] %v3224
          %3353 = vst [vmem:[#allocation2 + $0x198] sm:$0xff] %v3225
          %3354 = vst [vmem:[#allocation2 + $0x1a0] sm:$0xff] %v3226
          %3355 = vst [vmem:[#allocation2 + $0x1a8] sm:$0xff] %v3227
          %3356 = vst [vmem:[#allocation2 + $0x1b0] sm:$0xff] %v3228
          %3357 = vst [vmem:[#allocation2 + $0x1b8] sm:$0xff] %v3229
          %3358 = vst [vmem:[#allocation2 + $0x1c0] sm:$0xff] %v3230
          %3359 = vst [vmem:[#allocation2 + $0x1c8] sm:$0xff] %v3231
          %3360 = vst [vmem:[#allocation2 + $0x1d0] sm:$0xff] %v3232
          %3361 = vst [vmem:[#allocation2 + $0x1d8] sm:$0xff] %v3233
          %3362 = vst [vmem:[#allocation2 + $0x1e0] sm:$0xff] %v3234
          %3363 = vst [vmem:[#allocation2 + $0x1e8] sm:$0xff] %v3235
          %3364 = vst [vmem:[#allocation2 + $0x1f0] sm:$0xff] %v3236
          %3365 = vst [vmem:[#allocation2 + $0x1f8] sm:$0xff] %v3237
          %3366 = vst [vmem:[#allocation2 + $0x200] sm:$0xff] %v3238
          %3367 = vst [vmem:[#allocation2 + $0x208] sm:$0xff] %v3239
          %3368 = vst [vmem:[#allocation2 + $0x210] sm:$0xff] %v3240
          %3369 = vst [vmem:[#allocation2 + $0x218] sm:$0xff] %v3241
          %3370 = vst [vmem:[#allocation2 + $0x220] sm:$0xff] %v3242
          %3371 = vst [vmem:[#allocation2 + $0x228] sm:$0xff] %v3243
          %3372 = vst [vmem:[#allocation2 + $0x230] sm:$0xff] %v3244
          %3373 = vst [vmem:[#allocation2 + $0x238] sm:$0xff] %v3245
          %3374 = vst [vmem:[#allocation2 + $0x240] sm:$0xff] %v3246
          %3375 = vst [vmem:[#allocation2 + $0x248] sm:$0xff] %v3247
          %3376 = vst [vmem:[#allocation2 + $0x250] sm:$0xff] %v3248
          %3377 = vst [vmem:[#allocation2 + $0x258] sm:$0xff] %v3249
          %3378 = vst [vmem:[#allocation2 + $0x260] sm:$0xff] %v3250
          %3379 = vst [vmem:[#allocation2 + $0x268] sm:$0xff] %v3251
          %3380 = vst [vmem:[#allocation2 + $0x270] sm:$0xff] %v3252
          %3381 = vst [vmem:[#allocation2 + $0x278] sm:$0xff] %v3253
          %3382 = vst [vmem:[#allocation2 + $0x280] sm:$0xff] %v3254
          %3383 = vst [vmem:[#allocation2 + $0x288] sm:$0xff] %v3255
          %3384 = vst [vmem:[#allocation2 + $0x290] sm:$0xff] %v3256
          %3385 = vst [vmem:[#allocation2 + $0x298] sm:$0xff] %v3257
          %3386 = vst [vmem:[#allocation2 + $0x2a0] sm:$0xff] %v3258
          %3387 = vst [vmem:[#allocation2 + $0x2a8] sm:$0xff] %v3259
          %3388 = vst [vmem:[#allocation2 + $0x2b0] sm:$0xff] %v3260
          %3389 = vst [vmem:[#allocation2 + $0x2b8] sm:$0xff] %v3261
          %3390 = vst [vmem:[#allocation2 + $0x2c0] sm:$0xff] %v3262
          %3391 = vst [vmem:[#allocation2 + $0x2c8] sm:$0xff] %v3263
          %3392 = vst [vmem:[#allocation2 + $0x2d0] sm:$0xff] %v3264
          %3393 = vst [vmem:[#allocation2 + $0x2d8] sm:$0xff] %v3265
          %3394 = vst [vmem:[#allocation2 + $0x2e0] sm:$0xff] %v3266
          %3395 = vst [vmem:[#allocation2 + $0x2e8] sm:$0xff] %v3267
          %3396 = vst [vmem:[#allocation2 + $0x2f0] sm:$0xff] %v3268
          %3397 = vst [vmem:[#allocation2 + $0x2f8] sm:$0xff] %v3269
          %3398 = vst [vmem:[#allocation2 + $0x300] sm:$0xff] %v3270
          %3399 = vst [vmem:[#allocation2 + $0x308] sm:$0xff] %v3271
          %3400 = vst [vmem:[#allocation2 + $0x310] sm:$0xff] %v3272
          %3401 = vst [vmem:[#allocation2 + $0x318] sm:$0xff] %v3273
          %3402 = vst [vmem:[#allocation2 + $0x320] sm:$0xff] %v3274
          %3403 = vst [vmem:[#allocation2 + $0x328] sm:$0xff] %v3275
          %3404 = vst [vmem:[#allocation2 + $0x330] sm:$0xff] %v3276
          %3405 = vst [vmem:[#allocation2 + $0x338] sm:$0xff] %v3277
          %3406 = vst [vmem:[#allocation2 + $0x340] sm:$0xff] %v3278
          %3407 = vst [vmem:[#allocation2 + $0x348] sm:$0xff] %v3279
          %3408 = vst [vmem:[#allocation2 + $0x350] sm:$0xff] %v3280
          %3409 = vst [vmem:[#allocation2 + $0x358] sm:$0xff] %v3281
          %3410 = vst [vmem:[#allocation2 + $0x360] sm:$0xff] %v3282
          %3411 = vst [vmem:[#allocation2 + $0x368] sm:$0xff] %v3283
          %3412 = vst [vmem:[#allocation2 + $0x370] sm:$0xff] %v3284
          %3413 = vst [vmem:[#allocation2 + $0x378] sm:$0xff] %v3285
          %3414 = vst [vmem:[#allocation2 + $0x380] sm:$0xff] %v3286
          %3415 = vst [vmem:[#allocation2 + $0x388] sm:$0xff] %v3287
          %3416 = vst [vmem:[#allocation2 + $0x390] sm:$0xff] %v3288
          %3417 = vst [vmem:[#allocation2 + $0x398] sm:$0xff] %v3289
          %3418 = vst [vmem:[#allocation2 + $0x3a0] sm:$0xff] %v3290
          %3419 = vst [vmem:[#allocation2 + $0x3a8] sm:$0xff] %v3291
          %3420 = vst [vmem:[#allocation2 + $0x3b0] sm:$0xff] %v3292
          %3421 = vst [vmem:[#allocation2 + $0x3b8] sm:$0xff] %v3293
          %3422 = vst [vmem:[#allocation2 + $0x3c0] sm:$0xff] %v3294
          %3423 = vst [vmem:[#allocation2 + $0x3c8] sm:$0xff] %v3295
          %3424 = vst [vmem:[#allocation2 + $0x3d0] sm:$0xff] %v3296
          %3425 = vst [vmem:[#allocation2 + $0x3d8] sm:$0xff] %v3297
          %3426 = vst [vmem:[#allocation2 + $0x3e0] sm:$0xff] %v3298
          %3427 = vst [vmem:[#allocation2 + $0x3e8] sm:$0xff] %v3299
          %3428 = vst [vmem:[#allocation2 + $0x3f0] sm:$0xff] %v3300
          %3429 = vst [vmem:[#allocation2 + $0x3f8] sm:$0xff] %v3301
        $region88: #{tpu_custom_call.1} parent=71 // pred_fallthru
          _
        %p3430 = scmp.eq.s32.totalorder %s36, 2
        // Predicated region
        $region89: #{tpu_custom_call.1} parent=71 // pred_check
          %p3431 = pneg %p3430
        $region90: #{tpu_custom_call.1} parent=71 // pred_check_branch
          %3433 = sbr.rel (%p3431) target = $region92
        $region91: #{tpu_custom_call.1} parent=71 // pred_region
          %v3434 = vld [vmem:[#allocation2] sm:$0xff]
          %v3435 = vld [vmem:[#allocation2 + $0x8] sm:$0xff]
          %v3436 = vld [vmem:[#allocation2 + $0x10] sm:$0xff]
          %v3437 = vld [vmem:[#allocation2 + $0x18] sm:$0xff]
          %v3438 = vld [vmem:[#allocation2 + $0x20] sm:$0xff]
          %v3439 = vld [vmem:[#allocation2 + $0x28] sm:$0xff]
          %v3440 = vld [vmem:[#allocation2 + $0x30] sm:$0xff]
          %v3441 = vld [vmem:[#allocation2 + $0x38] sm:$0xff]
          %v3442 = vld [vmem:[#allocation2 + $0x40] sm:$0xff]
          %v3443 = vld [vmem:[#allocation2 + $0x48] sm:$0xff]
          %v3444 = vld [vmem:[#allocation2 + $0x50] sm:$0xff]
          %v3445 = vld [vmem:[#allocation2 + $0x58] sm:$0xff]
          %v3446 = vld [vmem:[#allocation2 + $0x60] sm:$0xff]
          %v3447 = vld [vmem:[#allocation2 + $0x68] sm:$0xff]
          %v3448 = vld [vmem:[#allocation2 + $0x70] sm:$0xff]
          %v3449 = vld [vmem:[#allocation2 + $0x78] sm:$0xff]
          %v3450 = vld [vmem:[#allocation2 + $0x80] sm:$0xff]
          %v3451 = vld [vmem:[#allocation2 + $0x88] sm:$0xff]
          %v3452 = vld [vmem:[#allocation2 + $0x90] sm:$0xff]
          %v3453 = vld [vmem:[#allocation2 + $0x98] sm:$0xff]
          %v3454 = vld [vmem:[#allocation2 + $0xa0] sm:$0xff]
          %v3455 = vld [vmem:[#allocation2 + $0xa8] sm:$0xff]
          %v3456 = vld [vmem:[#allocation2 + $0xb0] sm:$0xff]
          %v3457 = vld [vmem:[#allocation2 + $0xb8] sm:$0xff]
          %v3458 = vld [vmem:[#allocation2 + $0xc0] sm:$0xff]
          %v3459 = vld [vmem:[#allocation2 + $0xc8] sm:$0xff]
          %v3460 = vld [vmem:[#allocation2 + $0xd0] sm:$0xff]
          %v3461 = vld [vmem:[#allocation2 + $0xd8] sm:$0xff]
          %v3462 = vld [vmem:[#allocation2 + $0xe0] sm:$0xff]
          %v3463 = vld [vmem:[#allocation2 + $0xe8] sm:$0xff]
          %v3464 = vld [vmem:[#allocation2 + $0xf0] sm:$0xff]
          %v3465 = vld [vmem:[#allocation2 + $0xf8] sm:$0xff]
          %v3466 = vld [vmem:[#allocation2 + $0x100] sm:$0xff]
          %v3467 = vld [vmem:[#allocation2 + $0x108] sm:$0xff]
          %v3468 = vld [vmem:[#allocation2 + $0x110] sm:$0xff]
          %v3469 = vld [vmem:[#allocation2 + $0x118] sm:$0xff]
          %v3470 = vld [vmem:[#allocation2 + $0x120] sm:$0xff]
          %v3471 = vld [vmem:[#allocation2 + $0x128] sm:$0xff]
          %v3472 = vld [vmem:[#allocation2 + $0x130] sm:$0xff]
          %v3473 = vld [vmem:[#allocation2 + $0x138] sm:$0xff]
          %v3474 = vld [vmem:[#allocation2 + $0x140] sm:$0xff]
          %v3475 = vld [vmem:[#allocation2 + $0x148] sm:$0xff]
          %v3476 = vld [vmem:[#allocation2 + $0x150] sm:$0xff]
          %v3477 = vld [vmem:[#allocation2 + $0x158] sm:$0xff]
          %v3478 = vld [vmem:[#allocation2 + $0x160] sm:$0xff]
          %v3479 = vld [vmem:[#allocation2 + $0x168] sm:$0xff]
          %v3480 = vld [vmem:[#allocation2 + $0x170] sm:$0xff]
          %v3481 = vld [vmem:[#allocation2 + $0x178] sm:$0xff]
          %v3482 = vld [vmem:[#allocation2 + $0x180] sm:$0xff]
          %v3483 = vld [vmem:[#allocation2 + $0x188] sm:$0xff]
          %v3484 = vld [vmem:[#allocation2 + $0x190] sm:$0xff]
          %v3485 = vld [vmem:[#allocation2 + $0x198] sm:$0xff]
          %v3486 = vld [vmem:[#allocation2 + $0x1a0] sm:$0xff]
          %v3487 = vld [vmem:[#allocation2 + $0x1a8] sm:$0xff]
          %v3488 = vld [vmem:[#allocation2 + $0x1b0] sm:$0xff]
          %v3489 = vld [vmem:[#allocation2 + $0x1b8] sm:$0xff]
          %v3490 = vld [vmem:[#allocation2 + $0x1c0] sm:$0xff]
          %v3491 = vld [vmem:[#allocation2 + $0x1c8] sm:$0xff]
          %v3492 = vld [vmem:[#allocation2 + $0x1d0] sm:$0xff]
          %v3493 = vld [vmem:[#allocation2 + $0x1d8] sm:$0xff]
          %v3494 = vld [vmem:[#allocation2 + $0x1e0] sm:$0xff]
          %v3495 = vld [vmem:[#allocation2 + $0x1e8] sm:$0xff]
          %v3496 = vld [vmem:[#allocation2 + $0x1f0] sm:$0xff]
          %v3497 = vld [vmem:[#allocation2 + $0x1f8] sm:$0xff]
          %v3498 = vld [vmem:[#allocation2 + $0x200] sm:$0xff]
          %v3499 = vld [vmem:[#allocation2 + $0x208] sm:$0xff]
          %v3500 = vld [vmem:[#allocation2 + $0x210] sm:$0xff]
          %v3501 = vld [vmem:[#allocation2 + $0x218] sm:$0xff]
          %v3502 = vld [vmem:[#allocation2 + $0x220] sm:$0xff]
          %v3503 = vld [vmem:[#allocation2 + $0x228] sm:$0xff]
          %v3504 = vld [vmem:[#allocation2 + $0x230] sm:$0xff]
          %v3505 = vld [vmem:[#allocation2 + $0x238] sm:$0xff]
          %v3506 = vld [vmem:[#allocation2 + $0x240] sm:$0xff]
          %v3507 = vld [vmem:[#allocation2 + $0x248] sm:$0xff]
          %v3508 = vld [vmem:[#allocation2 + $0x250] sm:$0xff]
          %v3509 = vld [vmem:[#allocation2 + $0x258] sm:$0xff]
          %v3510 = vld [vmem:[#allocation2 + $0x260] sm:$0xff]
          %v3511 = vld [vmem:[#allocation2 + $0x268] sm:$0xff]
          %v3512 = vld [vmem:[#allocation2 + $0x270] sm:$0xff]
          %v3513 = vld [vmem:[#allocation2 + $0x278] sm:$0xff]
          %v3514 = vld [vmem:[#allocation2 + $0x280] sm:$0xff]
          %v3515 = vld [vmem:[#allocation2 + $0x288] sm:$0xff]
          %v3516 = vld [vmem:[#allocation2 + $0x290] sm:$0xff]
          %v3517 = vld [vmem:[#allocation2 + $0x298] sm:$0xff]
          %v3518 = vld [vmem:[#allocation2 + $0x2a0] sm:$0xff]
          %v3519 = vld [vmem:[#allocation2 + $0x2a8] sm:$0xff]
          %v3520 = vld [vmem:[#allocation2 + $0x2b0] sm:$0xff]
          %v3521 = vld [vmem:[#allocation2 + $0x2b8] sm:$0xff]
          %v3522 = vld [vmem:[#allocation2 + $0x2c0] sm:$0xff]
          %v3523 = vld [vmem:[#allocation2 + $0x2c8] sm:$0xff]
          %v3524 = vld [vmem:[#allocation2 + $0x2d0] sm:$0xff]
          %v3525 = vld [vmem:[#allocation2 + $0x2d8] sm:$0xff]
          %v3526 = vld [vmem:[#allocation2 + $0x2e0] sm:$0xff]
          %v3527 = vld [vmem:[#allocation2 + $0x2e8] sm:$0xff]
          %v3528 = vld [vmem:[#allocation2 + $0x2f0] sm:$0xff]
          %v3529 = vld [vmem:[#allocation2 + $0x2f8] sm:$0xff]
          %v3530 = vld [vmem:[#allocation2 + $0x300] sm:$0xff]
          %v3531 = vld [vmem:[#allocation2 + $0x308] sm:$0xff]
          %v3532 = vld [vmem:[#allocation2 + $0x310] sm:$0xff]
          %v3533 = vld [vmem:[#allocation2 + $0x318] sm:$0xff]
          %v3534 = vld [vmem:[#allocation2 + $0x320] sm:$0xff]
          %v3535 = vld [vmem:[#allocation2 + $0x328] sm:$0xff]
          %v3536 = vld [vmem:[#allocation2 + $0x330] sm:$0xff]
          %v3537 = vld [vmem:[#allocation2 + $0x338] sm:$0xff]
          %v3538 = vld [vmem:[#allocation2 + $0x340] sm:$0xff]
          %v3539 = vld [vmem:[#allocation2 + $0x348] sm:$0xff]
          %v3540 = vld [vmem:[#allocation2 + $0x350] sm:$0xff]
          %v3541 = vld [vmem:[#allocation2 + $0x358] sm:$0xff]
          %v3542 = vld [vmem:[#allocation2 + $0x360] sm:$0xff]
          %v3543 = vld [vmem:[#allocation2 + $0x368] sm:$0xff]
          %v3544 = vld [vmem:[#allocation2 + $0x370] sm:$0xff]
          %v3545 = vld [vmem:[#allocation2 + $0x378] sm:$0xff]
          %v3546 = vld [vmem:[#allocation2 + $0x380] sm:$0xff]
          %v3547 = vld [vmem:[#allocation2 + $0x388] sm:$0xff]
          %v3548 = vld [vmem:[#allocation2 + $0x390] sm:$0xff]
          %v3549 = vld [vmem:[#allocation2 + $0x398] sm:$0xff]
          %v3550 = vld [vmem:[#allocation2 + $0x3a0] sm:$0xff]
          %v3551 = vld [vmem:[#allocation2 + $0x3a8] sm:$0xff]
          %v3552 = vld [vmem:[#allocation2 + $0x3b0] sm:$0xff]
          %v3553 = vld [vmem:[#allocation2 + $0x3b8] sm:$0xff]
          %v3554 = vld [vmem:[#allocation2 + $0x3c0] sm:$0xff]
          %v3555 = vld [vmem:[#allocation2 + $0x3c8] sm:$0xff]
          %v3556 = vld [vmem:[#allocation2 + $0x3d0] sm:$0xff]
          %v3557 = vld [vmem:[#allocation2 + $0x3d8] sm:$0xff]
          %v3558 = vld [vmem:[#allocation2 + $0x3e0] sm:$0xff]
          %v3559 = vld [vmem:[#allocation2 + $0x3e8] sm:$0xff]
          %v3560 = vld [vmem:[#allocation2 + $0x3f0] sm:$0xff]
          %v3561 = vld [vmem:[#allocation2 + $0x3f8] sm:$0xff]
          %3562 = vxpose.xlu0.b32.start [1/16] %v3434, 128
          %3563 = vxpose.xlu0.b32.cont [2/16] %v3435, 128
          %3564 = vxpose.xlu0.b32.cont [3/16] %v3436, 128
          %3565 = vxpose.xlu0.b32.cont [4/16] %v3437, 128
          %3566 = vxpose.xlu0.b32.cont [5/16] %v3438, 128
          %3567 = vxpose.xlu0.b32.cont [6/16] %v3439, 128
          %3568 = vxpose.xlu0.b32.cont [7/16] %v3440, 128
          %3569 = vxpose.xlu0.b32.cont [8/16] %v3441, 128
          %3570 = vxpose.xlu0.b32.cont [9/16] %v3442, 128
          %3571 = vxpose.xlu0.b32.cont [10/16] %v3443, 128
          %3572 = vxpose.xlu0.b32.cont [11/16] %v3444, 128
          %3573 = vxpose.xlu0.b32.cont [12/16] %v3445, 128
          %3574 = vxpose.xlu0.b32.cont [13/16] %v3446, 128
          %3575 = vxpose.xlu0.b32.cont [14/16] %v3447, 128
          %3576 = vxpose.xlu0.b32.cont [15/16] %v3448, 128
          %3577 = vxpose.xlu0.b32.end [16/16] %v3449, 128
          %v3578 = vpop.trf.xlu0
          %v3579 = vpop.trf.xlu0
          %v3580 = vpop.trf.xlu0
          %v3581 = vpop.trf.xlu0
          %v3582 = vpop.trf.xlu0
          %v3583 = vpop.trf.xlu0
          %v3584 = vpop.trf.xlu0
          %v3585 = vpop.trf.xlu0
          %v3586 = vpop.trf.xlu0
          %v3587 = vpop.trf.xlu0
          %v3588 = vpop.trf.xlu0
          %v3589 = vpop.trf.xlu0
          %v3590 = vpop.trf.xlu0
          %v3591 = vpop.trf.xlu0
          %v3592 = vpop.trf.xlu0
          %v3593 = vpop.trf.xlu0
          %3594 = vxpose.xlu0.b32.start [1/16] %v3450, 128
          %3595 = vxpose.xlu0.b32.cont [2/16] %v3451, 128
          %3596 = vxpose.xlu0.b32.cont [3/16] %v3452, 128
          %3597 = vxpose.xlu0.b32.cont [4/16] %v3453, 128
          %3598 = vxpose.xlu0.b32.cont [5/16] %v3454, 128
          %3599 = vxpose.xlu0.b32.cont [6/16] %v3455, 128
          %3600 = vxpose.xlu0.b32.cont [7/16] %v3456, 128
          %3601 = vxpose.xlu0.b32.cont [8/16] %v3457, 128
          %3602 = vxpose.xlu0.b32.cont [9/16] %v3458, 128
          %3603 = vxpose.xlu0.b32.cont [10/16] %v3459, 128
          %3604 = vxpose.xlu0.b32.cont [11/16] %v3460, 128
          %3605 = vxpose.xlu0.b32.cont [12/16] %v3461, 128
          %3606 = vxpose.xlu0.b32.cont [13/16] %v3462, 128
          %3607 = vxpose.xlu0.b32.cont [14/16] %v3463, 128
          %3608 = vxpose.xlu0.b32.cont [15/16] %v3464, 128
          %3609 = vxpose.xlu0.b32.end [16/16] %v3465, 128
          %v3610 = vpop.trf.xlu0
          %v3611 = vpop.trf.xlu0
          %v3612 = vpop.trf.xlu0
          %v3613 = vpop.trf.xlu0
          %v3614 = vpop.trf.xlu0
          %v3615 = vpop.trf.xlu0
          %v3616 = vpop.trf.xlu0
          %v3617 = vpop.trf.xlu0
          %v3618 = vpop.trf.xlu0
          %v3619 = vpop.trf.xlu0
          %v3620 = vpop.trf.xlu0
          %v3621 = vpop.trf.xlu0
          %v3622 = vpop.trf.xlu0
          %v3623 = vpop.trf.xlu0
          %v3624 = vpop.trf.xlu0
          %v3625 = vpop.trf.xlu0
          %3626 = vxpose.xlu0.b32.start [1/16] %v3466, 128
          %3627 = vxpose.xlu0.b32.cont [2/16] %v3467, 128
          %3628 = vxpose.xlu0.b32.cont [3/16] %v3468, 128
          %3629 = vxpose.xlu0.b32.cont [4/16] %v3469, 128
          %3630 = vxpose.xlu0.b32.cont [5/16] %v3470, 128
          %3631 = vxpose.xlu0.b32.cont [6/16] %v3471, 128
          %3632 = vxpose.xlu0.b32.cont [7/16] %v3472, 128
          %3633 = vxpose.xlu0.b32.cont [8/16] %v3473, 128
          %3634 = vxpose.xlu0.b32.cont [9/16] %v3474, 128
          %3635 = vxpose.xlu0.b32.cont [10/16] %v3475, 128
          %3636 = vxpose.xlu0.b32.cont [11/16] %v3476, 128
          %3637 = vxpose.xlu0.b32.cont [12/16] %v3477, 128
          %3638 = vxpose.xlu0.b32.cont [13/16] %v3478, 128
          %3639 = vxpose.xlu0.b32.cont [14/16] %v3479, 128
          %3640 = vxpose.xlu0.b32.cont [15/16] %v3480, 128
          %3641 = vxpose.xlu0.b32.end [16/16] %v3481, 128
          %v3642 = vpop.trf.xlu0
          %v3643 = vpop.trf.xlu0
          %v3644 = vpop.trf.xlu0
          %v3645 = vpop.trf.xlu0
          %v3646 = vpop.trf.xlu0
          %v3647 = vpop.trf.xlu0
          %v3648 = vpop.trf.xlu0
          %v3649 = vpop.trf.xlu0
          %v3650 = vpop.trf.xlu0
          %v3651 = vpop.trf.xlu0
          %v3652 = vpop.trf.xlu0
          %v3653 = vpop.trf.xlu0
          %v3654 = vpop.trf.xlu0
          %v3655 = vpop.trf.xlu0
          %v3656 = vpop.trf.xlu0
          %v3657 = vpop.trf.xlu0
          %3658 = vxpose.xlu0.b32.start [1/16] %v3482, 128
          %3659 = vxpose.xlu0.b32.cont [2/16] %v3483, 128
          %3660 = vxpose.xlu0.b32.cont [3/16] %v3484, 128
          %3661 = vxpose.xlu0.b32.cont [4/16] %v3485, 128
          %3662 = vxpose.xlu0.b32.cont [5/16] %v3486, 128
          %3663 = vxpose.xlu0.b32.cont [6/16] %v3487, 128
          %3664 = vxpose.xlu0.b32.cont [7/16] %v3488, 128
          %3665 = vxpose.xlu0.b32.cont [8/16] %v3489, 128
          %3666 = vxpose.xlu0.b32.cont [9/16] %v3490, 128
          %3667 = vxpose.xlu0.b32.cont [10/16] %v3491, 128
          %3668 = vxpose.xlu0.b32.cont [11/16] %v3492, 128
          %3669 = vxpose.xlu0.b32.cont [12/16] %v3493, 128
          %3670 = vxpose.xlu0.b32.cont [13/16] %v3494, 128
          %3671 = vxpose.xlu0.b32.cont [14/16] %v3495, 128
          %3672 = vxpose.xlu0.b32.cont [15/16] %v3496, 128
          %3673 = vxpose.xlu0.b32.end [16/16] %v3497, 128
          %v3674 = vpop.trf.xlu0
          %v3675 = vpop.trf.xlu0
          %v3676 = vpop.trf.xlu0
          %v3677 = vpop.trf.xlu0
          %v3678 = vpop.trf.xlu0
          %v3679 = vpop.trf.xlu0
          %v3680 = vpop.trf.xlu0
          %v3681 = vpop.trf.xlu0
          %v3682 = vpop.trf.xlu0
          %v3683 = vpop.trf.xlu0
          %v3684 = vpop.trf.xlu0
          %v3685 = vpop.trf.xlu0
          %v3686 = vpop.trf.xlu0
          %v3687 = vpop.trf.xlu0
          %v3688 = vpop.trf.xlu0
          %v3689 = vpop.trf.xlu0
          %3690 = vxpose.xlu0.b32.start [1/16] %v3498, 128
          %3691 = vxpose.xlu0.b32.cont [2/16] %v3499, 128
          %3692 = vxpose.xlu0.b32.cont [3/16] %v3500, 128
          %3693 = vxpose.xlu0.b32.cont [4/16] %v3501, 128
          %3694 = vxpose.xlu0.b32.cont [5/16] %v3502, 128
          %3695 = vxpose.xlu0.b32.cont [6/16] %v3503, 128
          %3696 = vxpose.xlu0.b32.cont [7/16] %v3504, 128
          %3697 = vxpose.xlu0.b32.cont [8/16] %v3505, 128
          %3698 = vxpose.xlu0.b32.cont [9/16] %v3506, 128
          %3699 = vxpose.xlu0.b32.cont [10/16] %v3507, 128
          %3700 = vxpose.xlu0.b32.cont [11/16] %v3508, 128
          %3701 = vxpose.xlu0.b32.cont [12/16] %v3509, 128
          %3702 = vxpose.xlu0.b32.cont [13/16] %v3510, 128
          %3703 = vxpose.xlu0.b32.cont [14/16] %v3511, 128
          %3704 = vxpose.xlu0.b32.cont [15/16] %v3512, 128
          %3705 = vxpose.xlu0.b32.end [16/16] %v3513, 128
          %v3706 = vpop.trf.xlu0
          %v3707 = vpop.trf.xlu0
          %v3708 = vpop.trf.xlu0
          %v3709 = vpop.trf.xlu0
          %v3710 = vpop.trf.xlu0
          %v3711 = vpop.trf.xlu0
          %v3712 = vpop.trf.xlu0
          %v3713 = vpop.trf.xlu0
          %v3714 = vpop.trf.xlu0
          %v3715 = vpop.trf.xlu0
          %v3716 = vpop.trf.xlu0
          %v3717 = vpop.trf.xlu0
          %v3718 = vpop.trf.xlu0
          %v3719 = vpop.trf.xlu0
          %v3720 = vpop.trf.xlu0
          %v3721 = vpop.trf.xlu0
          %3722 = vxpose.xlu0.b32.start [1/16] %v3514, 128
          %3723 = vxpose.xlu0.b32.cont [2/16] %v3515, 128
          %3724 = vxpose.xlu0.b32.cont [3/16] %v3516, 128
          %3725 = vxpose.xlu0.b32.cont [4/16] %v3517, 128
          %3726 = vxpose.xlu0.b32.cont [5/16] %v3518, 128
          %3727 = vxpose.xlu0.b32.cont [6/16] %v3519, 128
          %3728 = vxpose.xlu0.b32.cont [7/16] %v3520, 128
          %3729 = vxpose.xlu0.b32.cont [8/16] %v3521, 128
          %3730 = vxpose.xlu0.b32.cont [9/16] %v3522, 128
          %3731 = vxpose.xlu0.b32.cont [10/16] %v3523, 128
          %3732 = vxpose.xlu0.b32.cont [11/16] %v3524, 128
          %3733 = vxpose.xlu0.b32.cont [12/16] %v3525, 128
          %3734 = vxpose.xlu0.b32.cont [13/16] %v3526, 128
          %3735 = vxpose.xlu0.b32.cont [14/16] %v3527, 128
          %3736 = vxpose.xlu0.b32.cont [15/16] %v3528, 128
          %3737 = vxpose.xlu0.b32.end [16/16] %v3529, 128
          %v3738 = vpop.trf.xlu0
          %v3739 = vpop.trf.xlu0
          %v3740 = vpop.trf.xlu0
          %v3741 = vpop.trf.xlu0
          %v3742 = vpop.trf.xlu0
          %v3743 = vpop.trf.xlu0
          %v3744 = vpop.trf.xlu0
          %v3745 = vpop.trf.xlu0
          %v3746 = vpop.trf.xlu0
          %v3747 = vpop.trf.xlu0
          %v3748 = vpop.trf.xlu0
          %v3749 = vpop.trf.xlu0
          %v3750 = vpop.trf.xlu0
          %v3751 = vpop.trf.xlu0
          %v3752 = vpop.trf.xlu0
          %v3753 = vpop.trf.xlu0
          %3754 = vxpose.xlu0.b32.start [1/16] %v3530, 128
          %3755 = vxpose.xlu0.b32.cont [2/16] %v3531, 128
          %3756 = vxpose.xlu0.b32.cont [3/16] %v3532, 128
          %3757 = vxpose.xlu0.b32.cont [4/16] %v3533, 128
          %3758 = vxpose.xlu0.b32.cont [5/16] %v3534, 128
          %3759 = vxpose.xlu0.b32.cont [6/16] %v3535, 128
          %3760 = vxpose.xlu0.b32.cont [7/16] %v3536, 128
          %3761 = vxpose.xlu0.b32.cont [8/16] %v3537, 128
          %3762 = vxpose.xlu0.b32.cont [9/16] %v3538, 128
          %3763 = vxpose.xlu0.b32.cont [10/16] %v3539, 128
          %3764 = vxpose.xlu0.b32.cont [11/16] %v3540, 128
          %3765 = vxpose.xlu0.b32.cont [12/16] %v3541, 128
          %3766 = vxpose.xlu0.b32.cont [13/16] %v3542, 128
          %3767 = vxpose.xlu0.b32.cont [14/16] %v3543, 128
          %3768 = vxpose.xlu0.b32.cont [15/16] %v3544, 128
          %3769 = vxpose.xlu0.b32.end [16/16] %v3545, 128
          %v3770 = vpop.trf.xlu0
          %v3771 = vpop.trf.xlu0
          %v3772 = vpop.trf.xlu0
          %v3773 = vpop.trf.xlu0
          %v3774 = vpop.trf.xlu0
          %v3775 = vpop.trf.xlu0
          %v3776 = vpop.trf.xlu0
          %v3777 = vpop.trf.xlu0
          %v3778 = vpop.trf.xlu0
          %v3779 = vpop.trf.xlu0
          %v3780 = vpop.trf.xlu0
          %v3781 = vpop.trf.xlu0
          %v3782 = vpop.trf.xlu0
          %v3783 = vpop.trf.xlu0
          %v3784 = vpop.trf.xlu0
          %v3785 = vpop.trf.xlu0
          %3786 = vxpose.xlu0.b32.start [1/16] %v3546, 128
          %3787 = vxpose.xlu0.b32.cont [2/16] %v3547, 128
          %3788 = vxpose.xlu0.b32.cont [3/16] %v3548, 128
          %3789 = vxpose.xlu0.b32.cont [4/16] %v3549, 128
          %3790 = vxpose.xlu0.b32.cont [5/16] %v3550, 128
          %3791 = vxpose.xlu0.b32.cont [6/16] %v3551, 128
          %3792 = vxpose.xlu0.b32.cont [7/16] %v3552, 128
          %3793 = vxpose.xlu0.b32.cont [8/16] %v3553, 128
          %3794 = vxpose.xlu0.b32.cont [9/16] %v3554, 128
          %3795 = vxpose.xlu0.b32.cont [10/16] %v3555, 128
          %3796 = vxpose.xlu0.b32.cont [11/16] %v3556, 128
          %3797 = vxpose.xlu0.b32.cont [12/16] %v3557, 128
          %3798 = vxpose.xlu0.b32.cont [13/16] %v3558, 128
          %3799 = vxpose.xlu0.b32.cont [14/16] %v3559, 128
          %3800 = vxpose.xlu0.b32.cont [15/16] %v3560, 128
          %3801 = vxpose.xlu0.b32.end [16/16] %v3561, 128
          %v3802 = vpop.trf.xlu0
          %v3803 = vpop.trf.xlu0
          %v3804 = vpop.trf.xlu0
          %v3805 = vpop.trf.xlu0
          %v3806 = vpop.trf.xlu0
          %v3807 = vpop.trf.xlu0
          %v3808 = vpop.trf.xlu0
          %v3809 = vpop.trf.xlu0
          %v3810 = vpop.trf.xlu0
          %v3811 = vpop.trf.xlu0
          %v3812 = vpop.trf.xlu0
          %v3813 = vpop.trf.xlu0
          %v3814 = vpop.trf.xlu0
          %v3815 = vpop.trf.xlu0
          %v3816 = vpop.trf.xlu0
          %v3817 = vpop.trf.xlu0
          %v3818 = vmax.f32 %v3578, %v3579
          %v3819 = vmax.f32 %v3818, %v3580
          %v3820 = vmax.f32 %v3819, %v3581
          %v3821 = vmax.f32 %v3820, %v3582
          %v3822 = vmax.f32 %v3821, %v3583
          %v3823 = vmax.f32 %v3822, %v3584
          %v3824 = vmax.f32 %v3823, %v3585
          %v3825 = vmax.f32 %v3824, %v3586
          %v3826 = vmax.f32 %v3825, %v3587
          %v3827 = vmax.f32 %v3826, %v3588
          %v3828 = vmax.f32 %v3827, %v3589
          %v3829 = vmax.f32 %v3828, %v3590
          %v3830 = vmax.f32 %v3829, %v3591
          %v3831 = vmax.f32 %v3830, %v3592
          %v3832 = vmax.f32 %v3831, %v3593
          %v3833 = vrot.slane %v3832, 4
          %v3834 = vmax.f32 %v3832, %v3833
          %v3835 = vrot.slane %v3834, 2
          %v3836 = vmax.f32 %v3834, %v3835
          %v3837 = vrot.slane %v3836, 1
          %v3838 = vmax.f32 %v3836, %v3837
          %v3839 = vmax.f32 %v3610, %v3611
          %v3840 = vmax.f32 %v3839, %v3612
          %v3841 = vmax.f32 %v3840, %v3613
          %v3842 = vmax.f32 %v3841, %v3614
          %v3843 = vmax.f32 %v3842, %v3615
          %v3844 = vmax.f32 %v3843, %v3616
          %v3845 = vmax.f32 %v3844, %v3617
          %v3846 = vmax.f32 %v3845, %v3618
          %v3847 = vmax.f32 %v3846, %v3619
          %v3848 = vmax.f32 %v3847, %v3620
          %v3849 = vmax.f32 %v3848, %v3621
          %v3850 = vmax.f32 %v3849, %v3622
          %v3851 = vmax.f32 %v3850, %v3623
          %v3852 = vmax.f32 %v3851, %v3624
          %v3853 = vmax.f32 %v3852, %v3625
          %v3854 = vrot.slane %v3853, 4
          %v3855 = vmax.f32 %v3853, %v3854
          %v3856 = vrot.slane %v3855, 2
          %v3857 = vmax.f32 %v3855, %v3856
          %v3858 = vrot.slane %v3857, 1
          %v3859 = vmax.f32 %v3857, %v3858
          %v3860 = vmax.f32 %v3642, %v3643
          %v3861 = vmax.f32 %v3860, %v3644
          %v3862 = vmax.f32 %v3861, %v3645
          %v3863 = vmax.f32 %v3862, %v3646
          %v3864 = vmax.f32 %v3863, %v3647
          %v3865 = vmax.f32 %v3864, %v3648
          %v3866 = vmax.f32 %v3865, %v3649
          %v3867 = vmax.f32 %v3866, %v3650
          %v3868 = vmax.f32 %v3867, %v3651
          %v3869 = vmax.f32 %v3868, %v3652
          %v3870 = vmax.f32 %v3869, %v3653
          %v3871 = vmax.f32 %v3870, %v3654
          %v3872 = vmax.f32 %v3871, %v3655
          %v3873 = vmax.f32 %v3872, %v3656
          %v3874 = vmax.f32 %v3873, %v3657
          %v3875 = vrot.slane %v3874, 4
          %v3876 = vmax.f32 %v3874, %v3875
          %v3877 = vrot.slane %v3876, 2
          %v3878 = vmax.f32 %v3876, %v3877
          %v3879 = vrot.slane %v3878, 1
          %v3880 = vmax.f32 %v3878, %v3879
          %v3881 = vmax.f32 %v3674, %v3675
          %v3882 = vmax.f32 %v3881, %v3676
          %v3883 = vmax.f32 %v3882, %v3677
          %v3884 = vmax.f32 %v3883, %v3678
          %v3885 = vmax.f32 %v3884, %v3679
          %v3886 = vmax.f32 %v3885, %v3680
          %v3887 = vmax.f32 %v3886, %v3681
          %v3888 = vmax.f32 %v3887, %v3682
          %v3889 = vmax.f32 %v3888, %v3683
          %v3890 = vmax.f32 %v3889, %v3684
          %v3891 = vmax.f32 %v3890, %v3685
          %v3892 = vmax.f32 %v3891, %v3686
          %v3893 = vmax.f32 %v3892, %v3687
          %v3894 = vmax.f32 %v3893, %v3688
          %v3895 = vmax.f32 %v3894, %v3689
          %v3896 = vrot.slane %v3895, 4
          %v3897 = vmax.f32 %v3895, %v3896
          %v3898 = vrot.slane %v3897, 2
          %v3899 = vmax.f32 %v3897, %v3898
          %v3900 = vrot.slane %v3899, 1
          %v3901 = vmax.f32 %v3899, %v3900
          %v3902 = vmax.f32 %v3706, %v3707
          %v3903 = vmax.f32 %v3902, %v3708
          %v3904 = vmax.f32 %v3903, %v3709
          %v3905 = vmax.f32 %v3904, %v3710
          %v3906 = vmax.f32 %v3905, %v3711
          %v3907 = vmax.f32 %v3906, %v3712
          %v3908 = vmax.f32 %v3907, %v3713
          %v3909 = vmax.f32 %v3908, %v3714
          %v3910 = vmax.f32 %v3909, %v3715
          %v3911 = vmax.f32 %v3910, %v3716
          %v3912 = vmax.f32 %v3911, %v3717
          %v3913 = vmax.f32 %v3912, %v3718
          %v3914 = vmax.f32 %v3913, %v3719
          %v3915 = vmax.f32 %v3914, %v3720
          %v3916 = vmax.f32 %v3915, %v3721
          %v3917 = vrot.slane %v3916, 4
          %v3918 = vmax.f32 %v3916, %v3917
          %v3919 = vrot.slane %v3918, 2
          %v3920 = vmax.f32 %v3918, %v3919
          %v3921 = vrot.slane %v3920, 1
          %v3922 = vmax.f32 %v3920, %v3921
          %v3923 = vmax.f32 %v3738, %v3739
          %v3924 = vmax.f32 %v3923, %v3740
          %v3925 = vmax.f32 %v3924, %v3741
          %v3926 = vmax.f32 %v3925, %v3742
          %v3927 = vmax.f32 %v3926, %v3743
          %v3928 = vmax.f32 %v3927, %v3744
          %v3929 = vmax.f32 %v3928, %v3745
          %v3930 = vmax.f32 %v3929, %v3746
          %v3931 = vmax.f32 %v3930, %v3747
          %v3932 = vmax.f32 %v3931, %v3748
          %v3933 = vmax.f32 %v3932, %v3749
          %v3934 = vmax.f32 %v3933, %v3750
          %v3935 = vmax.f32 %v3934, %v3751
          %v3936 = vmax.f32 %v3935, %v3752
          %v3937 = vmax.f32 %v3936, %v3753
          %v3938 = vrot.slane %v3937, 4
          %v3939 = vmax.f32 %v3937, %v3938
          %v3940 = vrot.slane %v3939, 2
          %v3941 = vmax.f32 %v3939, %v3940
          %v3942 = vrot.slane %v3941, 1
          %v3943 = vmax.f32 %v3941, %v3942
          %v3944 = vmax.f32 %v3770, %v3771
          %v3945 = vmax.f32 %v3944, %v3772
          %v3946 = vmax.f32 %v3945, %v3773
          %v3947 = vmax.f32 %v3946, %v3774
          %v3948 = vmax.f32 %v3947, %v3775
          %v3949 = vmax.f32 %v3948, %v3776
          %v3950 = vmax.f32 %v3949, %v3777
          %v3951 = vmax.f32 %v3950, %v3778
          %v3952 = vmax.f32 %v3951, %v3779
          %v3953 = vmax.f32 %v3952, %v3780
          %v3954 = vmax.f32 %v3953, %v3781
          %v3955 = vmax.f32 %v3954, %v3782
          %v3956 = vmax.f32 %v3955, %v3783
          %v3957 = vmax.f32 %v3956, %v3784
          %v3958 = vmax.f32 %v3957, %v3785
          %v3959 = vrot.slane %v3958, 4
          %v3960 = vmax.f32 %v3958, %v3959
          %v3961 = vrot.slane %v3960, 2
          %v3962 = vmax.f32 %v3960, %v3961
          %v3963 = vrot.slane %v3962, 1
          %v3964 = vmax.f32 %v3962, %v3963
          %v3965 = vmax.f32 %v3802, %v3803
          %v3966 = vmax.f32 %v3965, %v3804
          %v3967 = vmax.f32 %v3966, %v3805
          %v3968 = vmax.f32 %v3967, %v3806
          %v3969 = vmax.f32 %v3968, %v3807
          %v3970 = vmax.f32 %v3969, %v3808
          %v3971 = vmax.f32 %v3970, %v3809
          %v3972 = vmax.f32 %v3971, %v3810
          %v3973 = vmax.f32 %v3972, %v3811
          %v3974 = vmax.f32 %v3973, %v3812
          %v3975 = vmax.f32 %v3974, %v3813
          %v3976 = vmax.f32 %v3975, %v3814
          %v3977 = vmax.f32 %v3976, %v3815
          %v3978 = vmax.f32 %v3977, %v3816
          %v3979 = vmax.f32 %v3978, %v3817
          %v3980 = vrot.slane %v3979, 4
          %v3981 = vmax.f32 %v3979, %v3980
          %v3982 = vrot.slane %v3981, 2
          %v3983 = vmax.f32 %v3981, %v3982
          %v3984 = vrot.slane %v3983, 1
          %v3985 = vmax.f32 %v3983, %v3984
          %v3986 = vpack.c.bf16 %v3838, %v3838
          %v3987 = vpack.c.bf16 %v3859, %v3859
          %v3988 = vpack.c.bf16 %v3880, %v3880
          %v3989 = vpack.c.bf16 %v3901, %v3901
          %v3990 = vpack.c.bf16 %v3922, %v3922
          %v3991 = vpack.c.bf16 %v3943, %v3943
          %v3992 = vpack.c.bf16 %v3964, %v3964
          %v3993 = vpack.c.bf16 %v3985, %v3985
          %v3994 = vld [vmem:[#allocation6] sm:$0xff]
          %v3995 = vld [vmem:[#allocation6 + $0x8] sm:$0xff]
          %v3996 = vld [vmem:[#allocation6 + $0x10] sm:$0xff]
          %v3997 = vld [vmem:[#allocation6 + $0x18] sm:$0xff]
          %v3998 = vld [vmem:[#allocation6 + $0x20] sm:$0xff]
          %v3999 = vld [vmem:[#allocation6 + $0x28] sm:$0xff]
          %v4000 = vld [vmem:[#allocation6 + $0x30] sm:$0xff]
          %v4001 = vld [vmem:[#allocation6 + $0x38] sm:$0xff]
          %v4002 = vld [vmem:[#allocation6 + $0x40] sm:$0xff]
          %v4003 = vld [vmem:[#allocation6 + $0x48] sm:$0xff]
          %v4004 = vld [vmem:[#allocation6 + $0x50] sm:$0xff]
          %v4005 = vld [vmem:[#allocation6 + $0x58] sm:$0xff]
          %v4006 = vld [vmem:[#allocation6 + $0x60] sm:$0xff]
          %v4007 = vld [vmem:[#allocation6 + $0x68] sm:$0xff]
          %v4008 = vld [vmem:[#allocation6 + $0x70] sm:$0xff]
          %v4009 = vld [vmem:[#allocation6 + $0x78] sm:$0xff]
          %v4010 = vld [vmem:[#allocation6 + $0x80] sm:$0xff]
          %v4011 = vld [vmem:[#allocation6 + $0x88] sm:$0xff]
          %v4012 = vld [vmem:[#allocation6 + $0x90] sm:$0xff]
          %v4013 = vld [vmem:[#allocation6 + $0x98] sm:$0xff]
          %v4014 = vld [vmem:[#allocation6 + $0xa0] sm:$0xff]
          %v4015 = vld [vmem:[#allocation6 + $0xa8] sm:$0xff]
          %v4016 = vld [vmem:[#allocation6 + $0xb0] sm:$0xff]
          %v4017 = vld [vmem:[#allocation6 + $0xb8] sm:$0xff]
          %v4018 = vld [vmem:[#allocation6 + $0xc0] sm:$0xff]
          %v4019 = vld [vmem:[#allocation6 + $0xc8] sm:$0xff]
          %v4020 = vld [vmem:[#allocation6 + $0xd0] sm:$0xff]
          %v4021 = vld [vmem:[#allocation6 + $0xd8] sm:$0xff]
          %v4022 = vld [vmem:[#allocation6 + $0xe0] sm:$0xff]
          %v4023 = vld [vmem:[#allocation6 + $0xe8] sm:$0xff]
          %v4024 = vld [vmem:[#allocation6 + $0xf0] sm:$0xff]
          %v4025 = vld [vmem:[#allocation6 + $0xf8] sm:$0xff]
          %v4026 = vld [vmem:[#allocation6 + $0x100] sm:$0xff]
          %v4027 = vld [vmem:[#allocation6 + $0x108] sm:$0xff]
          %v4028 = vld [vmem:[#allocation6 + $0x110] sm:$0xff]
          %v4029 = vld [vmem:[#allocation6 + $0x118] sm:$0xff]
          %v4030 = vld [vmem:[#allocation6 + $0x120] sm:$0xff]
          %v4031 = vld [vmem:[#allocation6 + $0x128] sm:$0xff]
          %v4032 = vld [vmem:[#allocation6 + $0x130] sm:$0xff]
          %v4033 = vld [vmem:[#allocation6 + $0x138] sm:$0xff]
          %v4034 = vld [vmem:[#allocation6 + $0x140] sm:$0xff]
          %v4035 = vld [vmem:[#allocation6 + $0x148] sm:$0xff]
          %v4036 = vld [vmem:[#allocation6 + $0x150] sm:$0xff]
          %v4037 = vld [vmem:[#allocation6 + $0x158] sm:$0xff]
          %v4038 = vld [vmem:[#allocation6 + $0x160] sm:$0xff]
          %v4039 = vld [vmem:[#allocation6 + $0x168] sm:$0xff]
          %v4040 = vld [vmem:[#allocation6 + $0x170] sm:$0xff]
          %v4041 = vld [vmem:[#allocation6 + $0x178] sm:$0xff]
          %v4042 = vld [vmem:[#allocation6 + $0x180] sm:$0xff]
          %v4043 = vld [vmem:[#allocation6 + $0x188] sm:$0xff]
          %v4044 = vld [vmem:[#allocation6 + $0x190] sm:$0xff]
          %v4045 = vld [vmem:[#allocation6 + $0x198] sm:$0xff]
          %v4046 = vld [vmem:[#allocation6 + $0x1a0] sm:$0xff]
          %v4047 = vld [vmem:[#allocation6 + $0x1a8] sm:$0xff]
          %v4048 = vld [vmem:[#allocation6 + $0x1b0] sm:$0xff]
          %v4049 = vld [vmem:[#allocation6 + $0x1b8] sm:$0xff]
          %v4050 = vld [vmem:[#allocation6 + $0x1c0] sm:$0xff]
          %v4051 = vld [vmem:[#allocation6 + $0x1c8] sm:$0xff]
          %v4052 = vld [vmem:[#allocation6 + $0x1d0] sm:$0xff]
          %v4053 = vld [vmem:[#allocation6 + $0x1d8] sm:$0xff]
          %v4054 = vld [vmem:[#allocation6 + $0x1e0] sm:$0xff]
          %v4055 = vld [vmem:[#allocation6 + $0x1e8] sm:$0xff]
          %v4056 = vld [vmem:[#allocation6 + $0x1f0] sm:$0xff]
          %v4057 = vld [vmem:[#allocation6 + $0x1f8] sm:$0xff]
          %v4058 = vld [vmem:[#allocation6 + $0x200] sm:$0xff]
          %v4059 = vld [vmem:[#allocation6 + $0x208] sm:$0xff]
          %v4060 = vld [vmem:[#allocation6 + $0x210] sm:$0xff]
          %v4061 = vld [vmem:[#allocation6 + $0x218] sm:$0xff]
          %v4062 = vld [vmem:[#allocation6 + $0x220] sm:$0xff]
          %v4063 = vld [vmem:[#allocation6 + $0x228] sm:$0xff]
          %v4064 = vld [vmem:[#allocation6 + $0x230] sm:$0xff]
          %v4065 = vld [vmem:[#allocation6 + $0x238] sm:$0xff]
          %v4066 = vld [vmem:[#allocation6 + $0x240] sm:$0xff]
          %v4067 = vld [vmem:[#allocation6 + $0x248] sm:$0xff]
          %v4068 = vld [vmem:[#allocation6 + $0x250] sm:$0xff]
          %v4069 = vld [vmem:[#allocation6 + $0x258] sm:$0xff]
          %v4070 = vld [vmem:[#allocation6 + $0x260] sm:$0xff]
          %v4071 = vld [vmem:[#allocation6 + $0x268] sm:$0xff]
          %v4072 = vld [vmem:[#allocation6 + $0x270] sm:$0xff]
          %v4073 = vld [vmem:[#allocation6 + $0x278] sm:$0xff]
          %v4074 = vld [vmem:[#allocation6 + $0x280] sm:$0xff]
          %v4075 = vld [vmem:[#allocation6 + $0x288] sm:$0xff]
          %v4076 = vld [vmem:[#allocation6 + $0x290] sm:$0xff]
          %v4077 = vld [vmem:[#allocation6 + $0x298] sm:$0xff]
          %v4078 = vld [vmem:[#allocation6 + $0x2a0] sm:$0xff]
          %v4079 = vld [vmem:[#allocation6 + $0x2a8] sm:$0xff]
          %v4080 = vld [vmem:[#allocation6 + $0x2b0] sm:$0xff]
          %v4081 = vld [vmem:[#allocation6 + $0x2b8] sm:$0xff]
          %v4082 = vld [vmem:[#allocation6 + $0x2c0] sm:$0xff]
          %v4083 = vld [vmem:[#allocation6 + $0x2c8] sm:$0xff]
          %v4084 = vld [vmem:[#allocation6 + $0x2d0] sm:$0xff]
          %v4085 = vld [vmem:[#allocation6 + $0x2d8] sm:$0xff]
          %v4086 = vld [vmem:[#allocation6 + $0x2e0] sm:$0xff]
          %v4087 = vld [vmem:[#allocation6 + $0x2e8] sm:$0xff]
          %v4088 = vld [vmem:[#allocation6 + $0x2f0] sm:$0xff]
          %v4089 = vld [vmem:[#allocation6 + $0x2f8] sm:$0xff]
          %v4090 = vld [vmem:[#allocation6 + $0x300] sm:$0xff]
          %v4091 = vld [vmem:[#allocation6 + $0x308] sm:$0xff]
          %v4092 = vld [vmem:[#allocation6 + $0x310] sm:$0xff]
          %v4093 = vld [vmem:[#allocation6 + $0x318] sm:$0xff]
          %v4094 = vld [vmem:[#allocation6 + $0x320] sm:$0xff]
          %v4095 = vld [vmem:[#allocation6 + $0x328] sm:$0xff]
          %v4096 = vld [vmem:[#allocation6 + $0x330] sm:$0xff]
          %v4097 = vld [vmem:[#allocation6 + $0x338] sm:$0xff]
          %v4098 = vld [vmem:[#allocation6 + $0x340] sm:$0xff]
          %v4099 = vld [vmem:[#allocation6 + $0x348] sm:$0xff]
          %v4100 = vld [vmem:[#allocation6 + $0x350] sm:$0xff]
          %v4101 = vld [vmem:[#allocation6 + $0x358] sm:$0xff]
          %v4102 = vld [vmem:[#allocation6 + $0x360] sm:$0xff]
          %v4103 = vld [vmem:[#allocation6 + $0x368] sm:$0xff]
          %v4104 = vld [vmem:[#allocation6 + $0x370] sm:$0xff]
          %v4105 = vld [vmem:[#allocation6 + $0x378] sm:$0xff]
          %v4106 = vld [vmem:[#allocation6 + $0x380] sm:$0xff]
          %v4107 = vld [vmem:[#allocation6 + $0x388] sm:$0xff]
          %v4108 = vld [vmem:[#allocation6 + $0x390] sm:$0xff]
          %v4109 = vld [vmem:[#allocation6 + $0x398] sm:$0xff]
          %v4110 = vld [vmem:[#allocation6 + $0x3a0] sm:$0xff]
          %v4111 = vld [vmem:[#allocation6 + $0x3a8] sm:$0xff]
          %v4112 = vld [vmem:[#allocation6 + $0x3b0] sm:$0xff]
          %v4113 = vld [vmem:[#allocation6 + $0x3b8] sm:$0xff]
          %v4114 = vld [vmem:[#allocation6 + $0x3c0] sm:$0xff]
          %v4115 = vld [vmem:[#allocation6 + $0x3c8] sm:$0xff]
          %v4116 = vld [vmem:[#allocation6 + $0x3d0] sm:$0xff]
          %v4117 = vld [vmem:[#allocation6 + $0x3d8] sm:$0xff]
          %v4118 = vld [vmem:[#allocation6 + $0x3e0] sm:$0xff]
          %v4119 = vld [vmem:[#allocation6 + $0x3e8] sm:$0xff]
          %v4120 = vld [vmem:[#allocation6 + $0x3f0] sm:$0xff]
          %v4121 = vld [vmem:[#allocation6 + $0x3f8] sm:$0xff]
          %v4122 = vld [vmem:[#allocation6 + $0x400] sm:$0xff]
          %v4123 = vld [vmem:[#allocation6 + $0x408] sm:$0xff]
          %v4124 = vld [vmem:[#allocation6 + $0x410] sm:$0xff]
          %v4125 = vld [vmem:[#allocation6 + $0x418] sm:$0xff]
          %v4126 = vld [vmem:[#allocation6 + $0x420] sm:$0xff]
          %v4127 = vld [vmem:[#allocation6 + $0x428] sm:$0xff]
          %v4128 = vld [vmem:[#allocation6 + $0x430] sm:$0xff]
          %v4129 = vld [vmem:[#allocation6 + $0x438] sm:$0xff]
          %v4130 = vld [vmem:[#allocation6 + $0x440] sm:$0xff]
          %v4131 = vld [vmem:[#allocation6 + $0x448] sm:$0xff]
          %v4132 = vld [vmem:[#allocation6 + $0x450] sm:$0xff]
          %v4133 = vld [vmem:[#allocation6 + $0x458] sm:$0xff]
          %v4134 = vld [vmem:[#allocation6 + $0x460] sm:$0xff]
          %v4135 = vld [vmem:[#allocation6 + $0x468] sm:$0xff]
          %v4136 = vld [vmem:[#allocation6 + $0x470] sm:$0xff]
          %v4137 = vld [vmem:[#allocation6 + $0x478] sm:$0xff]
          %v4138 = vld [vmem:[#allocation6 + $0x480] sm:$0xff]
          %v4139 = vld [vmem:[#allocation6 + $0x488] sm:$0xff]
          %v4140 = vld [vmem:[#allocation6 + $0x490] sm:$0xff]
          %v4141 = vld [vmem:[#allocation6 + $0x498] sm:$0xff]
          %v4142 = vld [vmem:[#allocation6 + $0x4a0] sm:$0xff]
          %v4143 = vld [vmem:[#allocation6 + $0x4a8] sm:$0xff]
          %v4144 = vld [vmem:[#allocation6 + $0x4b0] sm:$0xff]
          %v4145 = vld [vmem:[#allocation6 + $0x4b8] sm:$0xff]
          %v4146 = vld [vmem:[#allocation6 + $0x4c0] sm:$0xff]
          %v4147 = vld [vmem:[#allocation6 + $0x4c8] sm:$0xff]
          %v4148 = vld [vmem:[#allocation6 + $0x4d0] sm:$0xff]
          %v4149 = vld [vmem:[#allocation6 + $0x4d8] sm:$0xff]
          %v4150 = vld [vmem:[#allocation6 + $0x4e0] sm:$0xff]
          %v4151 = vld [vmem:[#allocation6 + $0x4e8] sm:$0xff]
          %v4152 = vld [vmem:[#allocation6 + $0x4f0] sm:$0xff]
          %v4153 = vld [vmem:[#allocation6 + $0x4f8] sm:$0xff]
          %v4154 = vld [vmem:[#allocation6 + $0x500] sm:$0xff]
          %v4155 = vld [vmem:[#allocation6 + $0x508] sm:$0xff]
          %v4156 = vld [vmem:[#allocation6 + $0x510] sm:$0xff]
          %v4157 = vld [vmem:[#allocation6 + $0x518] sm:$0xff]
          %v4158 = vld [vmem:[#allocation6 + $0x520] sm:$0xff]
          %v4159 = vld [vmem:[#allocation6 + $0x528] sm:$0xff]
          %v4160 = vld [vmem:[#allocation6 + $0x530] sm:$0xff]
          %v4161 = vld [vmem:[#allocation6 + $0x538] sm:$0xff]
          %v4162 = vld [vmem:[#allocation6 + $0x540] sm:$0xff]
          %v4163 = vld [vmem:[#allocation6 + $0x548] sm:$0xff]
          %v4164 = vld [vmem:[#allocation6 + $0x550] sm:$0xff]
          %v4165 = vld [vmem:[#allocation6 + $0x558] sm:$0xff]
          %v4166 = vld [vmem:[#allocation6 + $0x560] sm:$0xff]
          %v4167 = vld [vmem:[#allocation6 + $0x568] sm:$0xff]
          %v4168 = vld [vmem:[#allocation6 + $0x570] sm:$0xff]
          %v4169 = vld [vmem:[#allocation6 + $0x578] sm:$0xff]
          %v4170 = vld [vmem:[#allocation6 + $0x580] sm:$0xff]
          %v4171 = vld [vmem:[#allocation6 + $0x588] sm:$0xff]
          %v4172 = vld [vmem:[#allocation6 + $0x590] sm:$0xff]
          %v4173 = vld [vmem:[#allocation6 + $0x598] sm:$0xff]
          %v4174 = vld [vmem:[#allocation6 + $0x5a0] sm:$0xff]
          %v4175 = vld [vmem:[#allocation6 + $0x5a8] sm:$0xff]
          %v4176 = vld [vmem:[#allocation6 + $0x5b0] sm:$0xff]
          %v4177 = vld [vmem:[#allocation6 + $0x5b8] sm:$0xff]
          %v4178 = vld [vmem:[#allocation6 + $0x5c0] sm:$0xff]
          %v4179 = vld [vmem:[#allocation6 + $0x5c8] sm:$0xff]
          %v4180 = vld [vmem:[#allocation6 + $0x5d0] sm:$0xff]
          %v4181 = vld [vmem:[#allocation6 + $0x5d8] sm:$0xff]
          %v4182 = vld [vmem:[#allocation6 + $0x5e0] sm:$0xff]
          %v4183 = vld [vmem:[#allocation6 + $0x5e8] sm:$0xff]
          %v4184 = vld [vmem:[#allocation6 + $0x5f0] sm:$0xff]
          %v4185 = vld [vmem:[#allocation6 + $0x5f8] sm:$0xff]
          %v4186 = vld [vmem:[#allocation6 + $0x600] sm:$0xff]
          %v4187 = vld [vmem:[#allocation6 + $0x608] sm:$0xff]
          %v4188 = vld [vmem:[#allocation6 + $0x610] sm:$0xff]
          %v4189 = vld [vmem:[#allocation6 + $0x618] sm:$0xff]
          %v4190 = vld [vmem:[#allocation6 + $0x620] sm:$0xff]
          %v4191 = vld [vmem:[#allocation6 + $0x628] sm:$0xff]
          %v4192 = vld [vmem:[#allocation6 + $0x630] sm:$0xff]
          %v4193 = vld [vmem:[#allocation6 + $0x638] sm:$0xff]
          %v4194 = vld [vmem:[#allocation6 + $0x640] sm:$0xff]
          %v4195 = vld [vmem:[#allocation6 + $0x648] sm:$0xff]
          %v4196 = vld [vmem:[#allocation6 + $0x650] sm:$0xff]
          %v4197 = vld [vmem:[#allocation6 + $0x658] sm:$0xff]
          %v4198 = vld [vmem:[#allocation6 + $0x660] sm:$0xff]
          %v4199 = vld [vmem:[#allocation6 + $0x668] sm:$0xff]
          %v4200 = vld [vmem:[#allocation6 + $0x670] sm:$0xff]
          %v4201 = vld [vmem:[#allocation6 + $0x678] sm:$0xff]
          %v4202 = vld [vmem:[#allocation6 + $0x680] sm:$0xff]
          %v4203 = vld [vmem:[#allocation6 + $0x688] sm:$0xff]
          %v4204 = vld [vmem:[#allocation6 + $0x690] sm:$0xff]
          %v4205 = vld [vmem:[#allocation6 + $0x698] sm:$0xff]
          %v4206 = vld [vmem:[#allocation6 + $0x6a0] sm:$0xff]
          %v4207 = vld [vmem:[#allocation6 + $0x6a8] sm:$0xff]
          %v4208 = vld [vmem:[#allocation6 + $0x6b0] sm:$0xff]
          %v4209 = vld [vmem:[#allocation6 + $0x6b8] sm:$0xff]
          %v4210 = vld [vmem:[#allocation6 + $0x6c0] sm:$0xff]
          %v4211 = vld [vmem:[#allocation6 + $0x6c8] sm:$0xff]
          %v4212 = vld [vmem:[#allocation6 + $0x6d0] sm:$0xff]
          %v4213 = vld [vmem:[#allocation6 + $0x6d8] sm:$0xff]
          %v4214 = vld [vmem:[#allocation6 + $0x6e0] sm:$0xff]
          %v4215 = vld [vmem:[#allocation6 + $0x6e8] sm:$0xff]
          %v4216 = vld [vmem:[#allocation6 + $0x6f0] sm:$0xff]
          %v4217 = vld [vmem:[#allocation6 + $0x6f8] sm:$0xff]
          %v4218 = vld [vmem:[#allocation6 + $0x700] sm:$0xff]
          %v4219 = vld [vmem:[#allocation6 + $0x708] sm:$0xff]
          %v4220 = vld [vmem:[#allocation6 + $0x710] sm:$0xff]
          %v4221 = vld [vmem:[#allocation6 + $0x718] sm:$0xff]
          %v4222 = vld [vmem:[#allocation6 + $0x720] sm:$0xff]
          %v4223 = vld [vmem:[#allocation6 + $0x728] sm:$0xff]
          %v4224 = vld [vmem:[#allocation6 + $0x730] sm:$0xff]
          %v4225 = vld [vmem:[#allocation6 + $0x738] sm:$0xff]
          %v4226 = vld [vmem:[#allocation6 + $0x740] sm:$0xff]
          %v4227 = vld [vmem:[#allocation6 + $0x748] sm:$0xff]
          %v4228 = vld [vmem:[#allocation6 + $0x750] sm:$0xff]
          %v4229 = vld [vmem:[#allocation6 + $0x758] sm:$0xff]
          %v4230 = vld [vmem:[#allocation6 + $0x760] sm:$0xff]
          %v4231 = vld [vmem:[#allocation6 + $0x768] sm:$0xff]
          %v4232 = vld [vmem:[#allocation6 + $0x770] sm:$0xff]
          %v4233 = vld [vmem:[#allocation6 + $0x778] sm:$0xff]
          %v4234 = vld [vmem:[#allocation6 + $0x780] sm:$0xff]
          %v4235 = vld [vmem:[#allocation6 + $0x788] sm:$0xff]
          %v4236 = vld [vmem:[#allocation6 + $0x790] sm:$0xff]
          %v4237 = vld [vmem:[#allocation6 + $0x798] sm:$0xff]
          %v4238 = vld [vmem:[#allocation6 + $0x7a0] sm:$0xff]
          %v4239 = vld [vmem:[#allocation6 + $0x7a8] sm:$0xff]
          %v4240 = vld [vmem:[#allocation6 + $0x7b0] sm:$0xff]
          %v4241 = vld [vmem:[#allocation6 + $0x7b8] sm:$0xff]
          %v4242 = vld [vmem:[#allocation6 + $0x7c0] sm:$0xff]
          %v4243 = vld [vmem:[#allocation6 + $0x7c8] sm:$0xff]
          %v4244 = vld [vmem:[#allocation6 + $0x7d0] sm:$0xff]
          %v4245 = vld [vmem:[#allocation6 + $0x7d8] sm:$0xff]
          %v4246 = vld [vmem:[#allocation6 + $0x7e0] sm:$0xff]
          %v4247 = vld [vmem:[#allocation6 + $0x7e8] sm:$0xff]
          %v4248 = vld [vmem:[#allocation6 + $0x7f0] sm:$0xff]
          %v4249 = vld [vmem:[#allocation6 + $0x7f8] sm:$0xff]
          %v4250 = vld [vmem:[%s8] sm:$0xf]
          %v4507 = vunpack.c.l.b16 %v3994
          %v4508 = vunpack.c.h.b16 %v3994
          %v4509 = vunpack.c.l.b16 %v3995
          %v4510 = vunpack.c.h.b16 %v3995
          %v4511 = vunpack.c.l.b16 %v3996
          %v4512 = vunpack.c.h.b16 %v3996
          %v4513 = vunpack.c.l.b16 %v3997
          %v4514 = vunpack.c.h.b16 %v3997
          %v4515 = vunpack.c.l.b16 %v3998
          %v4516 = vunpack.c.h.b16 %v3998
          %v4517 = vunpack.c.l.b16 %v3999
          %v4518 = vunpack.c.h.b16 %v3999
          %v4519 = vunpack.c.l.b16 %v4000
          %v4520 = vunpack.c.h.b16 %v4000
          %v4521 = vunpack.c.l.b16 %v4001
          %v4522 = vunpack.c.h.b16 %v4001
          %v4523 = vunpack.c.l.b16 %v4002
          %v4524 = vunpack.c.h.b16 %v4002
          %v4525 = vunpack.c.l.b16 %v4003
          %v4526 = vunpack.c.h.b16 %v4003
          %v4527 = vunpack.c.l.b16 %v4004
          %v4528 = vunpack.c.h.b16 %v4004
          %v4529 = vunpack.c.l.b16 %v4005
          %v4530 = vunpack.c.h.b16 %v4005
          %v4531 = vunpack.c.l.b16 %v4006
          %v4532 = vunpack.c.h.b16 %v4006
          %v4533 = vunpack.c.l.b16 %v4007
          %v4534 = vunpack.c.h.b16 %v4007
          %v4535 = vunpack.c.l.b16 %v4008
          %v4536 = vunpack.c.h.b16 %v4008
          %v4537 = vunpack.c.l.b16 %v4009
          %v4538 = vunpack.c.h.b16 %v4009
          %v4539 = vunpack.c.l.b16 %v4010
          %v4540 = vunpack.c.h.b16 %v4010
          %v4541 = vunpack.c.l.b16 %v4011
          %v4542 = vunpack.c.h.b16 %v4011
          %v4543 = vunpack.c.l.b16 %v4012
          %v4544 = vunpack.c.h.b16 %v4012
          %v4545 = vunpack.c.l.b16 %v4013
          %v4546 = vunpack.c.h.b16 %v4013
          %v4547 = vunpack.c.l.b16 %v4014
          %v4548 = vunpack.c.h.b16 %v4014
          %v4549 = vunpack.c.l.b16 %v4015
          %v4550 = vunpack.c.h.b16 %v4015
          %v4551 = vunpack.c.l.b16 %v4016
          %v4552 = vunpack.c.h.b16 %v4016
          %v4553 = vunpack.c.l.b16 %v4017
          %v4554 = vunpack.c.h.b16 %v4017
          %v4555 = vunpack.c.l.b16 %v4018
          %v4556 = vunpack.c.h.b16 %v4018
          %v4557 = vunpack.c.l.b16 %v4019
          %v4558 = vunpack.c.h.b16 %v4019
          %v4559 = vunpack.c.l.b16 %v4020
          %v4560 = vunpack.c.h.b16 %v4020
          %v4561 = vunpack.c.l.b16 %v4021
          %v4562 = vunpack.c.h.b16 %v4021
          %v4563 = vunpack.c.l.b16 %v4022
          %v4564 = vunpack.c.h.b16 %v4022
          %v4565 = vunpack.c.l.b16 %v4023
          %v4566 = vunpack.c.h.b16 %v4023
          %v4567 = vunpack.c.l.b16 %v4024
          %v4568 = vunpack.c.h.b16 %v4024
          %v4569 = vunpack.c.l.b16 %v4025
          %v4570 = vunpack.c.h.b16 %v4025
          %v4571 = vunpack.c.l.b16 %v4026
          %v4572 = vunpack.c.h.b16 %v4026
          %v4573 = vunpack.c.l.b16 %v4027
          %v4574 = vunpack.c.h.b16 %v4027
          %v4575 = vunpack.c.l.b16 %v4028
          %v4576 = vunpack.c.h.b16 %v4028
          %v4577 = vunpack.c.l.b16 %v4029
          %v4578 = vunpack.c.h.b16 %v4029
          %v4579 = vunpack.c.l.b16 %v4030
          %v4580 = vunpack.c.h.b16 %v4030
          %v4581 = vunpack.c.l.b16 %v4031
          %v4582 = vunpack.c.h.b16 %v4031
          %v4583 = vunpack.c.l.b16 %v4032
          %v4584 = vunpack.c.h.b16 %v4032
          %v4585 = vunpack.c.l.b16 %v4033
          %v4586 = vunpack.c.h.b16 %v4033
          %v4587 = vunpack.c.l.b16 %v4034
          %v4588 = vunpack.c.h.b16 %v4034
          %v4589 = vunpack.c.l.b16 %v4035
          %v4590 = vunpack.c.h.b16 %v4035
          %v4591 = vunpack.c.l.b16 %v4036
          %v4592 = vunpack.c.h.b16 %v4036
          %v4593 = vunpack.c.l.b16 %v4037
          %v4594 = vunpack.c.h.b16 %v4037
          %v4595 = vunpack.c.l.b16 %v4038
          %v4596 = vunpack.c.h.b16 %v4038
          %v4597 = vunpack.c.l.b16 %v4039
          %v4598 = vunpack.c.h.b16 %v4039
          %v4599 = vunpack.c.l.b16 %v4040
          %v4600 = vunpack.c.h.b16 %v4040
          %v4601 = vunpack.c.l.b16 %v4041
          %v4602 = vunpack.c.h.b16 %v4041
          %v4603 = vunpack.c.l.b16 %v4042
          %v4604 = vunpack.c.h.b16 %v4042
          %v4605 = vunpack.c.l.b16 %v4043
          %v4606 = vunpack.c.h.b16 %v4043
          %v4607 = vunpack.c.l.b16 %v4044
          %v4608 = vunpack.c.h.b16 %v4044
          %v4609 = vunpack.c.l.b16 %v4045
          %v4610 = vunpack.c.h.b16 %v4045
          %v4611 = vunpack.c.l.b16 %v4046
          %v4612 = vunpack.c.h.b16 %v4046
          %v4613 = vunpack.c.l.b16 %v4047
          %v4614 = vunpack.c.h.b16 %v4047
          %v4615 = vunpack.c.l.b16 %v4048
          %v4616 = vunpack.c.h.b16 %v4048
          %v4617 = vunpack.c.l.b16 %v4049
          %v4618 = vunpack.c.h.b16 %v4049
          %v4619 = vunpack.c.l.b16 %v4050
          %v4620 = vunpack.c.h.b16 %v4050
          %v4621 = vunpack.c.l.b16 %v4051
          %v4622 = vunpack.c.h.b16 %v4051
          %v4623 = vunpack.c.l.b16 %v4052
          %v4624 = vunpack.c.h.b16 %v4052
          %v4625 = vunpack.c.l.b16 %v4053
          %v4626 = vunpack.c.h.b16 %v4053
          %v4627 = vunpack.c.l.b16 %v4054
          %v4628 = vunpack.c.h.b16 %v4054
          %v4629 = vunpack.c.l.b16 %v4055
          %v4630 = vunpack.c.h.b16 %v4055
          %v4631 = vunpack.c.l.b16 %v4056
          %v4632 = vunpack.c.h.b16 %v4056
          %v4633 = vunpack.c.l.b16 %v4057
          %v4634 = vunpack.c.h.b16 %v4057
          %v4635 = vunpack.c.l.b16 %v4058
          %v4636 = vunpack.c.h.b16 %v4058
          %v4637 = vunpack.c.l.b16 %v4059
          %v4638 = vunpack.c.h.b16 %v4059
          %v4639 = vunpack.c.l.b16 %v4060
          %v4640 = vunpack.c.h.b16 %v4060
          %v4641 = vunpack.c.l.b16 %v4061
          %v4642 = vunpack.c.h.b16 %v4061
          %v4643 = vunpack.c.l.b16 %v4062
          %v4644 = vunpack.c.h.b16 %v4062
          %v4645 = vunpack.c.l.b16 %v4063
          %v4646 = vunpack.c.h.b16 %v4063
          %v4647 = vunpack.c.l.b16 %v4064
          %v4648 = vunpack.c.h.b16 %v4064
          %v4649 = vunpack.c.l.b16 %v4065
          %v4650 = vunpack.c.h.b16 %v4065
          %v4651 = vunpack.c.l.b16 %v4066
          %v4652 = vunpack.c.h.b16 %v4066
          %v4653 = vunpack.c.l.b16 %v4067
          %v4654 = vunpack.c.h.b16 %v4067
          %v4655 = vunpack.c.l.b16 %v4068
          %v4656 = vunpack.c.h.b16 %v4068
          %v4657 = vunpack.c.l.b16 %v4069
          %v4658 = vunpack.c.h.b16 %v4069
          %v4659 = vunpack.c.l.b16 %v4070
          %v4660 = vunpack.c.h.b16 %v4070
          %v4661 = vunpack.c.l.b16 %v4071
          %v4662 = vunpack.c.h.b16 %v4071
          %v4663 = vunpack.c.l.b16 %v4072
          %v4664 = vunpack.c.h.b16 %v4072
          %v4665 = vunpack.c.l.b16 %v4073
          %v4666 = vunpack.c.h.b16 %v4073
          %v4667 = vunpack.c.l.b16 %v4074
          %v4668 = vunpack.c.h.b16 %v4074
          %v4669 = vunpack.c.l.b16 %v4075
          %v4670 = vunpack.c.h.b16 %v4075
          %v4671 = vunpack.c.l.b16 %v4076
          %v4672 = vunpack.c.h.b16 %v4076
          %v4673 = vunpack.c.l.b16 %v4077
          %v4674 = vunpack.c.h.b16 %v4077
          %v4675 = vunpack.c.l.b16 %v4078
          %v4676 = vunpack.c.h.b16 %v4078
          %v4677 = vunpack.c.l.b16 %v4079
          %v4678 = vunpack.c.h.b16 %v4079
          %v4679 = vunpack.c.l.b16 %v4080
          %v4680 = vunpack.c.h.b16 %v4080
          %v4681 = vunpack.c.l.b16 %v4081
          %v4682 = vunpack.c.h.b16 %v4081
          %v4683 = vunpack.c.l.b16 %v4082
          %v4684 = vunpack.c.h.b16 %v4082
          %v4685 = vunpack.c.l.b16 %v4083
          %v4686 = vunpack.c.h.b16 %v4083
          %v4687 = vunpack.c.l.b16 %v4084
          %v4688 = vunpack.c.h.b16 %v4084
          %v4689 = vunpack.c.l.b16 %v4085
          %v4690 = vunpack.c.h.b16 %v4085
          %v4691 = vunpack.c.l.b16 %v4086
          %v4692 = vunpack.c.h.b16 %v4086
          %v4693 = vunpack.c.l.b16 %v4087
          %v4694 = vunpack.c.h.b16 %v4087
          %v4695 = vunpack.c.l.b16 %v4088
          %v4696 = vunpack.c.h.b16 %v4088
          %v4697 = vunpack.c.l.b16 %v4089
          %v4698 = vunpack.c.h.b16 %v4089
          %v4699 = vunpack.c.l.b16 %v4090
          %v4700 = vunpack.c.h.b16 %v4090
          %v4701 = vunpack.c.l.b16 %v4091
          %v4702 = vunpack.c.h.b16 %v4091
          %v4703 = vunpack.c.l.b16 %v4092
          %v4704 = vunpack.c.h.b16 %v4092
          %v4705 = vunpack.c.l.b16 %v4093
          %v4706 = vunpack.c.h.b16 %v4093
          %v4707 = vunpack.c.l.b16 %v4094
          %v4708 = vunpack.c.h.b16 %v4094
          %v4709 = vunpack.c.l.b16 %v4095
          %v4710 = vunpack.c.h.b16 %v4095
          %v4711 = vunpack.c.l.b16 %v4096
          %v4712 = vunpack.c.h.b16 %v4096
          %v4713 = vunpack.c.l.b16 %v4097
          %v4714 = vunpack.c.h.b16 %v4097
          %v4715 = vunpack.c.l.b16 %v4098
          %v4716 = vunpack.c.h.b16 %v4098
          %v4717 = vunpack.c.l.b16 %v4099
          %v4718 = vunpack.c.h.b16 %v4099
          %v4719 = vunpack.c.l.b16 %v4100
          %v4720 = vunpack.c.h.b16 %v4100
          %v4721 = vunpack.c.l.b16 %v4101
          %v4722 = vunpack.c.h.b16 %v4101
          %v4723 = vunpack.c.l.b16 %v4102
          %v4724 = vunpack.c.h.b16 %v4102
          %v4725 = vunpack.c.l.b16 %v4103
          %v4726 = vunpack.c.h.b16 %v4103
          %v4727 = vunpack.c.l.b16 %v4104
          %v4728 = vunpack.c.h.b16 %v4104
          %v4729 = vunpack.c.l.b16 %v4105
          %v4730 = vunpack.c.h.b16 %v4105
          %v4731 = vunpack.c.l.b16 %v4106
          %v4732 = vunpack.c.h.b16 %v4106
          %v4733 = vunpack.c.l.b16 %v4107
          %v4734 = vunpack.c.h.b16 %v4107
          %v4735 = vunpack.c.l.b16 %v4108
          %v4736 = vunpack.c.h.b16 %v4108
          %v4737 = vunpack.c.l.b16 %v4109
          %v4738 = vunpack.c.h.b16 %v4109
          %v4739 = vunpack.c.l.b16 %v4110
          %v4740 = vunpack.c.h.b16 %v4110
          %v4741 = vunpack.c.l.b16 %v4111
          %v4742 = vunpack.c.h.b16 %v4111
          %v4743 = vunpack.c.l.b16 %v4112
          %v4744 = vunpack.c.h.b16 %v4112
          %v4745 = vunpack.c.l.b16 %v4113
          %v4746 = vunpack.c.h.b16 %v4113
          %v4747 = vunpack.c.l.b16 %v4114
          %v4748 = vunpack.c.h.b16 %v4114
          %v4749 = vunpack.c.l.b16 %v4115
          %v4750 = vunpack.c.h.b16 %v4115
          %v4751 = vunpack.c.l.b16 %v4116
          %v4752 = vunpack.c.h.b16 %v4116
          %v4753 = vunpack.c.l.b16 %v4117
          %v4754 = vunpack.c.h.b16 %v4117
          %v4755 = vunpack.c.l.b16 %v4118
          %v4756 = vunpack.c.h.b16 %v4118
          %v4757 = vunpack.c.l.b16 %v4119
          %v4758 = vunpack.c.h.b16 %v4119
          %v4759 = vunpack.c.l.b16 %v4120
          %v4760 = vunpack.c.h.b16 %v4120
          %v4761 = vunpack.c.l.b16 %v4121
          %v4762 = vunpack.c.h.b16 %v4121
          %v4763 = vunpack.c.l.b16 %v4122
          %v4764 = vunpack.c.h.b16 %v4122
          %v4765 = vunpack.c.l.b16 %v4123
          %v4766 = vunpack.c.h.b16 %v4123
          %v4767 = vunpack.c.l.b16 %v4124
          %v4768 = vunpack.c.h.b16 %v4124
          %v4769 = vunpack.c.l.b16 %v4125
          %v4770 = vunpack.c.h.b16 %v4125
          %v4771 = vunpack.c.l.b16 %v4126
          %v4772 = vunpack.c.h.b16 %v4126
          %v4773 = vunpack.c.l.b16 %v4127
          %v4774 = vunpack.c.h.b16 %v4127
          %v4775 = vunpack.c.l.b16 %v4128
          %v4776 = vunpack.c.h.b16 %v4128
          %v4777 = vunpack.c.l.b16 %v4129
          %v4778 = vunpack.c.h.b16 %v4129
          %v4779 = vunpack.c.l.b16 %v4130
          %v4780 = vunpack.c.h.b16 %v4130
          %v4781 = vunpack.c.l.b16 %v4131
          %v4782 = vunpack.c.h.b16 %v4131
          %v4783 = vunpack.c.l.b16 %v4132
          %v4784 = vunpack.c.h.b16 %v4132
          %v4785 = vunpack.c.l.b16 %v4133
          %v4786 = vunpack.c.h.b16 %v4133
          %v4787 = vunpack.c.l.b16 %v4134
          %v4788 = vunpack.c.h.b16 %v4134
          %v4789 = vunpack.c.l.b16 %v4135
          %v4790 = vunpack.c.h.b16 %v4135
          %v4791 = vunpack.c.l.b16 %v4136
          %v4792 = vunpack.c.h.b16 %v4136
          %v4793 = vunpack.c.l.b16 %v4137
          %v4794 = vunpack.c.h.b16 %v4137
          %v4795 = vunpack.c.l.b16 %v4138
          %v4796 = vunpack.c.h.b16 %v4138
          %v4797 = vunpack.c.l.b16 %v4139
          %v4798 = vunpack.c.h.b16 %v4139
          %v4799 = vunpack.c.l.b16 %v4140
          %v4800 = vunpack.c.h.b16 %v4140
          %v4801 = vunpack.c.l.b16 %v4141
          %v4802 = vunpack.c.h.b16 %v4141
          %v4803 = vunpack.c.l.b16 %v4142
          %v4804 = vunpack.c.h.b16 %v4142
          %v4805 = vunpack.c.l.b16 %v4143
          %v4806 = vunpack.c.h.b16 %v4143
          %v4807 = vunpack.c.l.b16 %v4144
          %v4808 = vunpack.c.h.b16 %v4144
          %v4809 = vunpack.c.l.b16 %v4145
          %v4810 = vunpack.c.h.b16 %v4145
          %v4811 = vunpack.c.l.b16 %v4146
          %v4812 = vunpack.c.h.b16 %v4146
          %v4813 = vunpack.c.l.b16 %v4147
          %v4814 = vunpack.c.h.b16 %v4147
          %v4815 = vunpack.c.l.b16 %v4148
          %v4816 = vunpack.c.h.b16 %v4148
          %v4817 = vunpack.c.l.b16 %v4149
          %v4818 = vunpack.c.h.b16 %v4149
          %v4819 = vunpack.c.l.b16 %v4150
          %v4820 = vunpack.c.h.b16 %v4150
          %v4821 = vunpack.c.l.b16 %v4151
          %v4822 = vunpack.c.h.b16 %v4151
          %v4823 = vunpack.c.l.b16 %v4152
          %v4824 = vunpack.c.h.b16 %v4152
          %v4825 = vunpack.c.l.b16 %v4153
          %v4826 = vunpack.c.h.b16 %v4153
          %v4827 = vunpack.c.l.b16 %v4154
          %v4828 = vunpack.c.h.b16 %v4154
          %v4829 = vunpack.c.l.b16 %v4155
          %v4830 = vunpack.c.h.b16 %v4155
          %v4831 = vunpack.c.l.b16 %v4156
          %v4832 = vunpack.c.h.b16 %v4156
          %v4833 = vunpack.c.l.b16 %v4157
          %v4834 = vunpack.c.h.b16 %v4157
          %v4835 = vunpack.c.l.b16 %v4158
          %v4836 = vunpack.c.h.b16 %v4158
          %v4837 = vunpack.c.l.b16 %v4159
          %v4838 = vunpack.c.h.b16 %v4159
          %v4839 = vunpack.c.l.b16 %v4160
          %v4840 = vunpack.c.h.b16 %v4160
          %v4841 = vunpack.c.l.b16 %v4161
          %v4842 = vunpack.c.h.b16 %v4161
          %v4843 = vunpack.c.l.b16 %v4162
          %v4844 = vunpack.c.h.b16 %v4162
          %v4845 = vunpack.c.l.b16 %v4163
          %v4846 = vunpack.c.h.b16 %v4163
          %v4847 = vunpack.c.l.b16 %v4164
          %v4848 = vunpack.c.h.b16 %v4164
          %v4849 = vunpack.c.l.b16 %v4165
          %v4850 = vunpack.c.h.b16 %v4165
          %v4851 = vunpack.c.l.b16 %v4166
          %v4852 = vunpack.c.h.b16 %v4166
          %v4853 = vunpack.c.l.b16 %v4167
          %v4854 = vunpack.c.h.b16 %v4167
          %v4855 = vunpack.c.l.b16 %v4168
          %v4856 = vunpack.c.h.b16 %v4168
          %v4857 = vunpack.c.l.b16 %v4169
          %v4858 = vunpack.c.h.b16 %v4169
          %v4859 = vunpack.c.l.b16 %v4170
          %v4860 = vunpack.c.h.b16 %v4170
          %v4861 = vunpack.c.l.b16 %v4171
          %v4862 = vunpack.c.h.b16 %v4171
          %v4863 = vunpack.c.l.b16 %v4172
          %v4864 = vunpack.c.h.b16 %v4172
          %v4865 = vunpack.c.l.b16 %v4173
          %v4866 = vunpack.c.h.b16 %v4173
          %v4867 = vunpack.c.l.b16 %v4174
          %v4868 = vunpack.c.h.b16 %v4174
          %v4869 = vunpack.c.l.b16 %v4175
          %v4870 = vunpack.c.h.b16 %v4175
          %v4871 = vunpack.c.l.b16 %v4176
          %v4872 = vunpack.c.h.b16 %v4176
          %v4873 = vunpack.c.l.b16 %v4177
          %v4874 = vunpack.c.h.b16 %v4177
          %v4875 = vunpack.c.l.b16 %v4178
          %v4876 = vunpack.c.h.b16 %v4178
          %v4877 = vunpack.c.l.b16 %v4179
          %v4878 = vunpack.c.h.b16 %v4179
          %v4879 = vunpack.c.l.b16 %v4180
          %v4880 = vunpack.c.h.b16 %v4180
          %v4881 = vunpack.c.l.b16 %v4181
          %v4882 = vunpack.c.h.b16 %v4181
          %v4883 = vunpack.c.l.b16 %v4182
          %v4884 = vunpack.c.h.b16 %v4182
          %v4885 = vunpack.c.l.b16 %v4183
          %v4886 = vunpack.c.h.b16 %v4183
          %v4887 = vunpack.c.l.b16 %v4184
          %v4888 = vunpack.c.h.b16 %v4184
          %v4889 = vunpack.c.l.b16 %v4185
          %v4890 = vunpack.c.h.b16 %v4185
          %v4891 = vunpack.c.l.b16 %v4186
          %v4892 = vunpack.c.h.b16 %v4186
          %v4893 = vunpack.c.l.b16 %v4187
          %v4894 = vunpack.c.h.b16 %v4187
          %v4895 = vunpack.c.l.b16 %v4188
          %v4896 = vunpack.c.h.b16 %v4188
          %v4897 = vunpack.c.l.b16 %v4189
          %v4898 = vunpack.c.h.b16 %v4189
          %v4899 = vunpack.c.l.b16 %v4190
          %v4900 = vunpack.c.h.b16 %v4190
          %v4901 = vunpack.c.l.b16 %v4191
          %v4902 = vunpack.c.h.b16 %v4191
          %v4903 = vunpack.c.l.b16 %v4192
          %v4904 = vunpack.c.h.b16 %v4192
          %v4905 = vunpack.c.l.b16 %v4193
          %v4906 = vunpack.c.h.b16 %v4193
          %v4907 = vunpack.c.l.b16 %v4194
          %v4908 = vunpack.c.h.b16 %v4194
          %v4909 = vunpack.c.l.b16 %v4195
          %v4910 = vunpack.c.h.b16 %v4195
          %v4911 = vunpack.c.l.b16 %v4196
          %v4912 = vunpack.c.h.b16 %v4196
          %v4913 = vunpack.c.l.b16 %v4197
          %v4914 = vunpack.c.h.b16 %v4197
          %v4915 = vunpack.c.l.b16 %v4198
          %v4916 = vunpack.c.h.b16 %v4198
          %v4917 = vunpack.c.l.b16 %v4199
          %v4918 = vunpack.c.h.b16 %v4199
          %v4919 = vunpack.c.l.b16 %v4200
          %v4920 = vunpack.c.h.b16 %v4200
          %v4921 = vunpack.c.l.b16 %v4201
          %v4922 = vunpack.c.h.b16 %v4201
          %v4923 = vunpack.c.l.b16 %v4202
          %v4924 = vunpack.c.h.b16 %v4202
          %v4925 = vunpack.c.l.b16 %v4203
          %v4926 = vunpack.c.h.b16 %v4203
          %v4927 = vunpack.c.l.b16 %v4204
          %v4928 = vunpack.c.h.b16 %v4204
          %v4929 = vunpack.c.l.b16 %v4205
          %v4930 = vunpack.c.h.b16 %v4205
          %v4931 = vunpack.c.l.b16 %v4206
          %v4932 = vunpack.c.h.b16 %v4206
          %v4933 = vunpack.c.l.b16 %v4207
          %v4934 = vunpack.c.h.b16 %v4207
          %v4935 = vunpack.c.l.b16 %v4208
          %v4936 = vunpack.c.h.b16 %v4208
          %v4937 = vunpack.c.l.b16 %v4209
          %v4938 = vunpack.c.h.b16 %v4209
          %v4939 = vunpack.c.l.b16 %v4210
          %v4940 = vunpack.c.h.b16 %v4210
          %v4941 = vunpack.c.l.b16 %v4211
          %v4942 = vunpack.c.h.b16 %v4211
          %v4943 = vunpack.c.l.b16 %v4212
          %v4944 = vunpack.c.h.b16 %v4212
          %v4945 = vunpack.c.l.b16 %v4213
          %v4946 = vunpack.c.h.b16 %v4213
          %v4947 = vunpack.c.l.b16 %v4214
          %v4948 = vunpack.c.h.b16 %v4214
          %v4949 = vunpack.c.l.b16 %v4215
          %v4950 = vunpack.c.h.b16 %v4215
          %v4951 = vunpack.c.l.b16 %v4216
          %v4952 = vunpack.c.h.b16 %v4216
          %v4953 = vunpack.c.l.b16 %v4217
          %v4954 = vunpack.c.h.b16 %v4217
          %v4955 = vunpack.c.l.b16 %v4218
          %v4956 = vunpack.c.h.b16 %v4218
          %v4957 = vunpack.c.l.b16 %v4219
          %v4958 = vunpack.c.h.b16 %v4219
          %v4959 = vunpack.c.l.b16 %v4220
          %v4960 = vunpack.c.h.b16 %v4220
          %v4961 = vunpack.c.l.b16 %v4221
          %v4962 = vunpack.c.h.b16 %v4221
          %v4963 = vunpack.c.l.b16 %v4222
          %v4964 = vunpack.c.h.b16 %v4222
          %v4965 = vunpack.c.l.b16 %v4223
          %v4966 = vunpack.c.h.b16 %v4223
          %v4967 = vunpack.c.l.b16 %v4224
          %v4968 = vunpack.c.h.b16 %v4224
          %v4969 = vunpack.c.l.b16 %v4225
          %v4970 = vunpack.c.h.b16 %v4225
          %v4971 = vunpack.c.l.b16 %v4226
          %v4972 = vunpack.c.h.b16 %v4226
          %v4973 = vunpack.c.l.b16 %v4227
          %v4974 = vunpack.c.h.b16 %v4227
          %v4975 = vunpack.c.l.b16 %v4228
          %v4976 = vunpack.c.h.b16 %v4228
          %v4977 = vunpack.c.l.b16 %v4229
          %v4978 = vunpack.c.h.b16 %v4229
          %v4979 = vunpack.c.l.b16 %v4230
          %v4980 = vunpack.c.h.b16 %v4230
          %v4981 = vunpack.c.l.b16 %v4231
          %v4982 = vunpack.c.h.b16 %v4231
          %v4983 = vunpack.c.l.b16 %v4232
          %v4984 = vunpack.c.h.b16 %v4232
          %v4985 = vunpack.c.l.b16 %v4233
          %v4986 = vunpack.c.h.b16 %v4233
          %v4987 = vunpack.c.l.b16 %v4234
          %v4988 = vunpack.c.h.b16 %v4234
          %v4989 = vunpack.c.l.b16 %v4235
          %v4990 = vunpack.c.h.b16 %v4235
          %v4991 = vunpack.c.l.b16 %v4236
          %v4992 = vunpack.c.h.b16 %v4236
          %v4993 = vunpack.c.l.b16 %v4237
          %v4994 = vunpack.c.h.b16 %v4237
          %v4995 = vunpack.c.l.b16 %v4238
          %v4996 = vunpack.c.h.b16 %v4238
          %v4997 = vunpack.c.l.b16 %v4239
          %v4998 = vunpack.c.h.b16 %v4239
          %v4999 = vunpack.c.l.b16 %v4240
          %v5000 = vunpack.c.h.b16 %v4240
          %v5001 = vunpack.c.l.b16 %v4241
          %v5002 = vunpack.c.h.b16 %v4241
          %v5003 = vunpack.c.l.b16 %v4242
          %v5004 = vunpack.c.h.b16 %v4242
          %v5005 = vunpack.c.l.b16 %v4243
          %v5006 = vunpack.c.h.b16 %v4243
          %v5007 = vunpack.c.l.b16 %v4244
          %v5008 = vunpack.c.h.b16 %v4244
          %v5009 = vunpack.c.l.b16 %v4245
          %v5010 = vunpack.c.h.b16 %v4245
          %v5011 = vunpack.c.l.b16 %v4246
          %v5012 = vunpack.c.h.b16 %v4246
          %v5013 = vunpack.c.l.b16 %v4247
          %v5014 = vunpack.c.h.b16 %v4247
          %v5015 = vunpack.c.l.b16 %v4248
          %v5016 = vunpack.c.h.b16 %v4248
          %v5017 = vunpack.c.l.b16 %v4249
          %v5018 = vunpack.c.h.b16 %v4249
          %v5019 = vpack.c.b16 %v4511, %v4507
          %v5020 = vpack.c.b16 %v4512, %v4508
          %v5021 = vpack.c.b16 %v4513, %v4509
          %v5022 = vpack.c.b16 %v4514, %v4510
          %v5023 = vpack.c.b16 %v4519, %v4515
          %v5024 = vpack.c.b16 %v4520, %v4516
          %v5025 = vpack.c.b16 %v4521, %v4517
          %v5026 = vpack.c.b16 %v4522, %v4518
          %v5027 = vpack.c.b16 %v4527, %v4523
          %v5028 = vpack.c.b16 %v4528, %v4524
          %v5029 = vpack.c.b16 %v4529, %v4525
          %v5030 = vpack.c.b16 %v4530, %v4526
          %v5031 = vpack.c.b16 %v4535, %v4531
          %v5032 = vpack.c.b16 %v4536, %v4532
          %v5033 = vpack.c.b16 %v4537, %v4533
          %v5034 = vpack.c.b16 %v4538, %v4534
          %v5035 = vpack.c.b16 %v4543, %v4539
          %v5036 = vpack.c.b16 %v4544, %v4540
          %v5037 = vpack.c.b16 %v4545, %v4541
          %v5038 = vpack.c.b16 %v4546, %v4542
          %v5039 = vpack.c.b16 %v4551, %v4547
          %v5040 = vpack.c.b16 %v4552, %v4548
          %v5041 = vpack.c.b16 %v4553, %v4549
          %v5042 = vpack.c.b16 %v4554, %v4550
          %v5043 = vpack.c.b16 %v4559, %v4555
          %v5044 = vpack.c.b16 %v4560, %v4556
          %v5045 = vpack.c.b16 %v4561, %v4557
          %v5046 = vpack.c.b16 %v4562, %v4558
          %v5047 = vpack.c.b16 %v4567, %v4563
          %v5048 = vpack.c.b16 %v4568, %v4564
          %v5049 = vpack.c.b16 %v4569, %v4565
          %v5050 = vpack.c.b16 %v4570, %v4566
          %v5051 = vpack.c.b16 %v4575, %v4571
          %v5052 = vpack.c.b16 %v4576, %v4572
          %v5053 = vpack.c.b16 %v4577, %v4573
          %v5054 = vpack.c.b16 %v4578, %v4574
          %v5055 = vpack.c.b16 %v4583, %v4579
          %v5056 = vpack.c.b16 %v4584, %v4580
          %v5057 = vpack.c.b16 %v4585, %v4581
          %v5058 = vpack.c.b16 %v4586, %v4582
          %v5059 = vpack.c.b16 %v4591, %v4587
          %v5060 = vpack.c.b16 %v4592, %v4588
          %v5061 = vpack.c.b16 %v4593, %v4589
          %v5062 = vpack.c.b16 %v4594, %v4590
          %v5063 = vpack.c.b16 %v4599, %v4595
          %v5064 = vpack.c.b16 %v4600, %v4596
          %v5065 = vpack.c.b16 %v4601, %v4597
          %v5066 = vpack.c.b16 %v4602, %v4598
          %v5067 = vpack.c.b16 %v4607, %v4603
          %v5068 = vpack.c.b16 %v4608, %v4604
          %v5069 = vpack.c.b16 %v4609, %v4605
          %v5070 = vpack.c.b16 %v4610, %v4606
          %v5071 = vpack.c.b16 %v4615, %v4611
          %v5072 = vpack.c.b16 %v4616, %v4612
          %v5073 = vpack.c.b16 %v4617, %v4613
          %v5074 = vpack.c.b16 %v4618, %v4614
          %v5075 = vpack.c.b16 %v4623, %v4619
          %v5076 = vpack.c.b16 %v4624, %v4620
          %v5077 = vpack.c.b16 %v4625, %v4621
          %v5078 = vpack.c.b16 %v4626, %v4622
          %v5079 = vpack.c.b16 %v4631, %v4627
          %v5080 = vpack.c.b16 %v4632, %v4628
          %v5081 = vpack.c.b16 %v4633, %v4629
          %v5082 = vpack.c.b16 %v4634, %v4630
          %v5083 = vpack.c.b16 %v4639, %v4635
          %v5084 = vpack.c.b16 %v4640, %v4636
          %v5085 = vpack.c.b16 %v4641, %v4637
          %v5086 = vpack.c.b16 %v4642, %v4638
          %v5087 = vpack.c.b16 %v4647, %v4643
          %v5088 = vpack.c.b16 %v4648, %v4644
          %v5089 = vpack.c.b16 %v4649, %v4645
          %v5090 = vpack.c.b16 %v4650, %v4646
          %v5091 = vpack.c.b16 %v4655, %v4651
          %v5092 = vpack.c.b16 %v4656, %v4652
          %v5093 = vpack.c.b16 %v4657, %v4653
          %v5094 = vpack.c.b16 %v4658, %v4654
          %v5095 = vpack.c.b16 %v4663, %v4659
          %v5096 = vpack.c.b16 %v4664, %v4660
          %v5097 = vpack.c.b16 %v4665, %v4661
          %v5098 = vpack.c.b16 %v4666, %v4662
          %v5099 = vpack.c.b16 %v4671, %v4667
          %v5100 = vpack.c.b16 %v4672, %v4668
          %v5101 = vpack.c.b16 %v4673, %v4669
          %v5102 = vpack.c.b16 %v4674, %v4670
          %v5103 = vpack.c.b16 %v4679, %v4675
          %v5104 = vpack.c.b16 %v4680, %v4676
          %v5105 = vpack.c.b16 %v4681, %v4677
          %v5106 = vpack.c.b16 %v4682, %v4678
          %v5107 = vpack.c.b16 %v4687, %v4683
          %v5108 = vpack.c.b16 %v4688, %v4684
          %v5109 = vpack.c.b16 %v4689, %v4685
          %v5110 = vpack.c.b16 %v4690, %v4686
          %v5111 = vpack.c.b16 %v4695, %v4691
          %v5112 = vpack.c.b16 %v4696, %v4692
          %v5113 = vpack.c.b16 %v4697, %v4693
          %v5114 = vpack.c.b16 %v4698, %v4694
          %v5115 = vpack.c.b16 %v4703, %v4699
          %v5116 = vpack.c.b16 %v4704, %v4700
          %v5117 = vpack.c.b16 %v4705, %v4701
          %v5118 = vpack.c.b16 %v4706, %v4702
          %v5119 = vpack.c.b16 %v4711, %v4707
          %v5120 = vpack.c.b16 %v4712, %v4708
          %v5121 = vpack.c.b16 %v4713, %v4709
          %v5122 = vpack.c.b16 %v4714, %v4710
          %v5123 = vpack.c.b16 %v4719, %v4715
          %v5124 = vpack.c.b16 %v4720, %v4716
          %v5125 = vpack.c.b16 %v4721, %v4717
          %v5126 = vpack.c.b16 %v4722, %v4718
          %v5127 = vpack.c.b16 %v4727, %v4723
          %v5128 = vpack.c.b16 %v4728, %v4724
          %v5129 = vpack.c.b16 %v4729, %v4725
          %v5130 = vpack.c.b16 %v4730, %v4726
          %v5131 = vpack.c.b16 %v4735, %v4731
          %v5132 = vpack.c.b16 %v4736, %v4732
          %v5133 = vpack.c.b16 %v4737, %v4733
          %v5134 = vpack.c.b16 %v4738, %v4734
          %v5135 = vpack.c.b16 %v4743, %v4739
          %v5136 = vpack.c.b16 %v4744, %v4740
          %v5137 = vpack.c.b16 %v4745, %v4741
          %v5138 = vpack.c.b16 %v4746, %v4742
          %v5139 = vpack.c.b16 %v4751, %v4747
          %v5140 = vpack.c.b16 %v4752, %v4748
          %v5141 = vpack.c.b16 %v4753, %v4749
          %v5142 = vpack.c.b16 %v4754, %v4750
          %v5143 = vpack.c.b16 %v4759, %v4755
          %v5144 = vpack.c.b16 %v4760, %v4756
          %v5145 = vpack.c.b16 %v4761, %v4757
          %v5146 = vpack.c.b16 %v4762, %v4758
          %v5147 = vpack.c.b16 %v4767, %v4763
          %v5148 = vpack.c.b16 %v4768, %v4764
          %v5149 = vpack.c.b16 %v4769, %v4765
          %v5150 = vpack.c.b16 %v4770, %v4766
          %v5151 = vpack.c.b16 %v4775, %v4771
          %v5152 = vpack.c.b16 %v4776, %v4772
          %v5153 = vpack.c.b16 %v4777, %v4773
          %v5154 = vpack.c.b16 %v4778, %v4774
          %v5155 = vpack.c.b16 %v4783, %v4779
          %v5156 = vpack.c.b16 %v4784, %v4780
          %v5157 = vpack.c.b16 %v4785, %v4781
          %v5158 = vpack.c.b16 %v4786, %v4782
          %v5159 = vpack.c.b16 %v4791, %v4787
          %v5160 = vpack.c.b16 %v4792, %v4788
          %v5161 = vpack.c.b16 %v4793, %v4789
          %v5162 = vpack.c.b16 %v4794, %v4790
          %v5163 = vpack.c.b16 %v4799, %v4795
          %v5164 = vpack.c.b16 %v4800, %v4796
          %v5165 = vpack.c.b16 %v4801, %v4797
          %v5166 = vpack.c.b16 %v4802, %v4798
          %v5167 = vpack.c.b16 %v4807, %v4803
          %v5168 = vpack.c.b16 %v4808, %v4804
          %v5169 = vpack.c.b16 %v4809, %v4805
          %v5170 = vpack.c.b16 %v4810, %v4806
          %v5171 = vpack.c.b16 %v4815, %v4811
          %v5172 = vpack.c.b16 %v4816, %v4812
          %v5173 = vpack.c.b16 %v4817, %v4813
          %v5174 = vpack.c.b16 %v4818, %v4814
          %v5175 = vpack.c.b16 %v4823, %v4819
          %v5176 = vpack.c.b16 %v4824, %v4820
          %v5177 = vpack.c.b16 %v4825, %v4821
          %v5178 = vpack.c.b16 %v4826, %v4822
          %v5179 = vpack.c.b16 %v4831, %v4827
          %v5180 = vpack.c.b16 %v4832, %v4828
          %v5181 = vpack.c.b16 %v4833, %v4829
          %v5182 = vpack.c.b16 %v4834, %v4830
          %v5183 = vpack.c.b16 %v4839, %v4835
          %v5184 = vpack.c.b16 %v4840, %v4836
          %v5185 = vpack.c.b16 %v4841, %v4837
          %v5186 = vpack.c.b16 %v4842, %v4838
          %v5187 = vpack.c.b16 %v4847, %v4843
          %v5188 = vpack.c.b16 %v4848, %v4844
          %v5189 = vpack.c.b16 %v4849, %v4845
          %v5190 = vpack.c.b16 %v4850, %v4846
          %v5191 = vpack.c.b16 %v4855, %v4851
          %v5192 = vpack.c.b16 %v4856, %v4852
          %v5193 = vpack.c.b16 %v4857, %v4853
          %v5194 = vpack.c.b16 %v4858, %v4854
          %v5195 = vpack.c.b16 %v4863, %v4859
          %v5196 = vpack.c.b16 %v4864, %v4860
          %v5197 = vpack.c.b16 %v4865, %v4861
          %v5198 = vpack.c.b16 %v4866, %v4862
          %v5199 = vpack.c.b16 %v4871, %v4867
          %v5200 = vpack.c.b16 %v4872, %v4868
          %v5201 = vpack.c.b16 %v4873, %v4869
          %v5202 = vpack.c.b16 %v4874, %v4870
          %v5203 = vpack.c.b16 %v4879, %v4875
          %v5204 = vpack.c.b16 %v4880, %v4876
          %v5205 = vpack.c.b16 %v4881, %v4877
          %v5206 = vpack.c.b16 %v4882, %v4878
          %v5207 = vpack.c.b16 %v4887, %v4883
          %v5208 = vpack.c.b16 %v4888, %v4884
          %v5209 = vpack.c.b16 %v4889, %v4885
          %v5210 = vpack.c.b16 %v4890, %v4886
          %v5211 = vpack.c.b16 %v4895, %v4891
          %v5212 = vpack.c.b16 %v4896, %v4892
          %v5213 = vpack.c.b16 %v4897, %v4893
          %v5214 = vpack.c.b16 %v4898, %v4894
          %v5215 = vpack.c.b16 %v4903, %v4899
          %v5216 = vpack.c.b16 %v4904, %v4900
          %v5217 = vpack.c.b16 %v4905, %v4901
          %v5218 = vpack.c.b16 %v4906, %v4902
          %v5219 = vpack.c.b16 %v4911, %v4907
          %v5220 = vpack.c.b16 %v4912, %v4908
          %v5221 = vpack.c.b16 %v4913, %v4909
          %v5222 = vpack.c.b16 %v4914, %v4910
          %v5223 = vpack.c.b16 %v4919, %v4915
          %v5224 = vpack.c.b16 %v4920, %v4916
          %v5225 = vpack.c.b16 %v4921, %v4917
          %v5226 = vpack.c.b16 %v4922, %v4918
          %v5227 = vpack.c.b16 %v4927, %v4923
          %v5228 = vpack.c.b16 %v4928, %v4924
          %v5229 = vpack.c.b16 %v4929, %v4925
          %v5230 = vpack.c.b16 %v4930, %v4926
          %v5231 = vpack.c.b16 %v4935, %v4931
          %v5232 = vpack.c.b16 %v4936, %v4932
          %v5233 = vpack.c.b16 %v4937, %v4933
          %v5234 = vpack.c.b16 %v4938, %v4934
          %v5235 = vpack.c.b16 %v4943, %v4939
          %v5236 = vpack.c.b16 %v4944, %v4940
          %v5237 = vpack.c.b16 %v4945, %v4941
          %v5238 = vpack.c.b16 %v4946, %v4942
          %v5239 = vpack.c.b16 %v4951, %v4947
          %v5240 = vpack.c.b16 %v4952, %v4948
          %v5241 = vpack.c.b16 %v4953, %v4949
          %v5242 = vpack.c.b16 %v4954, %v4950
          %v5243 = vpack.c.b16 %v4959, %v4955
          %v5244 = vpack.c.b16 %v4960, %v4956
          %v5245 = vpack.c.b16 %v4961, %v4957
          %v5246 = vpack.c.b16 %v4962, %v4958
          %v5247 = vpack.c.b16 %v4967, %v4963
          %v5248 = vpack.c.b16 %v4968, %v4964
          %v5249 = vpack.c.b16 %v4969, %v4965
          %v5250 = vpack.c.b16 %v4970, %v4966
          %v5251 = vpack.c.b16 %v4975, %v4971
          %v5252 = vpack.c.b16 %v4976, %v4972
          %v5253 = vpack.c.b16 %v4977, %v4973
          %v5254 = vpack.c.b16 %v4978, %v4974
          %v5255 = vpack.c.b16 %v4983, %v4979
          %v5256 = vpack.c.b16 %v4984, %v4980
          %v5257 = vpack.c.b16 %v4985, %v4981
          %v5258 = vpack.c.b16 %v4986, %v4982
          %v5259 = vpack.c.b16 %v4991, %v4987
          %v5260 = vpack.c.b16 %v4992, %v4988
          %v5261 = vpack.c.b16 %v4993, %v4989
          %v5262 = vpack.c.b16 %v4994, %v4990
          %v5263 = vpack.c.b16 %v4999, %v4995
          %v5264 = vpack.c.b16 %v5000, %v4996
          %v5265 = vpack.c.b16 %v5001, %v4997
          %v5266 = vpack.c.b16 %v5002, %v4998
          %v5267 = vpack.c.b16 %v5007, %v5003
          %v5268 = vpack.c.b16 %v5008, %v5004
          %v5269 = vpack.c.b16 %v5009, %v5005
          %v5270 = vpack.c.b16 %v5010, %v5006
          %v5271 = vpack.c.b16 %v5015, %v5011
          %v5272 = vpack.c.b16 %v5016, %v5012
          %v5273 = vpack.c.b16 %v5017, %v5013
          %v5274 = vpack.c.b16 %v5018, %v5014
          %v5532 = vlaneseq
          %v5533 = vshrl.u32 %v5532, 7
          %v5534 = vsub.s32 0, %v5533
          %v5535 = vrot.slane %v4250, %v5534
          %v5536 = vlaneseq
          %v5537 = vshrl.u32 %v5536, 7
          %v5538 = vsub.s32 1, %v5537
          %v5539 = vrot.slane %v4250, %v5538
          %v5540 = vlaneseq
          %v5541 = vshrl.u32 %v5540, 7
          %v5542 = vsub.s32 2, %v5541
          %v5543 = vrot.slane %v4250, %v5542
          %v5544 = vlaneseq
          %v5545 = vshrl.u32 %v5544, 7
          %v5546 = vsub.s32 3, %v5545
          %v5547 = vrot.slane %v4250, %v5546
          %5552 = vmatprep.subr.bf16.mxu0 %v5048
          %5553 = vmatpush1.bf16.msra.mxu0 %v5047
          %5554 = vmatprep.subr.bf16.mxu0 %v5044
          %5555 = vmatpush1.bf16.msra.mxu0 %v5043
          %5556 = vmatprep.subr.bf16.mxu0 %v5040
          %5557 = vmatpush1.bf16.msra.mxu0 %v5039
          %5558 = vmatprep.subr.bf16.mxu0 %v5036
          %5559 = vmatpush1.bf16.msra.mxu0 %v5035
          %5560 = vmatprep.subr.bf16.mxu0 %v5032
          %5561 = vmatpush1.bf16.msra.mxu0 %v5031
          %5562 = vmatprep.subr.bf16.mxu0 %v5028
          %5563 = vmatpush1.bf16.msra.mxu0 %v5027
          %5564 = vmatprep.subr.bf16.mxu0 %v5024
          %5565 = vmatpush1.bf16.msra.mxu0 %v5023
          %5566 = vmatprep.subr.bf16.mxu0 %v5020
          %5567 = vmatpush1.bf16.msra.mxu0 %v5019
          %5568 = vmatprep.subr.bf16.mxu0 %v5080
          %5569 = vmatpush2.bf16.msra.mxu0 %v5079
          %5570 = vmatprep.subr.bf16.mxu0 %v5076
          %5571 = vmatpush2.bf16.msra.mxu0 %v5075
          %5572 = vmatprep.subr.bf16.mxu0 %v5072
          %5573 = vmatpush2.bf16.msra.mxu0 %v5071
          %5574 = vmatprep.subr.bf16.mxu0 %v5068
          %5575 = vmatpush2.bf16.msra.mxu0 %v5067
          %5576 = vmatprep.subr.bf16.mxu0 %v5064
          %5577 = vmatpush2.bf16.msra.mxu0 %v5063
          %5578 = vmatprep.subr.bf16.mxu0 %v5060
          %5579 = vmatpush2.bf16.msra.mxu0 %v5059
          %5580 = vmatprep.subr.bf16.mxu0 %v5056
          %5581 = vmatpush2.bf16.msra.mxu0 %v5055
          %5582 = vmatprep.subr.bf16.mxu0 %v5052
          %5583 = vmatpush2.bf16.msra.mxu0 %v5051
          %5584 = vmatprep.mubr.bf16.mxu0 %v3987
          %5585 = vmatmul.mubr.bf16.gmra.mxu0 %v3986
          %v5586 = vpop.f32.mrf.mxu0
          %v5587 = vadd.f32 %v5535, %v5586
          %v5588 = vpop.f32.mrf.mxu0
          %v5589 = vadd.f32 %v5539, %v5588
          %v5590 = vpop.f32.mrf.mxu0
          %v5591 = vpop.f32.mrf.mxu0
          %5592 = vdwg.mxu0
          %5593 = vmatprep.subr.bf16.mxu0 %v5112
          %5594 = vmatpush1.bf16.msra.mxu0 %v5111
          %5595 = vmatprep.subr.bf16.mxu0 %v5108
          %5596 = vmatpush1.bf16.msra.mxu0 %v5107
          %5597 = vmatprep.subr.bf16.mxu0 %v5104
          %5598 = vmatpush1.bf16.msra.mxu0 %v5103
          %5599 = vmatprep.subr.bf16.mxu0 %v5100
          %5600 = vmatpush1.bf16.msra.mxu0 %v5099
          %5601 = vmatprep.subr.bf16.mxu0 %v5096
          %5602 = vmatpush1.bf16.msra.mxu0 %v5095
          %5603 = vmatprep.subr.bf16.mxu0 %v5092
          %5604 = vmatpush1.bf16.msra.mxu0 %v5091
          %5605 = vmatprep.subr.bf16.mxu0 %v5088
          %5606 = vmatpush1.bf16.msra.mxu0 %v5087
          %5607 = vmatprep.subr.bf16.mxu0 %v5084
          %5608 = vmatpush1.bf16.msra.mxu0 %v5083
          %5609 = vmatprep.subr.bf16.mxu0 %v5144
          %5610 = vmatpush2.bf16.msra.mxu0 %v5143
          %5611 = vmatprep.subr.bf16.mxu0 %v5140
          %5612 = vmatpush2.bf16.msra.mxu0 %v5139
          %5613 = vmatprep.subr.bf16.mxu0 %v5136
          %5614 = vmatpush2.bf16.msra.mxu0 %v5135
          %5615 = vmatprep.subr.bf16.mxu0 %v5132
          %5616 = vmatpush2.bf16.msra.mxu0 %v5131
          %5617 = vmatprep.subr.bf16.mxu0 %v5128
          %5618 = vmatpush2.bf16.msra.mxu0 %v5127
          %5619 = vmatprep.subr.bf16.mxu0 %v5124
          %5620 = vmatpush2.bf16.msra.mxu0 %v5123
          %5621 = vmatprep.subr.bf16.mxu0 %v5120
          %5622 = vmatpush2.bf16.msra.mxu0 %v5119
          %5623 = vmatprep.subr.bf16.mxu0 %v5116
          %5624 = vmatpush2.bf16.msra.mxu0 %v5115
          %5625 = vmatprep.mubr.bf16.mxu0 %v3989
          %5626 = vmatmul.mubr.bf16.gmra.mxu0 %v3988
          %v5627 = vpop.f32.mrf.mxu0
          %v5628 = vadd.f32 %v5587, %v5627
          %v5629 = vpop.f32.mrf.mxu0
          %v5630 = vadd.f32 %v5589, %v5629
          %v5631 = vpop.f32.mrf.mxu0
          %v5632 = vpop.f32.mrf.mxu0
          %5633 = vdwg.mxu0
          %5634 = vmatprep.subr.bf16.mxu0 %v5176
          %5635 = vmatpush1.bf16.msra.mxu0 %v5175
          %5636 = vmatprep.subr.bf16.mxu0 %v5172
          %5637 = vmatpush1.bf16.msra.mxu0 %v5171
          %5638 = vmatprep.subr.bf16.mxu0 %v5168
          %5639 = vmatpush1.bf16.msra.mxu0 %v5167
          %5640 = vmatprep.subr.bf16.mxu0 %v5164
          %5641 = vmatpush1.bf16.msra.mxu0 %v5163
          %5642 = vmatprep.subr.bf16.mxu0 %v5160
          %5643 = vmatpush1.bf16.msra.mxu0 %v5159
          %5644 = vmatprep.subr.bf16.mxu0 %v5156
          %5645 = vmatpush1.bf16.msra.mxu0 %v5155
          %5646 = vmatprep.subr.bf16.mxu0 %v5152
          %5647 = vmatpush1.bf16.msra.mxu0 %v5151
          %5648 = vmatprep.subr.bf16.mxu0 %v5148
          %5649 = vmatpush1.bf16.msra.mxu0 %v5147
          %5650 = vmatprep.subr.bf16.mxu0 %v5208
          %5651 = vmatpush2.bf16.msra.mxu0 %v5207
          %5652 = vmatprep.subr.bf16.mxu0 %v5204
          %5653 = vmatpush2.bf16.msra.mxu0 %v5203
          %5654 = vmatprep.subr.bf16.mxu0 %v5200
          %5655 = vmatpush2.bf16.msra.mxu0 %v5199
          %5656 = vmatprep.subr.bf16.mxu0 %v5196
          %5657 = vmatpush2.bf16.msra.mxu0 %v5195
          %5658 = vmatprep.subr.bf16.mxu0 %v5192
          %5659 = vmatpush2.bf16.msra.mxu0 %v5191
          %5660 = vmatprep.subr.bf16.mxu0 %v5188
          %5661 = vmatpush2.bf16.msra.mxu0 %v5187
          %5662 = vmatprep.subr.bf16.mxu0 %v5184
          %5663 = vmatpush2.bf16.msra.mxu0 %v5183
          %5664 = vmatprep.subr.bf16.mxu0 %v5180
          %5665 = vmatpush2.bf16.msra.mxu0 %v5179
          %5666 = vmatprep.mubr.bf16.mxu0 %v3991
          %5667 = vmatmul.mubr.bf16.gmra.mxu0 %v3990
          %v5668 = vpop.f32.mrf.mxu0
          %v5669 = vadd.f32 %v5628, %v5668
          %v5670 = vpop.f32.mrf.mxu0
          %v5671 = vadd.f32 %v5630, %v5670
          %v5672 = vpop.f32.mrf.mxu0
          %v5673 = vpop.f32.mrf.mxu0
          %5674 = vdwg.mxu0
          %5675 = vmatprep.subr.bf16.mxu0 %v5240
          %5676 = vmatpush1.bf16.msra.mxu0 %v5239
          %5677 = vmatprep.subr.bf16.mxu0 %v5236
          %5678 = vmatpush1.bf16.msra.mxu0 %v5235
          %5679 = vmatprep.subr.bf16.mxu0 %v5232
          %5680 = vmatpush1.bf16.msra.mxu0 %v5231
          %5681 = vmatprep.subr.bf16.mxu0 %v5228
          %5682 = vmatpush1.bf16.msra.mxu0 %v5227
          %5683 = vmatprep.subr.bf16.mxu0 %v5224
          %5684 = vmatpush1.bf16.msra.mxu0 %v5223
          %5685 = vmatprep.subr.bf16.mxu0 %v5220
          %5686 = vmatpush1.bf16.msra.mxu0 %v5219
          %5687 = vmatprep.subr.bf16.mxu0 %v5216
          %5688 = vmatpush1.bf16.msra.mxu0 %v5215
          %5689 = vmatprep.subr.bf16.mxu0 %v5212
          %5690 = vmatpush1.bf16.msra.mxu0 %v5211
          %5691 = vmatprep.subr.bf16.mxu0 %v5272
          %5692 = vmatpush2.bf16.msra.mxu0 %v5271
          %5693 = vmatprep.subr.bf16.mxu0 %v5268
          %5694 = vmatpush2.bf16.msra.mxu0 %v5267
          %5695 = vmatprep.subr.bf16.mxu0 %v5264
          %5696 = vmatpush2.bf16.msra.mxu0 %v5263
          %5697 = vmatprep.subr.bf16.mxu0 %v5260
          %5698 = vmatpush2.bf16.msra.mxu0 %v5259
          %5699 = vmatprep.subr.bf16.mxu0 %v5256
          %5700 = vmatpush2.bf16.msra.mxu0 %v5255
          %5701 = vmatprep.subr.bf16.mxu0 %v5252
          %5702 = vmatpush2.bf16.msra.mxu0 %v5251
          %5703 = vmatprep.subr.bf16.mxu0 %v5248
          %5704 = vmatpush2.bf16.msra.mxu0 %v5247
          %5705 = vmatprep.subr.bf16.mxu0 %v5244
          %5706 = vmatpush2.bf16.msra.mxu0 %v5243
          %5707 = vmatprep.mubr.bf16.mxu0 %v3993
          %5708 = vmatmul.mubr.bf16.gmra.mxu0 %v3992
          %v5709 = vpop.f32.mrf.mxu0
          %v5710 = vadd.f32 %v5669, %v5709
          %v5711 = vpop.f32.mrf.mxu0
          %v5712 = vadd.f32 %v5671, %v5711
          %v5713 = vpop.f32.mrf.mxu0
          %v5714 = vpop.f32.mrf.mxu0
          %5715 = vdwg.mxu0
          %5716 = vmatprep.subr.bf16.mxu0 %v5050
          %5717 = vmatpush1.bf16.msra.mxu0 %v5049
          %5718 = vmatprep.subr.bf16.mxu0 %v5046
          %5719 = vmatpush1.bf16.msra.mxu0 %v5045
          %5720 = vmatprep.subr.bf16.mxu0 %v5042
          %5721 = vmatpush1.bf16.msra.mxu0 %v5041
          %5722 = vmatprep.subr.bf16.mxu0 %v5038
          %5723 = vmatpush1.bf16.msra.mxu0 %v5037
          %5724 = vmatprep.subr.bf16.mxu0 %v5034
          %5725 = vmatpush1.bf16.msra.mxu0 %v5033
          %5726 = vmatprep.subr.bf16.mxu0 %v5030
          %5727 = vmatpush1.bf16.msra.mxu0 %v5029
          %5728 = vmatprep.subr.bf16.mxu0 %v5026
          %5729 = vmatpush1.bf16.msra.mxu0 %v5025
          %5730 = vmatprep.subr.bf16.mxu0 %v5022
          %5731 = vmatpush1.bf16.msra.mxu0 %v5021
          %5732 = vmatprep.subr.bf16.mxu0 %v5082
          %5733 = vmatpush2.bf16.msra.mxu0 %v5081
          %5734 = vmatprep.subr.bf16.mxu0 %v5078
          %5735 = vmatpush2.bf16.msra.mxu0 %v5077
          %5736 = vmatprep.subr.bf16.mxu0 %v5074
          %5737 = vmatpush2.bf16.msra.mxu0 %v5073
          %5738 = vmatprep.subr.bf16.mxu0 %v5070
          %5739 = vmatpush2.bf16.msra.mxu0 %v5069
          %5740 = vmatprep.subr.bf16.mxu0 %v5066
          %5741 = vmatpush2.bf16.msra.mxu0 %v5065
          %5742 = vmatprep.subr.bf16.mxu0 %v5062
          %5743 = vmatpush2.bf16.msra.mxu0 %v5061
          %5744 = vmatprep.subr.bf16.mxu0 %v5058
          %5745 = vmatpush2.bf16.msra.mxu0 %v5057
          %5746 = vmatprep.subr.bf16.mxu0 %v5054
          %5747 = vmatpush2.bf16.msra.mxu0 %v5053
          %5748 = vmatprep.mubr.bf16.mxu0 %v3987
          %5749 = vmatmul.mubr.bf16.gmra.mxu0 %v3986
          %v5750 = vpop.f32.mrf.mxu0
          %v5751 = vadd.f32 %v5543, %v5750
          %v5752 = vpop.f32.mrf.mxu0
          %v5753 = vadd.f32 %v5547, %v5752
          %v5754 = vpop.f32.mrf.mxu0
          %v5755 = vpop.f32.mrf.mxu0
          %5756 = vdwg.mxu0
          %5757 = vmatprep.subr.bf16.mxu0 %v5114
          %5758 = vmatpush1.bf16.msra.mxu0 %v5113
          %5759 = vmatprep.subr.bf16.mxu0 %v5110
          %5760 = vmatpush1.bf16.msra.mxu0 %v5109
          %5761 = vmatprep.subr.bf16.mxu0 %v5106
          %5762 = vmatpush1.bf16.msra.mxu0 %v5105
          %5763 = vmatprep.subr.bf16.mxu0 %v5102
          %5764 = vmatpush1.bf16.msra.mxu0 %v5101
          %5765 = vmatprep.subr.bf16.mxu0 %v5098
          %5766 = vmatpush1.bf16.msra.mxu0 %v5097
          %5767 = vmatprep.subr.bf16.mxu0 %v5094
          %5768 = vmatpush1.bf16.msra.mxu0 %v5093
          %5769 = vmatprep.subr.bf16.mxu0 %v5090
          %5770 = vmatpush1.bf16.msra.mxu0 %v5089
          %5771 = vmatprep.subr.bf16.mxu0 %v5086
          %5772 = vmatpush1.bf16.msra.mxu0 %v5085
          %5773 = vmatprep.subr.bf16.mxu0 %v5146
          %5774 = vmatpush2.bf16.msra.mxu0 %v5145
          %5775 = vmatprep.subr.bf16.mxu0 %v5142
          %5776 = vmatpush2.bf16.msra.mxu0 %v5141
          %5777 = vmatprep.subr.bf16.mxu0 %v5138
          %5778 = vmatpush2.bf16.msra.mxu0 %v5137
          %5779 = vmatprep.subr.bf16.mxu0 %v5134
          %5780 = vmatpush2.bf16.msra.mxu0 %v5133
          %5781 = vmatprep.subr.bf16.mxu0 %v5130
          %5782 = vmatpush2.bf16.msra.mxu0 %v5129
          %5783 = vmatprep.subr.bf16.mxu0 %v5126
          %5784 = vmatpush2.bf16.msra.mxu0 %v5125
          %5785 = vmatprep.subr.bf16.mxu0 %v5122
          %5786 = vmatpush2.bf16.msra.mxu0 %v5121
          %5787 = vmatprep.subr.bf16.mxu0 %v5118
          %5788 = vmatpush2.bf16.msra.mxu0 %v5117
          %5789 = vmatprep.mubr.bf16.mxu0 %v3989
          %5790 = vmatmul.mubr.bf16.gmra.mxu0 %v3988
          %v5791 = vpop.f32.mrf.mxu0
          %v5792 = vadd.f32 %v5751, %v5791
          %v5793 = vpop.f32.mrf.mxu0
          %v5794 = vadd.f32 %v5753, %v5793
          %v5795 = vpop.f32.mrf.mxu0
          %v5796 = vpop.f32.mrf.mxu0
          %5797 = vdwg.mxu0
          %5798 = vmatprep.subr.bf16.mxu0 %v5178
          %5799 = vmatpush1.bf16.msra.mxu0 %v5177
          %5800 = vmatprep.subr.bf16.mxu0 %v5174
          %5801 = vmatpush1.bf16.msra.mxu0 %v5173
          %5802 = vmatprep.subr.bf16.mxu0 %v5170
          %5803 = vmatpush1.bf16.msra.mxu0 %v5169
          %5804 = vmatprep.subr.bf16.mxu0 %v5166
          %5805 = vmatpush1.bf16.msra.mxu0 %v5165
          %5806 = vmatprep.subr.bf16.mxu0 %v5162
          %5807 = vmatpush1.bf16.msra.mxu0 %v5161
          %5808 = vmatprep.subr.bf16.mxu0 %v5158
          %5809 = vmatpush1.bf16.msra.mxu0 %v5157
          %5810 = vmatprep.subr.bf16.mxu0 %v5154
          %5811 = vmatpush1.bf16.msra.mxu0 %v5153
          %5812 = vmatprep.subr.bf16.mxu0 %v5150
          %5813 = vmatpush1.bf16.msra.mxu0 %v5149
          %5814 = vmatprep.subr.bf16.mxu0 %v5210
          %5815 = vmatpush2.bf16.msra.mxu0 %v5209
          %5816 = vmatprep.subr.bf16.mxu0 %v5206
          %5817 = vmatpush2.bf16.msra.mxu0 %v5205
          %5818 = vmatprep.subr.bf16.mxu0 %v5202
          %5819 = vmatpush2.bf16.msra.mxu0 %v5201
          %5820 = vmatprep.subr.bf16.mxu0 %v5198
          %5821 = vmatpush2.bf16.msra.mxu0 %v5197
          %5822 = vmatprep.subr.bf16.mxu0 %v5194
          %5823 = vmatpush2.bf16.msra.mxu0 %v5193
          %5824 = vmatprep.subr.bf16.mxu0 %v5190
          %5825 = vmatpush2.bf16.msra.mxu0 %v5189
          %5826 = vmatprep.subr.bf16.mxu0 %v5186
          %5827 = vmatpush2.bf16.msra.mxu0 %v5185
          %5828 = vmatprep.subr.bf16.mxu0 %v5182
          %5829 = vmatpush2.bf16.msra.mxu0 %v5181
          %5830 = vmatprep.mubr.bf16.mxu0 %v3991
          %5831 = vmatmul.mubr.bf16.gmra.mxu0 %v3990
          %v5832 = vpop.f32.mrf.mxu0
          %v5833 = vadd.f32 %v5792, %v5832
          %v5834 = vpop.f32.mrf.mxu0
          %v5835 = vadd.f32 %v5794, %v5834
          %v5836 = vpop.f32.mrf.mxu0
          %v5837 = vpop.f32.mrf.mxu0
          %5838 = vdwg.mxu0
          %5839 = vmatprep.subr.bf16.mxu0 %v5242
          %5840 = vmatpush1.bf16.msra.mxu0 %v5241
          %5841 = vmatprep.subr.bf16.mxu0 %v5238
          %5842 = vmatpush1.bf16.msra.mxu0 %v5237
          %5843 = vmatprep.subr.bf16.mxu0 %v5234
          %5844 = vmatpush1.bf16.msra.mxu0 %v5233
          %5845 = vmatprep.subr.bf16.mxu0 %v5230
          %5846 = vmatpush1.bf16.msra.mxu0 %v5229
          %5847 = vmatprep.subr.bf16.mxu0 %v5226
          %5848 = vmatpush1.bf16.msra.mxu0 %v5225
          %5849 = vmatprep.subr.bf16.mxu0 %v5222
          %5850 = vmatpush1.bf16.msra.mxu0 %v5221
          %5851 = vmatprep.subr.bf16.mxu0 %v5218
          %5852 = vmatpush1.bf16.msra.mxu0 %v5217
          %5853 = vmatprep.subr.bf16.mxu0 %v5214
          %5854 = vmatpush1.bf16.msra.mxu0 %v5213
          %5855 = vmatprep.subr.bf16.mxu0 %v5274
          %5856 = vmatpush2.bf16.msra.mxu0 %v5273
          %5857 = vmatprep.subr.bf16.mxu0 %v5270
          %5858 = vmatpush2.bf16.msra.mxu0 %v5269
          %5859 = vmatprep.subr.bf16.mxu0 %v5266
          %5860 = vmatpush2.bf16.msra.mxu0 %v5265
          %5861 = vmatprep.subr.bf16.mxu0 %v5262
          %5862 = vmatpush2.bf16.msra.mxu0 %v5261
          %5863 = vmatprep.subr.bf16.mxu0 %v5258
          %5864 = vmatpush2.bf16.msra.mxu0 %v5257
          %5865 = vmatprep.subr.bf16.mxu0 %v5254
          %5866 = vmatpush2.bf16.msra.mxu0 %v5253
          %5867 = vmatprep.subr.bf16.mxu0 %v5250
          %5868 = vmatpush2.bf16.msra.mxu0 %v5249
          %5869 = vmatprep.subr.bf16.mxu0 %v5246
          %5870 = vmatpush2.bf16.msra.mxu0 %v5245
          %5871 = vmatprep.mubr.bf16.mxu0 %v3993
          %5872 = vmatmul.mubr.bf16.gmra.mxu0 %v3992
          %v5873 = vpop.f32.mrf.mxu0
          %v5874 = vadd.f32 %v5833, %v5873
          %v5875 = vpop.f32.mrf.mxu0
          %v5876 = vadd.f32 %v5835, %v5875
          %v5877 = vpop.f32.mrf.mxu0
          %v5878 = vpop.f32.mrf.mxu0
          %5879 = vdwg.mxu0
          %v5880 = vmax.f32 %v5710, 0.0
          %v5881 = vmax.f32 %v5712, 0.0
          %v5882 = vmax.f32 %v5874, 0.0
          %v5883 = vmax.f32 %v5876, 0.0
          %v5884 = vpack.c.bf16 %v5880, %v5880
          %v5885 = vpack.c.bf16 %v5881, %v5881
          %v5886 = vpack.c.bf16 %v5882, %v5882
          %v5887 = vpack.c.bf16 %v5883, %v5883
          %v5888 = vld [vmem:[%s9] sm:$0xff]
          %v5889 = vld [vmem:[%s9 + $0x8] sm:$0xff]
          %v5890 = vld [vmem:[%s9 + $0x10] sm:$0xff]
          %v5891 = vld [vmem:[%s9 + $0x18] sm:$0xff]
          %v5892 = vld [vmem:[%s9 + $0x20] sm:$0xff]
          %v5893 = vld [vmem:[%s9 + $0x28] sm:$0xff]
          %v5894 = vld [vmem:[%s9 + $0x30] sm:$0xff]
          %v5895 = vld [vmem:[%s9 + $0x38] sm:$0xff]
          %v5896 = vld [vmem:[%s9 + $0x40] sm:$0xff]
          %v5897 = vld [vmem:[%s9 + $0x48] sm:$0xff]
          %v5898 = vld [vmem:[%s9 + $0x50] sm:$0xff]
          %v5899 = vld [vmem:[%s9 + $0x58] sm:$0xff]
          %v5900 = vld [vmem:[%s9 + $0x60] sm:$0xff]
          %v5901 = vld [vmem:[%s9 + $0x68] sm:$0xff]
          %v5902 = vld [vmem:[%s9 + $0x70] sm:$0xff]
          %v5903 = vld [vmem:[%s9 + $0x78] sm:$0xff]
          %v5904 = vld [vmem:[%s9 + $0x80] sm:$0xff]
          %v5905 = vld [vmem:[%s9 + $0x88] sm:$0xff]
          %v5906 = vld [vmem:[%s9 + $0x90] sm:$0xff]
          %v5907 = vld [vmem:[%s9 + $0x98] sm:$0xff]
          %v5908 = vld [vmem:[%s9 + $0xa0] sm:$0xff]
          %v5909 = vld [vmem:[%s9 + $0xa8] sm:$0xff]
          %v5910 = vld [vmem:[%s9 + $0xb0] sm:$0xff]
          %v5911 = vld [vmem:[%s9 + $0xb8] sm:$0xff]
          %v5912 = vld [vmem:[%s9 + $0xc0] sm:$0xff]
          %v5913 = vld [vmem:[%s9 + $0xc8] sm:$0xff]
          %v5914 = vld [vmem:[%s9 + $0xd0] sm:$0xff]
          %v5915 = vld [vmem:[%s9 + $0xd8] sm:$0xff]
          %v5916 = vld [vmem:[%s9 + $0xe0] sm:$0xff]
          %v5917 = vld [vmem:[%s9 + $0xe8] sm:$0xff]
          %v5918 = vld [vmem:[%s9 + $0xf0] sm:$0xff]
          %v5919 = vld [vmem:[%s9 + $0xf8] sm:$0xff]
          %v5920 = vld [vmem:[%s9 + $0x100] sm:$0xff]
          %v5921 = vld [vmem:[%s9 + $0x108] sm:$0xff]
          %v5922 = vld [vmem:[%s9 + $0x110] sm:$0xff]
          %v5923 = vld [vmem:[%s9 + $0x118] sm:$0xff]
          %v5924 = vld [vmem:[%s9 + $0x120] sm:$0xff]
          %v5925 = vld [vmem:[%s9 + $0x128] sm:$0xff]
          %v5926 = vld [vmem:[%s9 + $0x130] sm:$0xff]
          %v5927 = vld [vmem:[%s9 + $0x138] sm:$0xff]
          %v5928 = vld [vmem:[%s9 + $0x140] sm:$0xff]
          %v5929 = vld [vmem:[%s9 + $0x148] sm:$0xff]
          %v5930 = vld [vmem:[%s9 + $0x150] sm:$0xff]
          %v5931 = vld [vmem:[%s9 + $0x158] sm:$0xff]
          %v5932 = vld [vmem:[%s9 + $0x160] sm:$0xff]
          %v5933 = vld [vmem:[%s9 + $0x168] sm:$0xff]
          %v5934 = vld [vmem:[%s9 + $0x170] sm:$0xff]
          %v5935 = vld [vmem:[%s9 + $0x178] sm:$0xff]
          %v5936 = vld [vmem:[%s9 + $0x180] sm:$0xff]
          %v5937 = vld [vmem:[%s9 + $0x188] sm:$0xff]
          %v5938 = vld [vmem:[%s9 + $0x190] sm:$0xff]
          %v5939 = vld [vmem:[%s9 + $0x198] sm:$0xff]
          %v5940 = vld [vmem:[%s9 + $0x1a0] sm:$0xff]
          %v5941 = vld [vmem:[%s9 + $0x1a8] sm:$0xff]
          %v5942 = vld [vmem:[%s9 + $0x1b0] sm:$0xff]
          %v5943 = vld [vmem:[%s9 + $0x1b8] sm:$0xff]
          %v5944 = vld [vmem:[%s9 + $0x1c0] sm:$0xff]
          %v5945 = vld [vmem:[%s9 + $0x1c8] sm:$0xff]
          %v5946 = vld [vmem:[%s9 + $0x1d0] sm:$0xff]
          %v5947 = vld [vmem:[%s9 + $0x1d8] sm:$0xff]
          %v5948 = vld [vmem:[%s9 + $0x1e0] sm:$0xff]
          %v5949 = vld [vmem:[%s9 + $0x1e8] sm:$0xff]
          %v5950 = vld [vmem:[%s9 + $0x1f0] sm:$0xff]
          %v5951 = vld [vmem:[%s9 + $0x1f8] sm:$0xff]
          %v5952 = vld [vmem:[%s10] sm:$0x3]
          %v6017 = vunpack.c.l.b16 %v5888
          %v6018 = vunpack.c.h.b16 %v5888
          %v6019 = vunpack.c.l.b16 %v5889
          %v6020 = vunpack.c.h.b16 %v5889
          %v6021 = vunpack.c.l.b16 %v5890
          %v6022 = vunpack.c.h.b16 %v5890
          %v6023 = vunpack.c.l.b16 %v5891
          %v6024 = vunpack.c.h.b16 %v5891
          %v6025 = vunpack.c.l.b16 %v5892
          %v6026 = vunpack.c.h.b16 %v5892
          %v6027 = vunpack.c.l.b16 %v5893
          %v6028 = vunpack.c.h.b16 %v5893
          %v6029 = vunpack.c.l.b16 %v5894
          %v6030 = vunpack.c.h.b16 %v5894
          %v6031 = vunpack.c.l.b16 %v5895
          %v6032 = vunpack.c.h.b16 %v5895
          %v6033 = vunpack.c.l.b16 %v5896
          %v6034 = vunpack.c.h.b16 %v5896
          %v6035 = vunpack.c.l.b16 %v5897
          %v6036 = vunpack.c.h.b16 %v5897
          %v6037 = vunpack.c.l.b16 %v5898
          %v6038 = vunpack.c.h.b16 %v5898
          %v6039 = vunpack.c.l.b16 %v5899
          %v6040 = vunpack.c.h.b16 %v5899
          %v6041 = vunpack.c.l.b16 %v5900
          %v6042 = vunpack.c.h.b16 %v5900
          %v6043 = vunpack.c.l.b16 %v5901
          %v6044 = vunpack.c.h.b16 %v5901
          %v6045 = vunpack.c.l.b16 %v5902
          %v6046 = vunpack.c.h.b16 %v5902
          %v6047 = vunpack.c.l.b16 %v5903
          %v6048 = vunpack.c.h.b16 %v5903
          %v6049 = vunpack.c.l.b16 %v5904
          %v6050 = vunpack.c.h.b16 %v5904
          %v6051 = vunpack.c.l.b16 %v5905
          %v6052 = vunpack.c.h.b16 %v5905
          %v6053 = vunpack.c.l.b16 %v5906
          %v6054 = vunpack.c.h.b16 %v5906
          %v6055 = vunpack.c.l.b16 %v5907
          %v6056 = vunpack.c.h.b16 %v5907
          %v6057 = vunpack.c.l.b16 %v5908
          %v6058 = vunpack.c.h.b16 %v5908
          %v6059 = vunpack.c.l.b16 %v5909
          %v6060 = vunpack.c.h.b16 %v5909
          %v6061 = vunpack.c.l.b16 %v5910
          %v6062 = vunpack.c.h.b16 %v5910
          %v6063 = vunpack.c.l.b16 %v5911
          %v6064 = vunpack.c.h.b16 %v5911
          %v6065 = vunpack.c.l.b16 %v5912
          %v6066 = vunpack.c.h.b16 %v5912
          %v6067 = vunpack.c.l.b16 %v5913
          %v6068 = vunpack.c.h.b16 %v5913
          %v6069 = vunpack.c.l.b16 %v5914
          %v6070 = vunpack.c.h.b16 %v5914
          %v6071 = vunpack.c.l.b16 %v5915
          %v6072 = vunpack.c.h.b16 %v5915
          %v6073 = vunpack.c.l.b16 %v5916
          %v6074 = vunpack.c.h.b16 %v5916
          %v6075 = vunpack.c.l.b16 %v5917
          %v6076 = vunpack.c.h.b16 %v5917
          %v6077 = vunpack.c.l.b16 %v5918
          %v6078 = vunpack.c.h.b16 %v5918
          %v6079 = vunpack.c.l.b16 %v5919
          %v6080 = vunpack.c.h.b16 %v5919
          %v6081 = vunpack.c.l.b16 %v5920
          %v6082 = vunpack.c.h.b16 %v5920
          %v6083 = vunpack.c.l.b16 %v5921
          %v6084 = vunpack.c.h.b16 %v5921
          %v6085 = vunpack.c.l.b16 %v5922
          %v6086 = vunpack.c.h.b16 %v5922
          %v6087 = vunpack.c.l.b16 %v5923
          %v6088 = vunpack.c.h.b16 %v5923
          %v6089 = vunpack.c.l.b16 %v5924
          %v6090 = vunpack.c.h.b16 %v5924
          %v6091 = vunpack.c.l.b16 %v5925
          %v6092 = vunpack.c.h.b16 %v5925
          %v6093 = vunpack.c.l.b16 %v5926
          %v6094 = vunpack.c.h.b16 %v5926
          %v6095 = vunpack.c.l.b16 %v5927
          %v6096 = vunpack.c.h.b16 %v5927
          %v6097 = vunpack.c.l.b16 %v5928
          %v6098 = vunpack.c.h.b16 %v5928
          %v6099 = vunpack.c.l.b16 %v5929
          %v6100 = vunpack.c.h.b16 %v5929
          %v6101 = vunpack.c.l.b16 %v5930
          %v6102 = vunpack.c.h.b16 %v5930
          %v6103 = vunpack.c.l.b16 %v5931
          %v6104 = vunpack.c.h.b16 %v5931
          %v6105 = vunpack.c.l.b16 %v5932
          %v6106 = vunpack.c.h.b16 %v5932
          %v6107 = vunpack.c.l.b16 %v5933
          %v6108 = vunpack.c.h.b16 %v5933
          %v6109 = vunpack.c.l.b16 %v5934
          %v6110 = vunpack.c.h.b16 %v5934
          %v6111 = vunpack.c.l.b16 %v5935
          %v6112 = vunpack.c.h.b16 %v5935
          %v6113 = vunpack.c.l.b16 %v5936
          %v6114 = vunpack.c.h.b16 %v5936
          %v6115 = vunpack.c.l.b16 %v5937
          %v6116 = vunpack.c.h.b16 %v5937
          %v6117 = vunpack.c.l.b16 %v5938
          %v6118 = vunpack.c.h.b16 %v5938
          %v6119 = vunpack.c.l.b16 %v5939
          %v6120 = vunpack.c.h.b16 %v5939
          %v6121 = vunpack.c.l.b16 %v5940
          %v6122 = vunpack.c.h.b16 %v5940
          %v6123 = vunpack.c.l.b16 %v5941
          %v6124 = vunpack.c.h.b16 %v5941
          %v6125 = vunpack.c.l.b16 %v5942
          %v6126 = vunpack.c.h.b16 %v5942
          %v6127 = vunpack.c.l.b16 %v5943
          %v6128 = vunpack.c.h.b16 %v5943
          %v6129 = vunpack.c.l.b16 %v5944
          %v6130 = vunpack.c.h.b16 %v5944
          %v6131 = vunpack.c.l.b16 %v5945
          %v6132 = vunpack.c.h.b16 %v5945
          %v6133 = vunpack.c.l.b16 %v5946
          %v6134 = vunpack.c.h.b16 %v5946
          %v6135 = vunpack.c.l.b16 %v5947
          %v6136 = vunpack.c.h.b16 %v5947
          %v6137 = vunpack.c.l.b16 %v5948
          %v6138 = vunpack.c.h.b16 %v5948
          %v6139 = vunpack.c.l.b16 %v5949
          %v6140 = vunpack.c.h.b16 %v5949
          %v6141 = vunpack.c.l.b16 %v5950
          %v6142 = vunpack.c.h.b16 %v5950
          %v6143 = vunpack.c.l.b16 %v5951
          %v6144 = vunpack.c.h.b16 %v5951
          %v6145 = vpack.c.b16 %v6019, %v6017
          %v6146 = vpack.c.b16 %v6020, %v6018
          %v6147 = vpack.c.b16 %v6023, %v6021
          %v6148 = vpack.c.b16 %v6024, %v6022
          %v6149 = vpack.c.b16 %v6027, %v6025
          %v6150 = vpack.c.b16 %v6028, %v6026
          %v6151 = vpack.c.b16 %v6031, %v6029
          %v6152 = vpack.c.b16 %v6032, %v6030
          %v6153 = vpack.c.b16 %v6035, %v6033
          %v6154 = vpack.c.b16 %v6036, %v6034
          %v6155 = vpack.c.b16 %v6039, %v6037
          %v6156 = vpack.c.b16 %v6040, %v6038
          %v6157 = vpack.c.b16 %v6043, %v6041
          %v6158 = vpack.c.b16 %v6044, %v6042
          %v6159 = vpack.c.b16 %v6047, %v6045
          %v6160 = vpack.c.b16 %v6048, %v6046
          %v6161 = vpack.c.b16 %v6051, %v6049
          %v6162 = vpack.c.b16 %v6052, %v6050
          %v6163 = vpack.c.b16 %v6055, %v6053
          %v6164 = vpack.c.b16 %v6056, %v6054
          %v6165 = vpack.c.b16 %v6059, %v6057
          %v6166 = vpack.c.b16 %v6060, %v6058
          %v6167 = vpack.c.b16 %v6063, %v6061
          %v6168 = vpack.c.b16 %v6064, %v6062
          %v6169 = vpack.c.b16 %v6067, %v6065
          %v6170 = vpack.c.b16 %v6068, %v6066
          %v6171 = vpack.c.b16 %v6071, %v6069
          %v6172 = vpack.c.b16 %v6072, %v6070
          %v6173 = vpack.c.b16 %v6075, %v6073
          %v6174 = vpack.c.b16 %v6076, %v6074
          %v6175 = vpack.c.b16 %v6079, %v6077
          %v6176 = vpack.c.b16 %v6080, %v6078
          %v6177 = vpack.c.b16 %v6083, %v6081
          %v6178 = vpack.c.b16 %v6084, %v6082
          %v6179 = vpack.c.b16 %v6087, %v6085
          %v6180 = vpack.c.b16 %v6088, %v6086
          %v6181 = vpack.c.b16 %v6091, %v6089
          %v6182 = vpack.c.b16 %v6092, %v6090
          %v6183 = vpack.c.b16 %v6095, %v6093
          %v6184 = vpack.c.b16 %v6096, %v6094
          %v6185 = vpack.c.b16 %v6099, %v6097
          %v6186 = vpack.c.b16 %v6100, %v6098
          %v6187 = vpack.c.b16 %v6103, %v6101
          %v6188 = vpack.c.b16 %v6104, %v6102
          %v6189 = vpack.c.b16 %v6107, %v6105
          %v6190 = vpack.c.b16 %v6108, %v6106
          %v6191 = vpack.c.b16 %v6111, %v6109
          %v6192 = vpack.c.b16 %v6112, %v6110
          %v6193 = vpack.c.b16 %v6115, %v6113
          %v6194 = vpack.c.b16 %v6116, %v6114
          %v6195 = vpack.c.b16 %v6119, %v6117
          %v6196 = vpack.c.b16 %v6120, %v6118
          %v6197 = vpack.c.b16 %v6123, %v6121
          %v6198 = vpack.c.b16 %v6124, %v6122
          %v6199 = vpack.c.b16 %v6127, %v6125
          %v6200 = vpack.c.b16 %v6128, %v6126
          %v6201 = vpack.c.b16 %v6131, %v6129
          %v6202 = vpack.c.b16 %v6132, %v6130
          %v6203 = vpack.c.b16 %v6135, %v6133
          %v6204 = vpack.c.b16 %v6136, %v6134
          %v6205 = vpack.c.b16 %v6139, %v6137
          %v6206 = vpack.c.b16 %v6140, %v6138
          %v6207 = vpack.c.b16 %v6143, %v6141
          %v6208 = vpack.c.b16 %v6144, %v6142
          %v6274 = vlaneseq
          %v6275 = vshrl.u32 %v6274, 7
          %v6276 = vsub.s32 0, %v6275
          %v6277 = vrot.slane %v5952, %v6276
          %v6278 = vlaneseq
          %v6279 = vshrl.u32 %v6278, 7
          %v6280 = vsub.s32 1, %v6279
          %v6281 = vrot.slane %v5952, %v6280
          %6284 = vmatprep.subr.bf16.mxu0 %v6160
          %6285 = vmatpush1.bf16.msra.mxu0 %v6159
          %6286 = vmatprep.subr.bf16.mxu0 %v6158
          %6287 = vmatpush1.bf16.msra.mxu0 %v6157
          %6288 = vmatprep.subr.bf16.mxu0 %v6156
          %6289 = vmatpush1.bf16.msra.mxu0 %v6155
          %6290 = vmatprep.subr.bf16.mxu0 %v6154
          %6291 = vmatpush1.bf16.msra.mxu0 %v6153
          %6292 = vmatprep.subr.bf16.mxu0 %v6152
          %6293 = vmatpush1.bf16.msra.mxu0 %v6151
          %6294 = vmatprep.subr.bf16.mxu0 %v6150
          %6295 = vmatpush1.bf16.msra.mxu0 %v6149
          %6296 = vmatprep.subr.bf16.mxu0 %v6148
          %6297 = vmatpush1.bf16.msra.mxu0 %v6147
          %6298 = vmatprep.subr.bf16.mxu0 %v6146
          %6299 = vmatpush1.bf16.msra.mxu0 %v6145
          %6300 = vmatprep.subr.bf16.mxu0 %v6176
          %6301 = vmatpush2.bf16.msra.mxu0 %v6175
          %6302 = vmatprep.subr.bf16.mxu0 %v6174
          %6303 = vmatpush2.bf16.msra.mxu0 %v6173
          %6304 = vmatprep.subr.bf16.mxu0 %v6172
          %6305 = vmatpush2.bf16.msra.mxu0 %v6171
          %6306 = vmatprep.subr.bf16.mxu0 %v6170
          %6307 = vmatpush2.bf16.msra.mxu0 %v6169
          %6308 = vmatprep.subr.bf16.mxu0 %v6168
          %6309 = vmatpush2.bf16.msra.mxu0 %v6167
          %6310 = vmatprep.subr.bf16.mxu0 %v6166
          %6311 = vmatpush2.bf16.msra.mxu0 %v6165
          %6312 = vmatprep.subr.bf16.mxu0 %v6164
          %6313 = vmatpush2.bf16.msra.mxu0 %v6163
          %6314 = vmatprep.subr.bf16.mxu0 %v6162
          %6315 = vmatpush2.bf16.msra.mxu0 %v6161
          %6316 = vmatprep.mubr.bf16.mxu0 %v5885
          %6317 = vmatmul.mubr.bf16.gmra.mxu0 %v5884
          %v6318 = vpop.f32.mrf.mxu0
          %v6319 = vadd.f32 %v6277, %v6318
          %v6320 = vpop.f32.mrf.mxu0
          %v6321 = vadd.f32 %v6281, %v6320
          %v6322 = vpop.f32.mrf.mxu0
          %v6323 = vpop.f32.mrf.mxu0
          %6324 = vdwg.mxu0
          %6325 = vmatprep.subr.bf16.mxu0 %v6192
          %6326 = vmatpush1.bf16.msra.mxu0 %v6191
          %6327 = vmatprep.subr.bf16.mxu0 %v6190
          %6328 = vmatpush1.bf16.msra.mxu0 %v6189
          %6329 = vmatprep.subr.bf16.mxu0 %v6188
          %6330 = vmatpush1.bf16.msra.mxu0 %v6187
          %6331 = vmatprep.subr.bf16.mxu0 %v6186
          %6332 = vmatpush1.bf16.msra.mxu0 %v6185
          %6333 = vmatprep.subr.bf16.mxu0 %v6184
          %6334 = vmatpush1.bf16.msra.mxu0 %v6183
          %6335 = vmatprep.subr.bf16.mxu0 %v6182
          %6336 = vmatpush1.bf16.msra.mxu0 %v6181
          %6337 = vmatprep.subr.bf16.mxu0 %v6180
          %6338 = vmatpush1.bf16.msra.mxu0 %v6179
          %6339 = vmatprep.subr.bf16.mxu0 %v6178
          %6340 = vmatpush1.bf16.msra.mxu0 %v6177
          %6341 = vmatprep.subr.bf16.mxu0 %v6208
          %6342 = vmatpush2.bf16.msra.mxu0 %v6207
          %6343 = vmatprep.subr.bf16.mxu0 %v6206
          %6344 = vmatpush2.bf16.msra.mxu0 %v6205
          %6345 = vmatprep.subr.bf16.mxu0 %v6204
          %6346 = vmatpush2.bf16.msra.mxu0 %v6203
          %6347 = vmatprep.subr.bf16.mxu0 %v6202
          %6348 = vmatpush2.bf16.msra.mxu0 %v6201
          %6349 = vmatprep.subr.bf16.mxu0 %v6200
          %6350 = vmatpush2.bf16.msra.mxu0 %v6199
          %6351 = vmatprep.subr.bf16.mxu0 %v6198
          %6352 = vmatpush2.bf16.msra.mxu0 %v6197
          %6353 = vmatprep.subr.bf16.mxu0 %v6196
          %6354 = vmatpush2.bf16.msra.mxu0 %v6195
          %6355 = vmatprep.subr.bf16.mxu0 %v6194
          %6356 = vmatpush2.bf16.msra.mxu0 %v6193
          %6357 = vmatprep.mubr.bf16.mxu0 %v5887
          %6358 = vmatmul.mubr.bf16.gmra.mxu0 %v5886
          %v6359 = vpop.f32.mrf.mxu0
          %v6360 = vadd.f32 %v6319, %v6359
          %v6361 = vpop.f32.mrf.mxu0
          %v6362 = vadd.f32 %v6321, %v6361
          %v6363 = vpop.f32.mrf.mxu0
          %v6364 = vpop.f32.mrf.mxu0
          %6365 = vdwg.mxu0
          %v6366 = vmax.f32 %v6360, 0.0
          %v6367 = vmax.f32 %v6362, 0.0
          %v6368 = vpack.c.bf16 %v6366, %v6366
          %v6369 = vpack.c.bf16 %v6367, %v6367
          %v6370 = vld [vmem:[%s11] sm:$0xff]
          %v6371 = vld [vmem:[%s11 + $0x8] sm:$0xff]
          %v6372 = vld [vmem:[%s11 + $0x10] sm:$0xff]
          %v6373 = vld [vmem:[%s11 + $0x18] sm:$0xff]
          %v6374 = vld [vmem:[%s11 + $0x20] sm:$0xff]
          %v6375 = vld [vmem:[%s11 + $0x28] sm:$0xff]
          %v6376 = vld [vmem:[%s11 + $0x30] sm:$0xff]
          %v6377 = vld [vmem:[%s11 + $0x38] sm:$0xff]
          %v6378 = vld [vmem:[%s11 + $0x40] sm:$0xff]
          %v6379 = vld [vmem:[%s11 + $0x48] sm:$0xff]
          %v6380 = vld [vmem:[%s11 + $0x50] sm:$0xff]
          %v6381 = vld [vmem:[%s11 + $0x58] sm:$0xff]
          %v6382 = vld [vmem:[%s11 + $0x60] sm:$0xff]
          %v6383 = vld [vmem:[%s11 + $0x68] sm:$0xff]
          %v6384 = vld [vmem:[%s11 + $0x70] sm:$0xff]
          %v6385 = vld [vmem:[%s11 + $0x78] sm:$0xff]
          %v6386 = vld [vmem:[%s11 + $0x80] sm:$0xff]
          %v6387 = vld [vmem:[%s11 + $0x88] sm:$0xff]
          %v6388 = vld [vmem:[%s11 + $0x90] sm:$0xff]
          %v6389 = vld [vmem:[%s11 + $0x98] sm:$0xff]
          %v6390 = vld [vmem:[%s11 + $0xa0] sm:$0xff]
          %v6391 = vld [vmem:[%s11 + $0xa8] sm:$0xff]
          %v6392 = vld [vmem:[%s11 + $0xb0] sm:$0xff]
          %v6393 = vld [vmem:[%s11 + $0xb8] sm:$0xff]
          %v6394 = vld [vmem:[%s11 + $0xc0] sm:$0xff]
          %v6395 = vld [vmem:[%s11 + $0xc8] sm:$0xff]
          %v6396 = vld [vmem:[%s11 + $0xd0] sm:$0xff]
          %v6397 = vld [vmem:[%s11 + $0xd8] sm:$0xff]
          %v6398 = vld [vmem:[%s11 + $0xe0] sm:$0xff]
          %v6399 = vld [vmem:[%s11 + $0xe8] sm:$0xff]
          %v6400 = vld [vmem:[%s11 + $0xf0] sm:$0xff]
          %v6401 = vld [vmem:[%s11 + $0xf8] sm:$0xff]
          %v6402 = vld [vmem:[%s12] sm:$0x3]
          %v6435 = vunpack.c.l.b16 %v6370
          %v6436 = vunpack.c.h.b16 %v6370
          %v6437 = vunpack.c.l.b16 %v6371
          %v6438 = vunpack.c.h.b16 %v6371
          %v6439 = vunpack.c.l.b16 %v6372
          %v6440 = vunpack.c.h.b16 %v6372
          %v6441 = vunpack.c.l.b16 %v6373
          %v6442 = vunpack.c.h.b16 %v6373
          %v6443 = vunpack.c.l.b16 %v6374
          %v6444 = vunpack.c.h.b16 %v6374
          %v6445 = vunpack.c.l.b16 %v6375
          %v6446 = vunpack.c.h.b16 %v6375
          %v6447 = vunpack.c.l.b16 %v6376
          %v6448 = vunpack.c.h.b16 %v6376
          %v6449 = vunpack.c.l.b16 %v6377
          %v6450 = vunpack.c.h.b16 %v6377
          %v6451 = vunpack.c.l.b16 %v6378
          %v6452 = vunpack.c.h.b16 %v6378
          %v6453 = vunpack.c.l.b16 %v6379
          %v6454 = vunpack.c.h.b16 %v6379
          %v6455 = vunpack.c.l.b16 %v6380
          %v6456 = vunpack.c.h.b16 %v6380
          %v6457 = vunpack.c.l.b16 %v6381
          %v6458 = vunpack.c.h.b16 %v6381
          %v6459 = vunpack.c.l.b16 %v6382
          %v6460 = vunpack.c.h.b16 %v6382
          %v6461 = vunpack.c.l.b16 %v6383
          %v6462 = vunpack.c.h.b16 %v6383
          %v6463 = vunpack.c.l.b16 %v6384
          %v6464 = vunpack.c.h.b16 %v6384
          %v6465 = vunpack.c.l.b16 %v6385
          %v6466 = vunpack.c.h.b16 %v6385
          %v6467 = vunpack.c.l.b16 %v6386
          %v6468 = vunpack.c.h.b16 %v6386
          %v6469 = vunpack.c.l.b16 %v6387
          %v6470 = vunpack.c.h.b16 %v6387
          %v6471 = vunpack.c.l.b16 %v6388
          %v6472 = vunpack.c.h.b16 %v6388
          %v6473 = vunpack.c.l.b16 %v6389
          %v6474 = vunpack.c.h.b16 %v6389
          %v6475 = vunpack.c.l.b16 %v6390
          %v6476 = vunpack.c.h.b16 %v6390
          %v6477 = vunpack.c.l.b16 %v6391
          %v6478 = vunpack.c.h.b16 %v6391
          %v6479 = vunpack.c.l.b16 %v6392
          %v6480 = vunpack.c.h.b16 %v6392
          %v6481 = vunpack.c.l.b16 %v6393
          %v6482 = vunpack.c.h.b16 %v6393
          %v6483 = vunpack.c.l.b16 %v6394
          %v6484 = vunpack.c.h.b16 %v6394
          %v6485 = vunpack.c.l.b16 %v6395
          %v6486 = vunpack.c.h.b16 %v6395
          %v6487 = vunpack.c.l.b16 %v6396
          %v6488 = vunpack.c.h.b16 %v6396
          %v6489 = vunpack.c.l.b16 %v6397
          %v6490 = vunpack.c.h.b16 %v6397
          %v6491 = vunpack.c.l.b16 %v6398
          %v6492 = vunpack.c.h.b16 %v6398
          %v6493 = vunpack.c.l.b16 %v6399
          %v6494 = vunpack.c.h.b16 %v6399
          %v6495 = vunpack.c.l.b16 %v6400
          %v6496 = vunpack.c.h.b16 %v6400
          %v6497 = vunpack.c.l.b16 %v6401
          %v6498 = vunpack.c.h.b16 %v6401
          %v6499 = vpack.c.b16 %v6437, %v6435
          %v6500 = vpack.c.b16 %v6438, %v6436
          %v6501 = vpack.c.b16 %v6441, %v6439
          %v6502 = vpack.c.b16 %v6442, %v6440
          %v6503 = vpack.c.b16 %v6445, %v6443
          %v6504 = vpack.c.b16 %v6446, %v6444
          %v6505 = vpack.c.b16 %v6449, %v6447
          %v6506 = vpack.c.b16 %v6450, %v6448
          %v6507 = vpack.c.b16 %v6453, %v6451
          %v6508 = vpack.c.b16 %v6454, %v6452
          %v6509 = vpack.c.b16 %v6457, %v6455
          %v6510 = vpack.c.b16 %v6458, %v6456
          %v6511 = vpack.c.b16 %v6461, %v6459
          %v6512 = vpack.c.b16 %v6462, %v6460
          %v6513 = vpack.c.b16 %v6465, %v6463
          %v6514 = vpack.c.b16 %v6466, %v6464
          %v6515 = vpack.c.b16 %v6469, %v6467
          %v6516 = vpack.c.b16 %v6470, %v6468
          %v6517 = vpack.c.b16 %v6473, %v6471
          %v6518 = vpack.c.b16 %v6474, %v6472
          %v6519 = vpack.c.b16 %v6477, %v6475
          %v6520 = vpack.c.b16 %v6478, %v6476
          %v6521 = vpack.c.b16 %v6481, %v6479
          %v6522 = vpack.c.b16 %v6482, %v6480
          %v6523 = vpack.c.b16 %v6485, %v6483
          %v6524 = vpack.c.b16 %v6486, %v6484
          %v6525 = vpack.c.b16 %v6489, %v6487
          %v6526 = vpack.c.b16 %v6490, %v6488
          %v6527 = vpack.c.b16 %v6493, %v6491
          %v6528 = vpack.c.b16 %v6494, %v6492
          %v6529 = vpack.c.b16 %v6497, %v6495
          %v6530 = vpack.c.b16 %v6498, %v6496
          %v6564 = vlaneseq
          %v6565 = vshrl.u32 %v6564, 7
          %v6566 = vsub.s32 0, %v6565
          %v6567 = vrot.slane %v6402, %v6566
          %v6568 = vlaneseq
          %v6569 = vshrl.u32 %v6568, 7
          %v6570 = vsub.s32 1, %v6569
          %v6571 = vrot.slane %v6402, %v6570
          %6574 = vmatprep.subr.bf16.mxu0 %v6514
          %6575 = vmatpush1.bf16.msra.mxu0 %v6513
          %6576 = vmatprep.subr.bf16.mxu0 %v6512
          %6577 = vmatpush1.bf16.msra.mxu0 %v6511
          %6578 = vmatprep.subr.bf16.mxu0 %v6510
          %6579 = vmatpush1.bf16.msra.mxu0 %v6509
          %6580 = vmatprep.subr.bf16.mxu0 %v6508
          %6581 = vmatpush1.bf16.msra.mxu0 %v6507
          %6582 = vmatprep.subr.bf16.mxu0 %v6506
          %6583 = vmatpush1.bf16.msra.mxu0 %v6505
          %6584 = vmatprep.subr.bf16.mxu0 %v6504
          %6585 = vmatpush1.bf16.msra.mxu0 %v6503
          %6586 = vmatprep.subr.bf16.mxu0 %v6502
          %6587 = vmatpush1.bf16.msra.mxu0 %v6501
          %6588 = vmatprep.subr.bf16.mxu0 %v6500
          %6589 = vmatpush1.bf16.msra.mxu0 %v6499
          %6590 = vmatprep.subr.bf16.mxu0 %v6530
          %6591 = vmatpush2.bf16.msra.mxu0 %v6529
          %6592 = vmatprep.subr.bf16.mxu0 %v6528
          %6593 = vmatpush2.bf16.msra.mxu0 %v6527
          %6594 = vmatprep.subr.bf16.mxu0 %v6526
          %6595 = vmatpush2.bf16.msra.mxu0 %v6525
          %6596 = vmatprep.subr.bf16.mxu0 %v6524
          %6597 = vmatpush2.bf16.msra.mxu0 %v6523
          %6598 = vmatprep.subr.bf16.mxu0 %v6522
          %6599 = vmatpush2.bf16.msra.mxu0 %v6521
          %6600 = vmatprep.subr.bf16.mxu0 %v6520
          %6601 = vmatpush2.bf16.msra.mxu0 %v6519
          %6602 = vmatprep.subr.bf16.mxu0 %v6518
          %6603 = vmatpush2.bf16.msra.mxu0 %v6517
          %6604 = vmatprep.subr.bf16.mxu0 %v6516
          %6605 = vmatpush2.bf16.msra.mxu0 %v6515
          %6606 = vmatprep.mubr.bf16.mxu0 %v6369
          %6607 = vmatmul.mubr.bf16.gmra.mxu0 %v6368
          %v6608 = vpop.f32.mrf.mxu0
          %v6609 = vadd.f32 %v6567, %v6608
          %v6610 = vpop.f32.mrf.mxu0
          %v6611 = vadd.f32 %v6571, %v6610
          %v6612 = vpop.f32.mrf.mxu0
          %v6613 = vpop.f32.mrf.mxu0
          %6614 = vdwg.mxu0
          %v6617 = vcombine.low %v6609, %v6611
          %v6619 = vunpack.c.l.s4 1966171168
          %v6620 = vunpack.c.0.s8 %v6619
          %v6621 = vlaneseq
          %v6622 = vshrl.u32 %v6621, 7
          %v6623 = vsub.s32 %v6620, %v6622
          %v6624 = vrot.slane %v6617, %v6623
          %v6626 = vunpack.c.l.s4 1966171168
          %v6627 = vunpack.c.0.s8 %v6626
          %v6628 = vlaneseq
          %v6629 = vshrl.u32 %v6628, 7
          %v6630 = vsub.s32 %v6627, %v6629
          %v6631 = vrot.slane %v6624, %v6630
          %v6633 = vlaneseq
          %vm6634 = vcmp.ge.s32.totalorder %v6633, 0
          %vm6635 = vcmp.lt.s32.totalorder %v6633, 256
          %vm6636 = vmand %vm6634, %vm6635
          %6637 = vst.msk [vmem:[%s488] sm:$0x3] %vm6636, %v6631
        $region92: #{tpu_custom_call.1} parent=71 // pred_fallthru
          _
        %s6638 = sand.u32 %s331, 1
        %s6639 = scalar_lea.sflag [#allocation5], %s6638
        %s6640 = sand.u32 %s331, 1
        %s6641 = smul.addr %s6640, 2
        %s6642 = scalar_lea.vmem [#allocation8], %s6641
        // Predicated region
        $region93: #{tpu_custom_call.1} parent=71 // pred_check
          %p6643 = pneg %p341
        $region94: #{tpu_custom_call.1} parent=71 // pred_check_branch
          %6645 = sbr.rel (%p6643) target = $region96
        $region95: #{tpu_custom_call.1} parent=71 // pred_region
          %s6647 = ssub.s32 32, 32
          %6648 = vsyncadd %s6639, %s6647
          %s6649 = smul.addr %s35, 2
          %s6650 = smul.addr %s6649, 16
          %s6651 = scalar_lea.hbm %s13, %s6650
          %s6653 = sshll.u32 %s6642, 4
          %s6654 = int_to_ptr.vmem [resolvable:$true] %s6653
          %6656 = dma.vmem_to_hbm [thread:$0]  %s6654, 32, %s6651, %s6639
        $region96: #{tpu_custom_call.1} parent=71 // pred_fallthru
          _
      $region72: #{tpu_custom_call.1} parent=5 // pred_fallthru
        _
      %p6657 = scmp.le.s32.totalorder 2, %s26
      // Predicated region
      $region97: #{tpu_custom_call.1} parent=5 // pred_check
        %p6658 = pneg %p6657
      $region98: #{tpu_custom_call.1} parent=5 // pred_check_branch
        %6660 = sbr.rel (%p6658) target = $region100
      $region99: #{tpu_custom_call.1} parent=5 // pred_region
        %s6661 = ssub.s32 %s26, 2
        // Predicated region
        $region101: #{tpu_custom_call.1} parent=99 // pred_check
          %p6662 = pneg %p347
        $region102: #{tpu_custom_call.1} parent=99 // pred_check_branch
          %6664 = sbr.rel (%p6662) target = $region104
        $region103: #{tpu_custom_call.1} parent=99 // pred_region
          %s6665 = sand.u32 %s332, 1
          %s6666 = scalar_lea.sflag [#allocation5], %s6665
          %s6667 = sand.u32 %s332, 1
          %s6668 = smul.addr %s6667, 2
          %s6669 = scalar_lea.vmem [#allocation8], %s6668
          %6670 = dma.done %s6666, 32
        $region104: #{tpu_custom_call.1} parent=99 // pred_fallthru
          _
      $region100: #{tpu_custom_call.1} parent=5 // pred_fallthru
        _
    $region6: #{tpu_custom_call.1} parent=1 // loop_footer
      %s30 = sadd.s32 1, %s26
    $region7: #{tpu_custom_call.1} parent=1 // loop_footer_branch
      %25 = sbr.rel target = $region3
    $region8: #{tpu_custom_call.1} parent=1 // loop_exit
      _
    %6671 = vsyncpa [#allocation4], 1
    %s6672 = scalar_lea.sflag [#allocation4], 1
    %6673 = vsyncpa %s6672, 1
    %6674 = vsyncpa [#allocation7], 1
    %6675 = vsyncpa [#allocation5], 1
    %s6676 = scalar_lea.sflag [#allocation5], 1
    %6677 = vsyncpa %s6676, 1

</llo_original>
